<compile_context>
chip_gen: v7x
topology: tpu7x:2x2x1
jax: 0.10.0
libtpu: 0.0.40
codegen_flags: <defaults>
</compile_context>

<pallas_src>
import functools

import jax
import jax.numpy as jnp
import numpy as np
from jax import lax
from jax.experimental import pallas as pl
from jax.experimental.pallas import tpu as pltpu


# ------------------------------------------------------------------ kernel ---
def bottleneck_kernel(x_ref, w1_ref, w2_ref, w3_ref, b1_ref, b2_ref, b3_ref,
                      o_ref, zp_ref, *, H, W, pad_lo, pad_hi):
    """One image per grid step.

    x_ref  : (1, H*W, Cin)                 f32 (cast to bf16 in-kernel)
    w1_ref : (Cin, width)                  bf16  (bn1 scale folded in)
    w2_ref : (width, 9*width)              bf16  (bn2 scale folded in; tap = dy*3+dx)
    w3_ref : (width, Cout)                 bf16  (bn3 scale folded in)
    b*_ref : (1, channels)                 f32   folded BatchNorm biases
    o_ref  : (1, H*W, Cout)                f32
    zp_ref : (pad_lo + H*W + pad_hi, 9*width) f32 scratch (row-padded z)
    """
    HW = H * W
    width = w1_ref.shape[1]
    nine_w = w2_ref.shape[1]

    x_f32 = x_ref[0]                                   # (HW, Cin) f32
    x_bf = x_f32.astype(jnp.bfloat16)

    # ---- conv1 (1x1, scale folded) + bias + relu ------------------------
    y1 = jnp.dot(x_bf, w1_ref[...], preferred_element_type=jnp.float32)
    y1 = jnp.maximum(y1 + b1_ref[...], 0.0)

    # ---- conv2 (3x3, stride 1, pad 1) -----------------------------------
    # One lane-dense matmul produces all 9 tap contributions at once:
    #   z[:, t*width:(t+1)*width] = y1 @ w2[tap t]   (f32 accumulation)
    z = jnp.dot(y1.astype(jnp.bfloat16), w2_ref[...],
                preferred_element_type=jnp.float32)    # (HW, 9*width)

    # Stage z into a row-padded scratch; only the halo rows are zeroed
    # (they model the conv's zero padding in the H direction).  pad_lo is a
    # multiple of 8 so the dominant f32 store is sublane-aligned.
    zp_ref[pl.ds(0, pad_lo), :] = jnp.zeros((pad_lo, nine_w), zp_ref.dtype)
    zp_ref[pl.ds(pad_lo + HW, pad_hi), :] = jnp.zeros((pad_hi, nine_w),
                                                      zp_ref.dtype)
    zp_ref[pl.ds(pad_lo, HW), :] = z

    # Edge masks (hoisted, computed once): tap dx=0 reads column w-1,
    # tap dx=2 reads column w+1; both wrap across image rows unless masked.
    col = lax.broadcasted_iota(jnp.int32, (HW, width), 0) % W
    left_ok = col != 0
    right_ok = col != (W - 1)

    def slab(dy, dx):
        r0 = pad_lo + (dy - 1) * W + (dx - 1)          # static row offset
        c0 = (dy * 3 + dx) * width                     # static lane offset
        return zp_ref[pl.ds(r0, HW), pl.ds(c0, width)]

    center = slab(0, 1) + slab(1, 1) + slab(2, 1)
    left = slab(0, 0) + slab(1, 0) + slab(2, 0)
    right = slab(0, 2) + slab(1, 2) + slab(2, 2)
    y2 = center + jnp.where(left_ok, left, 0.0) + jnp.where(right_ok, right, 0.0)
    y2 = jnp.maximum(y2 + b2_ref[...], 0.0)

    # ---- conv3 (1x1, scale folded) + bias + residual (f32) + relu --------
    y3 = jnp.dot(y2.astype(jnp.bfloat16), w3_ref[...],
                 preferred_element_type=jnp.float32)
    out = jnp.maximum(y3 + b3_ref[...] + x_f32, 0.0)

    o_ref[0] = out.astype(o_ref.dtype)


# ----------------------------------------------------------------- wrapper ---
def _bcast_spec(shape):
    nd = len(shape)
    return pl.BlockSpec(shape, lambda n, nd=nd: (0,) * nd)


def bottleneck_forward(x_nchw, params):
    """x_nchw: (N, Cin, H, W) float32. Returns (N, Cout, H, W) float32."""
    w1, w2, w3, s1, b1, s2, b2, s3, b3 = params
    N, Cin, H, W = x_nchw.shape
    width = w1.shape[1]
    Cout = w3.shape[1]
    if Cin != Cout:
        raise ValueError("identity residual requires inplanes == 4*planes "
                         "(downsample branch not implemented)")

    hw = H * W
    nine_w = 9 * width

    # NCHW -> (N, H*W, C) channels-last; f32 straight into the kernel.
    x = jnp.transpose(x_nchw, (0, 2, 3, 1)).reshape(N, hw, Cin)

    # Fold BN scales into weight output channels (in f32), then cast to bf16.
    w1_bf = (w1 * s1).astype(jnp.bfloat16)                                # (Cin, width)
    w2_scaled = w2 * s2.reshape(1, 1, 1, -1)                              # (3,3,width,width)
    w2cat_bf = jnp.transpose(w2_scaled, (2, 0, 1, 3)).reshape(
        width, nine_w).astype(jnp.bfloat16)                               # (width, 9*width)
    w3_bf = (w3 * s3).astype(jnp.bfloat16)                                # (width, Cout)

    operands = (x, w1_bf, w2cat_bf, w3_bf, b1, b2, b3)
    in_specs = [
        pl.BlockSpec((1, hw, Cin), lambda n: (n, 0, 0)),
        _bcast_spec(w1_bf.shape),
        _bcast_spec(w2cat_bf.shape),
        _bcast_spec(w3_bf.shape),
        _bcast_spec(b1.shape),
        _bcast_spec(b2.shape),
        _bcast_spec(b3.shape),
    ]
    out_specs = pl.BlockSpec((1, hw, Cout), lambda n: (n, 0, 0))

    pad_lo = ((W + 1 + 7) // 8) * 8          # 8-aligned (f32 sublane tile)
    pad_hi = W + 1
    buf_rows = pad_lo + hw + pad_hi

    # Honest per-step VMEM footprint (double-buffered blocks + scratch),
    # plus headroom; capped well under v7x's 64 MiB per-core budget.
    # NOTE(perf-review): constant weight/bias blocks could be single-buffered
    # (pl.Buffered(1)); negligible at width=32 so left double-buffered here.
    w_bytes = 2 * (w1_bf.size + w2cat_bf.size + w3_bf.size)   # bf16
    b_bytes = 4 * (b1.size + b2.size + b3.size)               # f32
    step_bytes = (2 * hw * Cin * 4            # x blocks (f32, double-buffered)
                  + 2 * hw * Cout * 4         # out blocks (f32, double-buffered)
                  + 2 * (w_bytes + b_bytes)   # broadcast blocks (double-buffered)
                  + buf_rows * nine_w * 4)    # z halo scratch (f32)
    vmem_limit = int(min(max(step_bytes + (8 << 20), 16 << 20), 48 << 20))

    flops = 2 * N * hw * (Cin * width + 9 * width * width + width * Cout)
    bytes_accessed = (x.size * 4 + N * hw * Cout * 4 + w_bytes + b_bytes)

    kernel = functools.partial(bottleneck_kernel, H=H, W=W,
                               pad_lo=pad_lo, pad_hi=pad_hi)

    out = pl.pallas_call(
        kernel,
        out_shape=jax.ShapeDtypeStruct((N, hw, Cout), jnp.float32),
        grid=(N,),
        in_specs=in_specs,
        out_specs=out_specs,
        scratch_shapes=[
            pltpu.VMEM((buf_rows, nine_w), jnp.float32),
        ],
        compiler_params=pltpu.CompilerParams(
            dimension_semantics=("parallel",),
            vmem_limit_bytes=vmem_limit),
        cost_estimate=pl.CostEstimate(flops=flops, transcendentals=0,
                                      bytes_accessed=bytes_accessed),
    )(*operands)

    return jnp.transpose(out.reshape(N, H, W, Cout), (0, 3, 1, 2))


# ---------------------------------------------------------- param creation ---
def make_params(key, inplanes, planes, base_width=64, groups=1, eps=1e-5):
    width = int(planes * (base_width / 64.0)) * groups
    out_c = planes * 4  # expansion = 4
    ks = jax.random.split(key, 15)

    def bn_fold(kg, kb, km, kv, c):
        gamma = jax.random.uniform(kg, (c,), minval=0.5, maxval=1.5)
        beta = 0.1 * jax.random.normal(kb, (c,))
        mean = 0.1 * jax.random.normal(km, (c,))
        var = jax.random.uniform(kv, (c,), minval=0.5, maxval=1.5)
        scale = gamma / jnp.sqrt(var + eps)
        bias = beta - mean * scale
        return (scale.reshape(1, c).astype(jnp.float32),
                bias.reshape(1, c).astype(jnp.float32))

    w1 = 0.1 * jax.random.normal(ks[0], (inplanes, width), jnp.float32)
    w2 = 0.1 * jax.random.normal(ks[1], (3, 3, width, width), jnp.float32)
    w3 = 0.1 * jax.random.normal(ks[2], (width, out_c), jnp.float32)
    s1, b1 = bn_fold(ks[3], ks[4], ks[5], ks[6], width)
    s2, b2 = bn_fold(ks[7], ks[8], ks[9], ks[10], width)
    s3, b3 = bn_fold(ks[11], ks[12], ks[13], ks[14], out_c)
    return (w1, w2, w3, s1, b1, s2, b2, s3, b3)


# -------------------------------------------------------- pure-JAX reference -
def reference_forward(x_nchw, params):
    """Same math as the kernel: bf16 conv operands with BN scales folded into
    the weights (mathematically identical to conv -> scale), f32 accumulation,
    f32 epilogues and f32 identity residual."""
    w1, w2, w3, s1, b1, s2, b2, s3, b3 = params
    x = jnp.transpose(x_nchw, (0, 2, 3, 1))  # NHWC f32
    dn = lax.conv_dimension_numbers(x.shape, (1, 1, 1, 1),
                                    ("NHWC", "HWIO", "NHWC"))

    def conv(inp, w):
        return lax.conv_general_dilated(
            inp.astype(jnp.bfloat16), w.astype(jnp.bfloat16), (1, 1), "SAME",
            dimension_numbers=dn, preferred_element_type=jnp.float32)

    y = conv(x, (w1 * s1)[None, None])
    y = jnp.maximum(y + b1.reshape(1, 1, 1, -1), 0.0)
    y = conv(y, w2 * s2.reshape(1, 1, 1, -1))
    y = jnp.maximum(y + b2.reshape(1, 1, 1, -1), 0.0)
    y = conv(y, (w3 * s3)[None, None])
    y = y + b3.reshape(1, 1, 1, -1)
    y = jnp.maximum(y + x, 0.0)              # identity residual in f32
    return jnp.transpose(y, (0, 3, 1, 2))


# -------------------------------------------------------------------- main ---
if __name__ == "__main__":
    # Bottleneck(inplanes=128, planes=32) -> width=32, out channels=128,
    # stride=1, downsample=None (identity shapes match).
    N, Cin, H, W = 2, 128, 16, 16
    planes = 32

    key = jax.random.PRNGKey(0)
    kx, kp = jax.random.split(key)
    x = jax.random.normal(kx, (N, Cin, H, W), jnp.float32)
    params = make_params(kp, inplanes=Cin, planes=planes)

    out = jax.block_until_ready(bottleneck_forward(x, params))
    ref = jax.block_until_ready(reference_forward(x, params))
    np.testing.assert_allclose(np.asarray(out), np.asarray(ref),
                               rtol=1e-2, atol=1e-2)

    print("KERNEL_OK")
</pallas_src>

<mosaic_0001>
module attributes {stable_mosaic.version = 11 : i64} {
  func.func @bottleneck_kernel(%arg0: i32, %arg1: memref<1x256x128xf32, #tpu.memory_space<vmem>>, %arg2: memref<128x32xbf16, #tpu.memory_space<vmem>>, %arg3: memref<32x288xbf16, #tpu.memory_space<vmem>>, %arg4: memref<32x128xbf16, #tpu.memory_space<vmem>>, %arg5: memref<1x32xf32, #tpu.memory_space<vmem>>, %arg6: memref<1x32xf32, #tpu.memory_space<vmem>>, %arg7: memref<1x128xf32, #tpu.memory_space<vmem>>, %arg8: memref<1x256x128xf32, #tpu.memory_space<vmem>>, %arg9: memref<297x288xf32, #tpu.memory_space<vmem>>) attributes {dimension_semantics = [#tpu.dimension_semantics<parallel>], iteration_bounds = array<i64: 2>, scalar_prefetch = 0 : i64, scratch_operands = 1 : i64, tpu.core_type = #tpu.core_type<tc>, window_params = [{transform_indices = @transform_0, window_bounds = array<i64: 1, 256, 128>}, {pipeline_mode = #tpu.pipeline_mode<synchronous>, transform_indices = @transform_1, window_bounds = array<i64: 128, 32>}, {pipeline_mode = #tpu.pipeline_mode<synchronous>, transform_indices = @transform_2, window_bounds = array<i64: 32, 288>}, {pipeline_mode = #tpu.pipeline_mode<synchronous>, transform_indices = @transform_3, window_bounds = array<i64: 32, 128>}, {pipeline_mode = #tpu.pipeline_mode<synchronous>, transform_indices = @transform_4, window_bounds = array<i64: 1, 32>}, {pipeline_mode = #tpu.pipeline_mode<synchronous>, transform_indices = @transform_5, window_bounds = array<i64: 1, 32>}, {pipeline_mode = #tpu.pipeline_mode<synchronous>, transform_indices = @transform_6, window_bounds = array<i64: 1, 128>}, {transform_indices = @transform_7, window_bounds = array<i64: 1, 256, 128>}]} {
    %c0 = arith.constant 0 : index
    %c0_0 = arith.constant 0 : index
    %c0_1 = arith.constant 0 : index
    %0 = vector.load %arg1[%c0, %c0_0, %c0_1] : memref<1x256x128xf32, #tpu.memory_space<vmem>>, vector<1x256x128xf32>
    %1 = vector.shape_cast %0 : vector<1x256x128xf32> to vector<256x128xf32>
    %2 = arith.truncf %1 : vector<256x128xf32> to vector<256x128xbf16>
    %c0_2 = arith.constant 0 : index
    %c0_3 = arith.constant 0 : index
    %3 = vector.load %arg2[%c0_2, %c0_3] : memref<128x32xbf16, #tpu.memory_space<vmem>>, vector<128x32xbf16>
    %cst = arith.constant dense<0.000000e+00> : vector<256x32xf32>
    %4 = tpu.matmul %2, %3, %cst {dimension_numbers = #tpu.dot_dimension_numbers<[1], [0], [0], [1], [0, 0, 1, 1], [], []>} : vector<256x128xbf16>, vector<128x32xbf16>, vector<256x32xf32> -> vector<256x32xf32>
    %c0_4 = arith.constant 0 : index
    %c0_5 = arith.constant 0 : index
    %5 = vector.load %arg5[%c0_4, %c0_5] : memref<1x32xf32, #tpu.memory_space<vmem>>, vector<1x32xf32>
    %6 = vector.broadcast %5 : vector<1x32xf32> to vector<256x32xf32>
    %7 = arith.addf %4, %6 : vector<256x32xf32>
    %cst_6 = arith.constant 0.000000e+00 : f32
    %8 = vector.broadcast %cst_6 : f32 to vector<256x32xf32>
    %9 = arith.maximumf %7, %8 : vector<256x32xf32>
    %10 = arith.truncf %9 : vector<256x32xf32> to vector<256x32xbf16>
    %c0_7 = arith.constant 0 : index
    %c0_8 = arith.constant 0 : index
    %11 = vector.load %arg3[%c0_7, %c0_8] : memref<32x288xbf16, #tpu.memory_space<vmem>>, vector<32x288xbf16>
    %cst_9 = arith.constant dense<0.000000e+00> : vector<256x288xf32>
    %12 = tpu.matmul %10, %11, %cst_9 {dimension_numbers = #tpu.dot_dimension_numbers<[1], [0], [0], [1], [0, 0, 1, 1], [], []>} : vector<256x32xbf16>, vector<32x288xbf16>, vector<256x288xf32> -> vector<256x288xf32>
    %cst_10 = arith.constant 0.000000e+00 : f32
    %13 = vector.broadcast %cst_10 : f32 to vector<24x288xf32>
    %c0_11 = arith.constant 0 : index
    %c0_12 = arith.constant 0 : index
    %14 = vector.load %arg9[%c0_11, %c0_12] : memref<297x288xf32, #tpu.memory_space<vmem>>, vector<24x288xf32>
    tpu.vector_store %arg9[%c0_11, %c0_12], %13 {strides = array<i32>} : memref<297x288xf32, #tpu.memory_space<vmem>>, vector<24x288xf32>,
    %cst_13 = arith.constant 0.000000e+00 : f32
    %15 = vector.broadcast %cst_13 : f32 to vector<17x288xf32>
    %c280 = arith.constant 280 : index
    %c0_14 = arith.constant 0 : index
    %16 = vector.load %arg9[%c280, %c0_14] : memref<297x288xf32, #tpu.memory_space<vmem>>, vector<17x288xf32>
    tpu.vector_store %arg9[%c280, %c0_14], %15 {strides = array<i32>} : memref<297x288xf32, #tpu.memory_space<vmem>>, vector<17x288xf32>,
    %c24 = arith.constant 24 : index
    %c0_15 = arith.constant 0 : index
    %17 = vector.load %arg9[%c24, %c0_15] : memref<297x288xf32, #tpu.memory_space<vmem>>, vector<256x288xf32>
    tpu.vector_store %arg9[%c24, %c0_15], %12 {strides = array<i32>} : memref<297x288xf32, #tpu.memory_space<vmem>>, vector<256x288xf32>,
    %18 = tpu.iota {dimensions = array<i32: 0>} : vector<256x32xi32>
    %c16_i32 = arith.constant 16 : i32
    %c0_i32 = arith.constant 0 : i32
    %19 = arith.cmpi eq, %c16_i32, %c0_i32 : i32
    %c1_i32 = arith.constant 1 : i32
    %20 = arith.select %19, %c1_i32, %c16_i32 : i32
    %21 = vector.broadcast %20 : i32 to vector<256x32xi32>
    %22 = arith.remsi %18, %21 : vector<256x32xi32>
    %c0_i32_16 = arith.constant 0 : i32
    %23 = vector.broadcast %c0_i32_16 : i32 to vector<256x32xi32>
    %24 = arith.cmpi ne, %22, %23 : vector<256x32xi32>
    %c0_i32_17 = arith.constant 0 : i32
    %25 = vector.broadcast %c0_i32_17 : i32 to vector<256x32xi32>
    %26 = arith.cmpi slt, %22, %25 : vector<256x32xi32>
    %c0_i32_18 = arith.constant 0 : i32
    %27 = arith.cmpi slt, %20, %c0_i32_18 : i32
    %28 = vector.broadcast %27 : i1 to vector<256x32xi1>
    %29 = vector.broadcast %28 : vector<256x32xi1> to vector<256x32xi1>
    %30 = arith.xori %26, %29 : vector<256x32xi1>
    %31 = arith.andi %30, %24 : vector<256x32xi1>
    %32 = vector.broadcast %20 : i32 to vector<256x32xi32>
    %33 = arith.addi %22, %32 : vector<256x32xi32>
    %34 = arith.select %31, %33, %22 : vector<256x32xi1>, vector<256x32xi32>
    %c0_i32_19 = arith.constant 0 : i32
    %35 = vector.broadcast %c0_i32_19 : i32 to vector<256x32xi32>
    %36 = arith.cmpi ne, %34, %35 : vector<256x32xi32>
    %c15_i32 = arith.constant 15 : i32
    %37 = vector.broadcast %c15_i32 : i32 to vector<256x32xi32>
    %38 = arith.cmpi ne, %34, %37 : vector<256x32xi32>
    %c8 = arith.constant 8 : index
    %c32 = arith.constant 32 : index
    %39 = vector.load %arg9[%c8, %c32] : memref<297x288xf32, #tpu.memory_space<vmem>>, vector<256x32xf32>
    %c24_20 = arith.constant 24 : index
    %c128 = arith.constant 128 : index
    %40 = vector.load %arg9[%c24_20, %c128] : memref<297x288xf32, #tpu.memory_space<vmem>>, vector<256x32xf32>
    %41 = arith.addf %39, %40 : vector<256x32xf32>
    %c40 = arith.constant 40 : index
    %c224 = arith.constant 224 : index
    %42 = vector.load %arg9[%c40, %c224] : memref<297x288xf32, #tpu.memory_space<vmem>>, vector<256x32xf32>
    %43 = arith.addf %41, %42 : vector<256x32xf32>
    %c7 = arith.constant 7 : index
    %c0_21 = arith.constant 0 : index
    %44 = vector.load %arg9[%c7, %c0_21] : memref<297x288xf32, #tpu.memory_space<vmem>>, vector<256x32xf32>
    %c23 = arith.constant 23 : index
    %c96 = arith.constant 96 : index
    %45 = vector.load %arg9[%c23, %c96] : memref<297x288xf32, #tpu.memory_space<vmem>>, vector<256x32xf32>
    %46 = arith.addf %44, %45 : vector<256x32xf32>
    %c39 = arith.constant 39 : index
    %c192 = arith.constant 192 : index
    %47 = vector.load %arg9[%c39, %c192] : memref<297x288xf32, #tpu.memory_space<vmem>>, vector<256x32xf32>
    %48 = arith.addf %46, %47 : vector<256x32xf32>
    %c9 = arith.constant 9 : index
    %c64 = arith.constant 64 : index
    %49 = vector.load %arg9[%c9, %c64] : memref<297x288xf32, #tpu.memory_space<vmem>>, vector<256x32xf32>
    %c25 = arith.constant 25 : index
    %c160 = arith.constant 160 : index
    %50 = vector.load %arg9[%c25, %c160] : memref<297x288xf32, #tpu.memory_space<vmem>>, vector<256x32xf32>
    %51 = arith.addf %49, %50 : vector<256x32xf32>
    %c41 = arith.constant 41 : index
    %c256 = arith.constant 256 : index
    %52 = vector.load %arg9[%c41, %c256] : memref<297x288xf32, #tpu.memory_space<vmem>>, vector<256x32xf32>
    %53 = arith.addf %51, %52 : vector<256x32xf32>
    %cst_22 = arith.constant 0.000000e+00 : f32
    %54 = vector.broadcast %cst_22 : f32 to vector<256x32xf32>
    %55 = arith.select %36, %48, %54 : vector<256x32xi1>, vector<256x32xf32>
    %56 = arith.addf %43, %55 : vector<256x32xf32>
    %cst_23 = arith.constant 0.000000e+00 : f32
    %57 = vector.broadcast %cst_23 : f32 to vector<256x32xf32>
    %58 = arith.select %38, %53, %57 : vector<256x32xi1>, vector<256x32xf32>
    %59 = arith.addf %56, %58 : vector<256x32xf32>
    %c0_24 = arith.constant 0 : index
    %c0_25 = arith.constant 0 : index
    %60 = vector.load %arg6[%c0_24, %c0_25] : memref<1x32xf32, #tpu.memory_space<vmem>>, vector<1x32xf32>
    %61 = vector.broadcast %60 : vector<1x32xf32> to vector<256x32xf32>
    %62 = arith.addf %59, %61 : vector<256x32xf32>
    %cst_26 = arith.constant 0.000000e+00 : f32
    %63 = vector.broadcast %cst_26 : f32 to vector<256x32xf32>
    %64 = arith.maximumf %62, %63 : vector<256x32xf32>
    %65 = arith.truncf %64 : vector<256x32xf32> to vector<256x32xbf16>
    %c0_27 = arith.constant 0 : index
    %c0_28 = arith.constant 0 : index
    %66 = vector.load %arg4[%c0_27, %c0_28] : memref<32x128xbf16, #tpu.memory_space<vmem>>, vector<32x128xbf16>
    %cst_29 = arith.constant dense<0.000000e+00> : vector<256x128xf32>
    %67 = tpu.matmul %65, %66, %cst_29 {dimension_numbers = #tpu.dot_dimension_numbers<[1], [0], [0], [1], [0, 0, 1, 1], [], []>} : vector<256x32xbf16>, vector<32x128xbf16>, vector<256x128xf32> -> vector<256x128xf32>
    %c0_30 = arith.constant 0 : index
    %c0_31 = arith.constant 0 : index
    %68 = vector.load %arg7[%c0_30, %c0_31] : memref<1x128xf32, #tpu.memory_space<vmem>>, vector<1x128xf32>
    %69 = vector.broadcast %68 : vector<1x128xf32> to vector<256x128xf32>
    %70 = arith.addf %67, %69 : vector<256x128xf32>
    %71 = arith.addf %70, %1 : vector<256x128xf32>
    %cst_32 = arith.constant 0.000000e+00 : f32
    %72 = vector.broadcast %cst_32 : f32 to vector<256x128xf32>
    %73 = arith.maximumf %71, %72 : vector<256x128xf32>
    %c0_33 = arith.constant 0 : index
    %c0_34 = arith.constant 0 : index
    %c0_35 = arith.constant 0 : index
    %74 = vector.load %arg8[%c0_33, %c0_34, %c0_35] : memref<1x256x128xf32, #tpu.memory_space<vmem>>, vector<1x256x128xf32>
    %75 = vector.shape_cast %74 : vector<1x256x128xf32> to vector<256x128xf32>
    %76 = vector.shape_cast %73 : vector<256x128xf32> to vector<1x256x128xf32>
    tpu.vector_store %arg8[%c0_33, %c0_34, %c0_35], %76 {strides = array<i32>} : memref<1x256x128xf32, #tpu.memory_space<vmem>>, vector<1x256x128xf32>,
    return
  }
  func.func @transform_0(%arg0: i32) -> (i32, i32, i32) {
    %c0_i32 = arith.constant 0 : i32
    %c0_i32_0 = arith.constant 0 : i32
    %c0_i32_1 = arith.constant 0 : i32
    return %arg0, %c0_i32, %c0_i32_0 : i32, i32, i32
  }
  func.func @transform_1(%arg0: i32) -> (i32, i32) {
    %c0_i32 = arith.constant 0 : i32
    %c0_i32_0 = arith.constant 0 : i32
    %c0_i32_1 = arith.constant 0 : i32
    return %c0_i32, %c0_i32_0 : i32, i32
  }
  func.func @transform_2(%arg0: i32) -> (i32, i32) {
    %c0_i32 = arith.constant 0 : i32
    %c0_i32_0 = arith.constant 0 : i32
    %c0_i32_1 = arith.constant 0 : i32
    return %c0_i32, %c0_i32_0 : i32, i32
  }
  func.func @transform_3(%arg0: i32) -> (i32, i32) {
    %c0_i32 = arith.constant 0 : i32
    %c0_i32_0 = arith.constant 0 : i32
    %c0_i32_1 = arith.constant 0 : i32
    return %c0_i32, %c0_i32_0 : i32, i32
  }
  func.func @transform_4(%arg0: i32) -> (i32, i32) {
    %c0_i32 = arith.constant 0 : i32
    %c0_i32_0 = arith.constant 0 : i32
    %c0_i32_1 = arith.constant 0 : i32
    return %c0_i32, %c0_i32_0 : i32, i32
  }
  func.func @transform_5(%arg0: i32) -> (i32, i32) {
    %c0_i32 = arith.constant 0 : i32
    %c0_i32_0 = arith.constant 0 : i32
    %c0_i32_1 = arith.constant 0 : i32
    return %c0_i32, %c0_i32_0 : i32, i32
  }
  func.func @transform_6(%arg0: i32) -> (i32, i32) {
    %c0_i32 = arith.constant 0 : i32
    %c0_i32_0 = arith.constant 0 : i32
    %c0_i32_1 = arith.constant 0 : i32
    return %c0_i32, %c0_i32_0 : i32, i32
  }
  func.func @transform_7(%arg0: i32) -> (i32, i32, i32) {
    %c0_i32 = arith.constant 0 : i32
    %c0_i32_0 = arith.constant 0 : i32
    %c0_i32_1 = arith.constant 0 : i32
    return %arg0, %c0_i32, %c0_i32_0 : i32, i32, i32
  }
}

</mosaic_0001>

<llo_original>
// kernel: tpu_custom_call.1
$region0: #{tpu_custom_call.1}
  #allocation0 [shape = 'u32[]', space=smem, size = 0x4, offset = 0x4, fixed_abs, tag = 'smem constant byte address 0x4 - core index']
  #allocation1 [shape = 'u32[144,128]{1,0:T(1,128)}', space=vmem, size = 0x12000, scoped, tag = 'internal scratch']
  #allocation2 [shape = 'f32[297,288]{1,0:T(8,128)}', space=vmem, size = 0x72000, scoped, tag = 'scratch operand']
  %s0 = inlined_call_operand.hbm [shape: f32[2,256,128], index: 0, kind: input, shape index: {}]
  %s1 = inlined_call_operand.vmem [shape: bf16[128,32], index: 1, kind: input, shape index: {}]
  %s2 = inlined_call_operand.vmem [shape: bf16[32,288], index: 2, kind: input, shape index: {}]
  %s3 = inlined_call_operand.vmem [shape: bf16[32,128], index: 3, kind: input, shape index: {}]
  %s4 = inlined_call_operand.vmem [shape: f32[1,32], index: 4, kind: input, shape index: {}]
  %s5 = inlined_call_operand.vmem [shape: f32[1,32], index: 5, kind: input, shape index: {}]
  %s6 = inlined_call_operand.vmem [shape: f32[1,128], index: 6, kind: input, shape index: {}]
  %s7 = inlined_call_operand.hbm [shape: f32[2,256,128], index: 7, kind: output, shape index: {}]
  %s8 = sld [smem:[#allocation0]]
  $region65: #{tpu_custom_call.1} parent=0
    _
  %s10 = ssub.s32 1, %s8
  %s11 = scalar_select 0, %s10, %s8
  $region1: #{tpu_custom_call.1} parent=0
    #allocation3 [shape = 'u8[262144]{0}', space=vmem, size = 0x40000, scoped, tag = 'input window, operand 0']
    #allocation4 [shape = 's32[2]{0}', space=sflag, size = 0x8, scoped, tag = 'scoped memory for tpu_custom_call.1']
    #allocation5 [shape = 's32[2]{0}', space=sflag, size = 0x8, scoped, tag = 'scoped memory for tpu_custom_call.1']
    #allocation6 [shape = 'u8[262144]{0}', space=vmem, size = 0x40000, scoped, tag = 'output window, operand 0']
    %12 = vsyncpa [#allocation4], 0
    %s13 = scalar_lea.sflag [#allocation4], 1
    %14 = vsyncpa %s13, 0
    %15 = vsyncpa [#allocation5], 0
    %s16 = scalar_lea.sflag [#allocation5], 1
    %17 = vsyncpa %s16, 0
    loop: start=0, step=1, limit=4
    $region2: #{tpu_custom_call.1} parent=1 // loop_pre_header
      _
    $region3: #{tpu_custom_call.1} parent=1 // loop_header
      %s19 = sphi 0, %s23
      %p20 = scmp.ge.s32.totalorder %s19, 4
      %s29 = sphi 0, %s31
      %s32 = sphi 0, %s29
      %s33 = sphi 0, %s32
      %s49 = sphi 0, %s33
      %s53 = sphi 0, %s53
      %s55 = sphi 0, %s53
      %s56 = sphi 0, %s55
      %s70 = sphi 0, %s56
      %s74 = sphi 0, %s74
      %s76 = sphi 0, %s74
      %s77 = sphi 0, %s76
      %s91 = sphi 0, %s77
      %s95 = sphi 0, %s95
      %s97 = sphi 0, %s95
      %s98 = sphi 0, %s97
      %s112 = sphi 0, %s98
      %s116 = sphi 0, %s116
      %s118 = sphi 0, %s116
      %s119 = sphi 0, %s118
      %s133 = sphi 0, %s119
      %s137 = sphi 0, %s137
      %s139 = sphi 0, %s137
      %s140 = sphi 0, %s139
      %s154 = sphi 0, %s140
      %s158 = sphi 0, %s158
      %s160 = sphi 0, %s158
      %s161 = sphi 0, %s160
      %s175 = sphi 0, %s161
      %s181 = sphi 0, %s183
      %s184 = sphi 0, %s181
      %s185 = sphi 0, %s184
      %s201 = sphi 0, %s185
    $region4: #{tpu_custom_call.1} parent=1 // loop_header_branch
      %22 = sbr.rel (%p20) target = $region8
    $region5: #{tpu_custom_call.1} parent=1 // loop_body
      %s24 = ssub.s32 %s19, 1
      %s25 = ssub.s32 %s19, 2
      %s26 = sadd.s32 %s19, 1
      %s27 = ssub.s32 %s19, %s26
      %p28 = scmp.eq.s32.totalorder %s27, 0
      %s30 = sadd.s32 %s29, 1
      %s31 = scalar_select %p28, %s29, %s30
      %p34 = pneg %p28
      %p35 = scmp.eq.s32.totalorder %s19, 1
      %p36 = por %p34, %p35
      %p37 = scmp.ne.s32.totalorder %s29, %s32
      %p38 = scmp.eq.s32.totalorder %s19, 0
      %p39 = por %p37, %p38
      %p40 = scmp.ne.s32.totalorder %s29, %s32
      %p41 = scmp.eq.s32.totalorder %s24, 1
      %p42 = por %p40, %p41
      %p43 = scmp.ne.s32.totalorder %s32, %s33
      %p44 = scmp.eq.s32.totalorder %s24, 0
      %p45 = por %p43, %p44
      %p46 = scmp.ne.s32.totalorder %s32, %s33
      %p47 = scmp.eq.s32.totalorder %s25, 1
      %p48 = por %p46, %p47
      %p50 = scmp.ne.s32.totalorder %s33, %s49
      %p51 = scmp.eq.s32.totalorder %s25, 0
      %p52 = por %p50, %p51
      %s54 = sadd.s32 %s53, 1
      %p57 = scmp.eq.s32.totalorder %s19, 1
      %p58 = scmp.ne.s32.totalorder %s53, %s55
      %p59 = scmp.eq.s32.totalorder %s19, 0
      %p60 = por %p58, %p59
      %p61 = scmp.ne.s32.totalorder %s53, %s55
      %p62 = scmp.eq.s32.totalorder %s24, 1
      %p63 = por %p61, %p62
      %p64 = scmp.ne.s32.totalorder %s55, %s56
      %p65 = scmp.eq.s32.totalorder %s24, 0
      %p66 = por %p64, %p65
      %p67 = scmp.ne.s32.totalorder %s55, %s56
      %p68 = scmp.eq.s32.totalorder %s25, 1
      %p69 = por %p67, %p68
      %p71 = scmp.ne.s32.totalorder %s56, %s70
      %p72 = scmp.eq.s32.totalorder %s25, 0
      %p73 = por %p71, %p72
      %s75 = sadd.s32 %s74, 1
      %p78 = scmp.eq.s32.totalorder %s19, 1
      %p79 = scmp.ne.s32.totalorder %s74, %s76
      %p80 = scmp.eq.s32.totalorder %s19, 0
      %p81 = por %p79, %p80
      %p82 = scmp.ne.s32.totalorder %s74, %s76
      %p83 = scmp.eq.s32.totalorder %s24, 1
      %p84 = por %p82, %p83
      %p85 = scmp.ne.s32.totalorder %s76, %s77
      %p86 = scmp.eq.s32.totalorder %s24, 0
      %p87 = por %p85, %p86
      %p88 = scmp.ne.s32.totalorder %s76, %s77
      %p89 = scmp.eq.s32.totalorder %s25, 1
      %p90 = por %p88, %p89
      %p92 = scmp.ne.s32.totalorder %s77, %s91
      %p93 = scmp.eq.s32.totalorder %s25, 0
      %p94 = por %p92, %p93
      %s96 = sadd.s32 %s95, 1
      %p99 = scmp.eq.s32.totalorder %s19, 1
      %p100 = scmp.ne.s32.totalorder %s95, %s97
      %p101 = scmp.eq.s32.totalorder %s19, 0
      %p102 = por %p100, %p101
      %p103 = scmp.ne.s32.totalorder %s95, %s97
      %p104 = scmp.eq.s32.totalorder %s24, 1
      %p105 = por %p103, %p104
      %p106 = scmp.ne.s32.totalorder %s97, %s98
      %p107 = scmp.eq.s32.totalorder %s24, 0
      %p108 = por %p106, %p107
      %p109 = scmp.ne.s32.totalorder %s97, %s98
      %p110 = scmp.eq.s32.totalorder %s25, 1
      %p111 = por %p109, %p110
      %p113 = scmp.ne.s32.totalorder %s98, %s112
      %p114 = scmp.eq.s32.totalorder %s25, 0
      %p115 = por %p113, %p114
      %s117 = sadd.s32 %s116, 1
      %p120 = scmp.eq.s32.totalorder %s19, 1
      %p121 = scmp.ne.s32.totalorder %s116, %s118
      %p122 = scmp.eq.s32.totalorder %s19, 0
      %p123 = por %p121, %p122
      %p124 = scmp.ne.s32.totalorder %s116, %s118
      %p125 = scmp.eq.s32.totalorder %s24, 1
      %p126 = por %p124, %p125
      %p127 = scmp.ne.s32.totalorder %s118, %s119
      %p128 = scmp.eq.s32.totalorder %s24, 0
      %p129 = por %p127, %p128
      %p130 = scmp.ne.s32.totalorder %s118, %s119
      %p131 = scmp.eq.s32.totalorder %s25, 1
      %p132 = por %p130, %p131
      %p134 = scmp.ne.s32.totalorder %s119, %s133
      %p135 = scmp.eq.s32.totalorder %s25, 0
      %p136 = por %p134, %p135
      %s138 = sadd.s32 %s137, 1
      %p141 = scmp.eq.s32.totalorder %s19, 1
      %p142 = scmp.ne.s32.totalorder %s137, %s139
      %p143 = scmp.eq.s32.totalorder %s19, 0
      %p144 = por %p142, %p143
      %p145 = scmp.ne.s32.totalorder %s137, %s139
      %p146 = scmp.eq.s32.totalorder %s24, 1
      %p147 = por %p145, %p146
      %p148 = scmp.ne.s32.totalorder %s139, %s140
      %p149 = scmp.eq.s32.totalorder %s24, 0
      %p150 = por %p148, %p149
      %p151 = scmp.ne.s32.totalorder %s139, %s140
      %p152 = scmp.eq.s32.totalorder %s25, 1
      %p153 = por %p151, %p152
      %p155 = scmp.ne.s32.totalorder %s140, %s154
      %p156 = scmp.eq.s32.totalorder %s25, 0
      %p157 = por %p155, %p156
      %s159 = sadd.s32 %s158, 1
      %p162 = scmp.eq.s32.totalorder %s19, 1
      %p163 = scmp.ne.s32.totalorder %s158, %s160
      %p164 = scmp.eq.s32.totalorder %s19, 0
      %p165 = por %p163, %p164
      %p166 = scmp.ne.s32.totalorder %s158, %s160
      %p167 = scmp.eq.s32.totalorder %s24, 1
      %p168 = por %p166, %p167
      %p169 = scmp.ne.s32.totalorder %s160, %s161
      %p170 = scmp.eq.s32.totalorder %s24, 0
      %p171 = por %p169, %p170
      %p172 = scmp.ne.s32.totalorder %s160, %s161
      %p173 = scmp.eq.s32.totalorder %s25, 1
      %p174 = por %p172, %p173
      %p176 = scmp.ne.s32.totalorder %s161, %s175
      %p177 = scmp.eq.s32.totalorder %s25, 0
      %p178 = por %p176, %p177
      %s179 = ssub.s32 %s19, %s26
      %p180 = scmp.eq.s32.totalorder %s179, 0
      %s182 = sadd.s32 %s181, 1
      %s183 = scalar_select %p180, %s181, %s182
      %p186 = pneg %p180
      %p187 = scmp.eq.s32.totalorder %s19, 1
      %p188 = por %p186, %p187
      %p189 = scmp.ne.s32.totalorder %s181, %s184
      %p190 = scmp.eq.s32.totalorder %s19, 0
      %p191 = por %p189, %p190
      %p192 = scmp.ne.s32.totalorder %s181, %s184
      %p193 = scmp.eq.s32.totalorder %s24, 1
      %p194 = por %p192, %p193
      %p195 = scmp.ne.s32.totalorder %s184, %s185
      %p196 = scmp.eq.s32.totalorder %s24, 0
      %p197 = por %p195, %p196
      %p198 = scmp.ne.s32.totalorder %s184, %s185
      %p199 = scmp.eq.s32.totalorder %s25, 1
      %p200 = por %p198, %p199
      %p202 = scmp.ne.s32.totalorder %s185, %s201
      %p203 = scmp.eq.s32.totalorder %s25, 0
      %p204 = por %p202, %p203
      %p205 = scmp.le.s32.totalorder 1, %s19
      %p206 = scmp.lt.s32.totalorder %s19, 3
      %p207 = pnand %p205, %p206
      %p208 = pneg %p207
      // Predicated region
      $region9: #{tpu_custom_call.1} parent=5 // pred_check
        _
      $region10: #{tpu_custom_call.1} parent=5 // pred_check_branch
        %210 = sbr.rel (%p207) target = $region12
      $region11: #{tpu_custom_call.1} parent=5 // pred_region
        %s211 = ssub.s32 %s19, 1
        // Predicated region
        $region13: #{tpu_custom_call.1} parent=11 // pred_check
          %p212 = pneg %p66
        $region14: #{tpu_custom_call.1} parent=11 // pred_check_branch
          %214 = sbr.rel (%p212) target = $region16
        $region15: #{tpu_custom_call.1} parent=11 // pred_region
          _
        $region16: #{tpu_custom_call.1} parent=11 // pred_fallthru
          _
        // Predicated region
        $region17: #{tpu_custom_call.1} parent=11 // pred_check
          %p215 = pneg %p87
        $region18: #{tpu_custom_call.1} parent=11 // pred_check_branch
          %217 = sbr.rel (%p215) target = $region20
        $region19: #{tpu_custom_call.1} parent=11 // pred_region
          _
        $region20: #{tpu_custom_call.1} parent=11 // pred_fallthru
          _
        // Predicated region
        $region21: #{tpu_custom_call.1} parent=11 // pred_check
          %p218 = pneg %p108
        $region22: #{tpu_custom_call.1} parent=11 // pred_check_branch
          %220 = sbr.rel (%p218) target = $region24
        $region23: #{tpu_custom_call.1} parent=11 // pred_region
          _
        $region24: #{tpu_custom_call.1} parent=11 // pred_fallthru
          _
        // Predicated region
        $region25: #{tpu_custom_call.1} parent=11 // pred_check
          %p221 = pneg %p129
        $region26: #{tpu_custom_call.1} parent=11 // pred_check_branch
          %223 = sbr.rel (%p221) target = $region28
        $region27: #{tpu_custom_call.1} parent=11 // pred_region
          _
        $region28: #{tpu_custom_call.1} parent=11 // pred_fallthru
          _
        // Predicated region
        $region29: #{tpu_custom_call.1} parent=11 // pred_check
          %p224 = pneg %p150
        $region30: #{tpu_custom_call.1} parent=11 // pred_check_branch
          %226 = sbr.rel (%p224) target = $region32
        $region31: #{tpu_custom_call.1} parent=11 // pred_region
          _
        $region32: #{tpu_custom_call.1} parent=11 // pred_fallthru
          _
        // Predicated region
        $region33: #{tpu_custom_call.1} parent=11 // pred_check
          %p227 = pneg %p171
        $region34: #{tpu_custom_call.1} parent=11 // pred_check_branch
          %229 = sbr.rel (%p227) target = $region36
        $region35: #{tpu_custom_call.1} parent=11 // pred_region
          _
        $region36: #{tpu_custom_call.1} parent=11 // pred_fallthru
          _
      $region12: #{tpu_custom_call.1} parent=5 // pred_fallthru
        _
      %p230 = scmp.lt.s32.totalorder %s19, 2
      // Predicated region
      $region37: #{tpu_custom_call.1} parent=5 // pred_check
        %p231 = pneg %p230
      $region38: #{tpu_custom_call.1} parent=5 // pred_check_branch
        %233 = sbr.rel (%p231) target = $region40
      $region39: #{tpu_custom_call.1} parent=5 // pred_region
        // Predicated region
        $region41: #{tpu_custom_call.1} parent=39 // pred_check
          %p234 = pneg %p39
        $region42: #{tpu_custom_call.1} parent=39 // pred_check_branch
          %236 = sbr.rel (%p234) target = $region44
        $region43: #{tpu_custom_call.1} parent=39 // pred_region
          %s237 = sand.u32 %s29, 1
          %s238 = scalar_lea.sflag [#allocation4], %s237
          %s239 = sand.u32 %s29, 1
          %s240 = smul.addr %s239, 256
          %s241 = scalar_lea.vmem [#allocation3], %s240
          %s243 = ssub.s32 4096, 4096
          %244 = vsyncadd %s238, %s243
          %s245 = smul.addr %s19, 32
          %s246 = smul.addr %s245, 128
          %s247 = scalar_lea.hbm %s0, %s246
          %s248 = sshll.u32 %s241, 4
          %s249 = int_to_ptr.vmem [resolvable:$true] %s248
          %254 = dma.hbm_to_vmem [thread:$0]  %s247, 4096, %s249, %s238, 128, 128, 8
        $region44: #{tpu_custom_call.1} parent=39 // pred_fallthru
          _
      $region40: #{tpu_custom_call.1} parent=5 // pred_fallthru
        _
      %p255 = scmp.le.s32.totalorder 1, %s19
      %p256 = scmp.lt.s32.totalorder %s19, 3
      %p257 = pnand %p255, %p256
      %p258 = pneg %p257
      // Predicated region
      $region45: #{tpu_custom_call.1} parent=5 // pred_check
        _
      $region46: #{tpu_custom_call.1} parent=5 // pred_check_branch
        %260 = sbr.rel (%p257) target = $region48
      $region47: #{tpu_custom_call.1} parent=5 // pred_region
        %s261 = ssub.s32 %s19, 1
        %s262 = sand.u32 %s32, 1
        %s263 = scalar_lea.sflag [#allocation4], %s262
        %s264 = sand.u32 %s32, 1
        %s265 = smul.addr %s264, 256
        %s266 = scalar_lea.vmem [#allocation3], %s265
        // Predicated region
        $region49: #{tpu_custom_call.1} parent=47 // pred_check
          %p267 = pneg %p45
        $region50: #{tpu_custom_call.1} parent=47 // pred_check_branch
          %269 = sbr.rel (%p267) target = $region52
        $region51: #{tpu_custom_call.1} parent=47 // pred_region
          %270 = dma.done %s263, 4096
        $region52: #{tpu_custom_call.1} parent=47 // pred_fallthru
          _
        %s271 = sand.u32 %s32, 1
        %s272 = scalar_lea.sflag [#allocation4], %s271
        %s273 = sand.u32 %s32, 1
        %s274 = smul.addr %s273, 256
        %s275 = scalar_lea.vmem [#allocation3], %s274
        %p276 = pneg %p45
        %p277 = pneg %p42
        %p278 = pneg %p66
        %p279 = pneg %p63
        %p280 = pneg %p87
        %p281 = pneg %p84
        %p282 = pneg %p108
        %p283 = pneg %p105
        %p284 = pneg %p129
        %p285 = pneg %p126
        %p286 = pneg %p150
        %p287 = pneg %p147
        %p288 = pneg %p171
        %p289 = pneg %p168
        %p290 = pneg %p197
        %p291 = pneg %p194
        %s292 = sand.u32 %s184, 1
        %s293 = scalar_lea.sflag [#allocation5], %s292
        %s294 = sand.u32 %s184, 1
        %s295 = smul.addr %s294, 256
        %s296 = scalar_lea.vmem [#allocation6], %s295
        %v298 = vld [vmem:[%s266] sm:$0xff]
        %v299 = vld [vmem:[%s266 + $0x8] sm:$0xff]
        %v300 = vld [vmem:[%s266 + $0x10] sm:$0xff]
        %v301 = vld [vmem:[%s266 + $0x18] sm:$0xff]
        %v302 = vld [vmem:[%s266 + $0x20] sm:$0xff]
        %v303 = vld [vmem:[%s266 + $0x28] sm:$0xff]
        %v304 = vld [vmem:[%s266 + $0x30] sm:$0xff]
        %v305 = vld [vmem:[%s266 + $0x38] sm:$0xff]
        %v306 = vld [vmem:[%s266 + $0x40] sm:$0xff]
        %v307 = vld [vmem:[%s266 + $0x48] sm:$0xff]
        %v308 = vld [vmem:[%s266 + $0x50] sm:$0xff]
        %v309 = vld [vmem:[%s266 + $0x58] sm:$0xff]
        %v310 = vld [vmem:[%s266 + $0x60] sm:$0xff]
        %v311 = vld [vmem:[%s266 + $0x68] sm:$0xff]
        %v312 = vld [vmem:[%s266 + $0x70] sm:$0xff]
        %v313 = vld [vmem:[%s266 + $0x78] sm:$0xff]
        %v314 = vld [vmem:[%s266 + $0x80] sm:$0xff]
        %v315 = vld [vmem:[%s266 + $0x88] sm:$0xff]
        %v316 = vld [vmem:[%s266 + $0x90] sm:$0xff]
        %v317 = vld [vmem:[%s266 + $0x98] sm:$0xff]
        %v318 = vld [vmem:[%s266 + $0xa0] sm:$0xff]
        %v319 = vld [vmem:[%s266 + $0xa8] sm:$0xff]
        %v320 = vld [vmem:[%s266 + $0xb0] sm:$0xff]
        %v321 = vld [vmem:[%s266 + $0xb8] sm:$0xff]
        %v322 = vld [vmem:[%s266 + $0xc0] sm:$0xff]
        %v323 = vld [vmem:[%s266 + $0xc8] sm:$0xff]
        %v324 = vld [vmem:[%s266 + $0xd0] sm:$0xff]
        %v325 = vld [vmem:[%s266 + $0xd8] sm:$0xff]
        %v326 = vld [vmem:[%s266 + $0xe0] sm:$0xff]
        %v327 = vld [vmem:[%s266 + $0xe8] sm:$0xff]
        %v328 = vld [vmem:[%s266 + $0xf0] sm:$0xff]
        %v329 = vld [vmem:[%s266 + $0xf8] sm:$0xff]
        %v330 = vpack.c.bf16 %v299, %v298
        %v331 = vpack.c.bf16 %v301, %v300
        %v332 = vpack.c.bf16 %v303, %v302
        %v333 = vpack.c.bf16 %v305, %v304
        %v334 = vpack.c.bf16 %v307, %v306
        %v335 = vpack.c.bf16 %v309, %v308
        %v336 = vpack.c.bf16 %v311, %v310
        %v337 = vpack.c.bf16 %v313, %v312
        %v338 = vpack.c.bf16 %v315, %v314
        %v339 = vpack.c.bf16 %v317, %v316
        %v340 = vpack.c.bf16 %v319, %v318
        %v341 = vpack.c.bf16 %v321, %v320
        %v342 = vpack.c.bf16 %v323, %v322
        %v343 = vpack.c.bf16 %v325, %v324
        %v344 = vpack.c.bf16 %v327, %v326
        %v345 = vpack.c.bf16 %v329, %v328
        %v346 = vld [vmem:[%s1] sm:$0xf]
        %v347 = vld [vmem:[%s1 + $0x4] sm:$0xf]
        %v348 = vld [vmem:[%s1 + $0x8] sm:$0xf]
        %v349 = vld [vmem:[%s1 + $0xc] sm:$0xf]
        %v350 = vld [vmem:[%s1 + $0x10] sm:$0xf]
        %v351 = vld [vmem:[%s1 + $0x14] sm:$0xf]
        %v352 = vld [vmem:[%s1 + $0x18] sm:$0xf]
        %v353 = vld [vmem:[%s1 + $0x1c] sm:$0xf]
        %v354 = vld [vmem:[%s1 + $0x20] sm:$0xf]
        %v355 = vld [vmem:[%s1 + $0x24] sm:$0xf]
        %v356 = vld [vmem:[%s1 + $0x28] sm:$0xf]
        %v357 = vld [vmem:[%s1 + $0x2c] sm:$0xf]
        %v358 = vld [vmem:[%s1 + $0x30] sm:$0xf]
        %v359 = vld [vmem:[%s1 + $0x34] sm:$0xf]
        %v360 = vld [vmem:[%s1 + $0x38] sm:$0xf]
        %v361 = vld [vmem:[%s1 + $0x3c] sm:$0xf]
        %v362 = vld [vmem:[%s4] sm:$0x1]
        %v364 = vlaneseq
        %v365 = vshrl.u32 %v364, 7
        %v366 = vsub.s32 0, %v365
        %v367 = vrot.slane %v362, %v366
        %v385 = vunpack.c.l.b16 %v346
        %v386 = vunpack.c.l.b16 %v347
        %v387 = vunpack.c.l.b16 %v348
        %v388 = vunpack.c.l.b16 %v349
        %v389 = vunpack.c.l.b16 %v350
        %v390 = vunpack.c.l.b16 %v351
        %v391 = vunpack.c.l.b16 %v352
        %v392 = vunpack.c.l.b16 %v353
        %v393 = vunpack.c.l.b16 %v354
        %v394 = vunpack.c.l.b16 %v355
        %v395 = vunpack.c.l.b16 %v356
        %v396 = vunpack.c.l.b16 %v357
        %v397 = vunpack.c.l.b16 %v358
        %v398 = vunpack.c.l.b16 %v359
        %v399 = vunpack.c.l.b16 %v360
        %v400 = vunpack.c.l.b16 %v361
        %v401 = vpack.c.b16 %v386, %v385
        %v402 = vpack.c.b16 %v388, %v387
        %v403 = vpack.c.b16 %v390, %v389
        %v404 = vpack.c.b16 %v392, %v391
        %v405 = vpack.c.b16 %v394, %v393
        %v406 = vpack.c.b16 %v396, %v395
        %v407 = vpack.c.b16 %v398, %v397
        %v408 = vpack.c.b16 %v400, %v399
        %417 = vmatprep.subr.bf16.mxu0 0
        %418 = vmatpush1.bf16.msra.mxu0 %v401
        %419 = vmatprep.subr.bf16.mxu0 0
        %420 = vmatpush1.bf16.msra.mxu0 %v402
        %421 = vmatprep.subr.bf16.mxu0 0
        %422 = vmatpush1.bf16.msra.mxu0 %v403
        %423 = vmatprep.subr.bf16.mxu0 0
        %424 = vmatpush1.bf16.msra.mxu0 %v404
        %425 = vmatprep.subr.bf16.mxu0 0
        %426 = vmatpush1.bf16.msra.mxu0 %v405
        %427 = vmatprep.subr.bf16.mxu0 0
        %428 = vmatpush1.bf16.msra.mxu0 %v406
        %429 = vmatprep.subr.bf16.mxu0 0
        %430 = vmatpush1.bf16.msra.mxu0 %v407
        %431 = vmatprep.subr.bf16.mxu0 0
        %432 = vmatpush1.bf16.msra.mxu0 %v408
        %433 = vmatprep.subr.bf16.mxu0 0
        %434 = vmatpush1.bf16.msra.mxu0 0
        %435 = vmatprep.subr.bf16.mxu0 0
        %436 = vmatpush1.bf16.msra.mxu0 0
        %437 = vmatprep.subr.bf16.mxu0 0
        %438 = vmatpush1.bf16.msra.mxu0 0
        %439 = vmatprep.subr.bf16.mxu0 0
        %440 = vmatpush1.bf16.msra.mxu0 0
        %441 = vmatprep.subr.bf16.mxu0 0
        %442 = vmatpush1.bf16.msra.mxu0 0
        %443 = vmatprep.subr.bf16.mxu0 0
        %444 = vmatpush1.bf16.msra.mxu0 0
        %445 = vmatprep.subr.bf16.mxu0 0
        %446 = vmatpush1.bf16.msra.mxu0 0
        %447 = vmatprep.subr.bf16.mxu0 0
        %448 = vmatpush1.bf16.msra.mxu0 0
        %449 = vmatprep.mubr.bf16.mxu0 0
        %450 = vmatmul.mubr.bf16.gmra.mrb[0].mxu0 %v330
        %v451 = vpop.f32.mrb[0].mxu0
        %v452 = vadd.f32 %v367, %v451
        %v453 = vpop.f32.mrb[0].mxu0
        %v454 = vpop.f32.mrb[0].mxu0
        %v455 = vadd.f32 %v367, %v454
        %v456 = vpop.f32.mrb[0].mxu0
        %457 = vmatprep.mubr.bf16.mxu0 0
        %458 = vmatmul.mubr.bf16.gmra.mrb[0].mxu0 %v331
        %v459 = vpop.f32.mrb[0].mxu0
        %v460 = vadd.f32 %v367, %v459
        %v461 = vpop.f32.mrb[0].mxu0
        %v462 = vpop.f32.mrb[0].mxu0
        %v463 = vadd.f32 %v367, %v462
        %v464 = vpop.f32.mrb[0].mxu0
        %465 = vmatprep.mubr.bf16.mxu0 0
        %466 = vmatmul.mubr.bf16.gmra.mrb[0].mxu0 %v332
        %v467 = vpop.f32.mrb[0].mxu0
        %v468 = vadd.f32 %v367, %v467
        %v469 = vpop.f32.mrb[0].mxu0
        %v470 = vpop.f32.mrb[0].mxu0
        %v471 = vadd.f32 %v367, %v470
        %v472 = vpop.f32.mrb[0].mxu0
        %473 = vmatprep.mubr.bf16.mxu0 0
        %474 = vmatmul.mubr.bf16.gmra.mrb[0].mxu0 %v333
        %v475 = vpop.f32.mrb[0].mxu0
        %v476 = vadd.f32 %v367, %v475
        %v477 = vpop.f32.mrb[0].mxu0
        %v478 = vpop.f32.mrb[0].mxu0
        %v479 = vadd.f32 %v367, %v478
        %v480 = vpop.f32.mrb[0].mxu0
        %481 = vmatprep.mubr.bf16.mxu0 0
        %482 = vmatmul.mubr.bf16.gmra.mrb[0].mxu0 %v334
        %v483 = vpop.f32.mrb[0].mxu0
        %v484 = vadd.f32 %v367, %v483
        %v485 = vpop.f32.mrb[0].mxu0
        %v486 = vpop.f32.mrb[0].mxu0
        %v487 = vadd.f32 %v367, %v486
        %v488 = vpop.f32.mrb[0].mxu0
        %489 = vmatprep.mubr.bf16.mxu0 0
        %490 = vmatmul.mubr.bf16.gmra.mrb[0].mxu0 %v335
        %v491 = vpop.f32.mrb[0].mxu0
        %v492 = vadd.f32 %v367, %v491
        %v493 = vpop.f32.mrb[0].mxu0
        %v494 = vpop.f32.mrb[0].mxu0
        %v495 = vadd.f32 %v367, %v494
        %v496 = vpop.f32.mrb[0].mxu0
        %497 = vmatprep.mubr.bf16.mxu0 0
        %498 = vmatmul.mubr.bf16.gmra.mrb[0].mxu0 %v336
        %v499 = vpop.f32.mrb[0].mxu0
        %v500 = vadd.f32 %v367, %v499
        %v501 = vpop.f32.mrb[0].mxu0
        %v502 = vpop.f32.mrb[0].mxu0
        %v503 = vadd.f32 %v367, %v502
        %v504 = vpop.f32.mrb[0].mxu0
        %505 = vmatprep.mubr.bf16.mxu0 0
        %506 = vmatmul.mubr.bf16.gmra.mrb[0].mxu0 %v337
        %v507 = vpop.f32.mrb[0].mxu0
        %v508 = vadd.f32 %v367, %v507
        %v509 = vpop.f32.mrb[0].mxu0
        %v510 = vpop.f32.mrb[0].mxu0
        %v511 = vadd.f32 %v367, %v510
        %v512 = vpop.f32.mrb[0].mxu0
        %513 = vmatprep.mubr.bf16.mxu0 0
        %514 = vmatmul.mubr.bf16.gmra.mrb[0].mxu0 %v338
        %v515 = vpop.f32.mrb[0].mxu0
        %v516 = vadd.f32 %v367, %v515
        %v517 = vpop.f32.mrb[0].mxu0
        %v518 = vpop.f32.mrb[0].mxu0
        %v519 = vadd.f32 %v367, %v518
        %v520 = vpop.f32.mrb[0].mxu0
        %521 = vmatprep.mubr.bf16.mxu0 0
        %522 = vmatmul.mubr.bf16.gmra.mrb[0].mxu0 %v339
        %v523 = vpop.f32.mrb[0].mxu0
        %v524 = vadd.f32 %v367, %v523
        %v525 = vpop.f32.mrb[0].mxu0
        %v526 = vpop.f32.mrb[0].mxu0
        %v527 = vadd.f32 %v367, %v526
        %v528 = vpop.f32.mrb[0].mxu0
        %529 = vmatprep.mubr.bf16.mxu0 0
        %530 = vmatmul.mubr.bf16.gmra.mrb[0].mxu0 %v340
        %v531 = vpop.f32.mrb[0].mxu0
        %v532 = vadd.f32 %v367, %v531
        %v533 = vpop.f32.mrb[0].mxu0
        %v534 = vpop.f32.mrb[0].mxu0
        %v535 = vadd.f32 %v367, %v534
        %v536 = vpop.f32.mrb[0].mxu0
        %537 = vmatprep.mubr.bf16.mxu0 0
        %538 = vmatmul.mubr.bf16.gmra.mrb[0].mxu0 %v341
        %v539 = vpop.f32.mrb[0].mxu0
        %v540 = vadd.f32 %v367, %v539
        %v541 = vpop.f32.mrb[0].mxu0
        %v542 = vpop.f32.mrb[0].mxu0
        %v543 = vadd.f32 %v367, %v542
        %v544 = vpop.f32.mrb[0].mxu0
        %545 = vmatprep.mubr.bf16.mxu0 0
        %546 = vmatmul.mubr.bf16.gmra.mrb[0].mxu0 %v342
        %v547 = vpop.f32.mrb[0].mxu0
        %v548 = vadd.f32 %v367, %v547
        %v549 = vpop.f32.mrb[0].mxu0
        %v550 = vpop.f32.mrb[0].mxu0
        %v551 = vadd.f32 %v367, %v550
        %v552 = vpop.f32.mrb[0].mxu0
        %553 = vmatprep.mubr.bf16.mxu0 0
        %554 = vmatmul.mubr.bf16.gmra.mrb[0].mxu0 %v343
        %v555 = vpop.f32.mrb[0].mxu0
        %v556 = vadd.f32 %v367, %v555
        %v557 = vpop.f32.mrb[0].mxu0
        %v558 = vpop.f32.mrb[0].mxu0
        %v559 = vadd.f32 %v367, %v558
        %v560 = vpop.f32.mrb[0].mxu0
        %561 = vmatprep.mubr.bf16.mxu0 0
        %562 = vmatmul.mubr.bf16.gmra.mrb[0].mxu0 %v344
        %v563 = vpop.f32.mrb[0].mxu0
        %v564 = vadd.f32 %v367, %v563
        %v565 = vpop.f32.mrb[0].mxu0
        %v566 = vpop.f32.mrb[0].mxu0
        %v567 = vadd.f32 %v367, %v566
        %v568 = vpop.f32.mrb[0].mxu0
        %569 = vmatprep.mubr.bf16.mxu0 0
        %570 = vmatmul.mubr.bf16.gmra.mrb[0].mxu0 %v345
        %v571 = vpop.f32.mrb[0].mxu0
        %v572 = vadd.f32 %v367, %v571
        %v573 = vpop.f32.mrb[0].mxu0
        %v574 = vpop.f32.mrb[0].mxu0
        %v575 = vadd.f32 %v367, %v574
        %v576 = vpop.f32.mrb[0].mxu0
        %577 = vdwg.mxu0
        %v578 = vmax.f32 %v452, 0.0
        %v579 = vmax.f32 %v455, 0.0
        %v580 = vmax.f32 %v460, 0.0
        %v581 = vmax.f32 %v463, 0.0
        %v582 = vmax.f32 %v468, 0.0
        %v583 = vmax.f32 %v471, 0.0
        %v584 = vmax.f32 %v476, 0.0
        %v585 = vmax.f32 %v479, 0.0
        %v586 = vmax.f32 %v484, 0.0
        %v587 = vmax.f32 %v487, 0.0
        %v588 = vmax.f32 %v492, 0.0
        %v589 = vmax.f32 %v495, 0.0
        %v590 = vmax.f32 %v500, 0.0
        %v591 = vmax.f32 %v503, 0.0
        %v592 = vmax.f32 %v508, 0.0
        %v593 = vmax.f32 %v511, 0.0
        %v594 = vmax.f32 %v516, 0.0
        %v595 = vmax.f32 %v519, 0.0
        %v596 = vmax.f32 %v524, 0.0
        %v597 = vmax.f32 %v527, 0.0
        %v598 = vmax.f32 %v532, 0.0
        %v599 = vmax.f32 %v535, 0.0
        %v600 = vmax.f32 %v540, 0.0
        %v601 = vmax.f32 %v543, 0.0
        %v602 = vmax.f32 %v548, 0.0
        %v603 = vmax.f32 %v551, 0.0
        %v604 = vmax.f32 %v556, 0.0
        %v605 = vmax.f32 %v559, 0.0
        %v606 = vmax.f32 %v564, 0.0
        %v607 = vmax.f32 %v567, 0.0
        %v608 = vmax.f32 %v572, 0.0
        %v609 = vmax.f32 %v575, 0.0
        %v610 = vpack.c.bf16 %v579, %v578
        %v611 = vpack.c.bf16 %v581, %v580
        %v612 = vpack.c.bf16 %v583, %v582
        %v613 = vpack.c.bf16 %v585, %v584
        %v614 = vpack.c.bf16 %v587, %v586
        %v615 = vpack.c.bf16 %v589, %v588
        %v616 = vpack.c.bf16 %v591, %v590
        %v617 = vpack.c.bf16 %v593, %v592
        %v618 = vpack.c.bf16 %v595, %v594
        %v619 = vpack.c.bf16 %v597, %v596
        %v620 = vpack.c.bf16 %v599, %v598
        %v621 = vpack.c.bf16 %v601, %v600
        %v622 = vpack.c.bf16 %v603, %v602
        %v623 = vpack.c.bf16 %v605, %v604
        %v624 = vpack.c.bf16 %v607, %v606
        %v625 = vpack.c.bf16 %v609, %v608
        %v626 = vld [vmem:[%s2] sm:$0xff]
        %v627 = vld [vmem:[%s2 + $0x8] sm:$0xf]
        %v628 = vld [vmem:[%s2 + $0xc] sm:$0xff]
        %v629 = vld [vmem:[%s2 + $0x14] sm:$0xf]
        %v630 = vld [vmem:[%s2 + $0x18] sm:$0xff]
        %v631 = vld [vmem:[%s2 + $0x20] sm:$0xf]
        %v632 = vld [vmem:[%s2 + $0x24] sm:$0xff]
        %v633 = vld [vmem:[%s2 + $0x2c] sm:$0xf]
        %v642 = vunpack.c.l.b16 %v626
        %v643 = vunpack.c.h.b16 %v626
        %v644 = vunpack.c.l.b16 %v627
        %v645 = vunpack.c.l.b16 %v628
        %v646 = vunpack.c.h.b16 %v628
        %v647 = vunpack.c.l.b16 %v629
        %v648 = vunpack.c.l.b16 %v630
        %v649 = vunpack.c.h.b16 %v630
        %v650 = vunpack.c.l.b16 %v631
        %v651 = vunpack.c.l.b16 %v632
        %v652 = vunpack.c.h.b16 %v632
        %v653 = vunpack.c.l.b16 %v633
        %v654 = vpack.c.b16 %v645, %v642
        %v655 = vpack.c.b16 %v646, %v643
        %v656 = vpack.c.b16 %v647, %v644
        %v657 = vpack.c.b16 %v651, %v648
        %v658 = vpack.c.b16 %v652, %v649
        %v659 = vpack.c.b16 %v653, %v650
        %vm666 = vcmask 261120
        %v668 = vsel %vm666, %v610, 0
        %v671 = vsel %vm666, %v611, 0
        %v674 = vsel %vm666, %v612, 0
        %v677 = vsel %vm666, %v613, 0
        %v680 = vsel %vm666, %v614, 0
        %v683 = vsel %vm666, %v615, 0
        %v686 = vsel %vm666, %v616, 0
        %v689 = vsel %vm666, %v617, 0
        %v692 = vsel %vm666, %v618, 0
        %v695 = vsel %vm666, %v619, 0
        %v698 = vsel %vm666, %v620, 0
        %v701 = vsel %vm666, %v621, 0
        %v704 = vsel %vm666, %v622, 0
        %v707 = vsel %vm666, %v623, 0
        %v710 = vsel %vm666, %v624, 0
        %v713 = vsel %vm666, %v625, 0
        %715 = vmatprep.subr.bf16.mxu0 %v655
        %716 = vmatpush1.bf16.msra.mxu0 %v654
        %717 = vmatprep.subr.bf16.mxu0 %v658
        %718 = vmatpush1.bf16.msra.mxu0 %v657
        %719 = vmatprep.subr.bf16.mxu0 0
        %720 = vmatpush1.bf16.msra.mxu0 0
        %721 = vmatprep.subr.bf16.mxu0 0
        %722 = vmatpush1.bf16.msra.mxu0 0
        %723 = vmatprep.subr.bf16.mxu0 0
        %724 = vmatpush1.bf16.msra.mxu0 0
        %725 = vmatprep.subr.bf16.mxu0 0
        %726 = vmatpush1.bf16.msra.mxu0 0
        %727 = vmatprep.subr.bf16.mxu0 0
        %728 = vmatpush1.bf16.msra.mxu0 0
        %729 = vmatprep.subr.bf16.mxu0 0
        %730 = vmatpush1.bf16.msra.mxu0 0
        %731 = vmatprep.subr.bf16.mxu0 0
        %732 = vmatpush1.bf16.msra.mxu0 0
        %733 = vmatprep.subr.bf16.mxu0 0
        %734 = vmatpush1.bf16.msra.mxu0 0
        %735 = vmatprep.subr.bf16.mxu0 0
        %736 = vmatpush1.bf16.msra.mxu0 0
        %737 = vmatprep.subr.bf16.mxu0 0
        %738 = vmatpush1.bf16.msra.mxu0 0
        %739 = vmatprep.subr.bf16.mxu0 0
        %740 = vmatpush1.bf16.msra.mxu0 0
        %741 = vmatprep.subr.bf16.mxu0 0
        %742 = vmatpush1.bf16.msra.mxu0 0
        %743 = vmatprep.subr.bf16.mxu0 0
        %744 = vmatpush1.bf16.msra.mxu0 0
        %745 = vmatprep.subr.bf16.mxu0 0
        %746 = vmatpush1.bf16.msra.mxu0 0
        %747 = vmatprep.mubr.bf16.mxu0 0
        %748 = vmatmul.mubr.bf16.gmra.mrb[0].mxu0 %v668
        %v749 = vpop.f32.mrb[0].mxu0
        %v750 = vadd.f32 0.0, %v749
        %v751 = vpop.f32.mrb[0].mxu0
        %v752 = vadd.f32 0.0, %v751
        %v753 = vpop.f32.mrb[0].mxu0
        %v754 = vadd.f32 0.0, %v753
        %v755 = vpop.f32.mrb[0].mxu0
        %v756 = vadd.f32 0.0, %v755
        %757 = vmatprep.mubr.bf16.mxu0 0
        %758 = vmatmul.mubr.bf16.gmra.mrb[0].mxu0 %v671
        %v759 = vpop.f32.mrb[0].mxu0
        %v760 = vadd.f32 0.0, %v759
        %v761 = vpop.f32.mrb[0].mxu0
        %v762 = vadd.f32 0.0, %v761
        %v763 = vpop.f32.mrb[0].mxu0
        %v764 = vadd.f32 0.0, %v763
        %v765 = vpop.f32.mrb[0].mxu0
        %v766 = vadd.f32 0.0, %v765
        %767 = vmatprep.mubr.bf16.mxu0 0
        %768 = vmatmul.mubr.bf16.gmra.mrb[0].mxu0 %v674
        %v769 = vpop.f32.mrb[0].mxu0
        %v770 = vadd.f32 0.0, %v769
        %v771 = vpop.f32.mrb[0].mxu0
        %v772 = vadd.f32 0.0, %v771
        %v773 = vpop.f32.mrb[0].mxu0
        %v774 = vadd.f32 0.0, %v773
        %v775 = vpop.f32.mrb[0].mxu0
        %v776 = vadd.f32 0.0, %v775
        %777 = vmatprep.mubr.bf16.mxu0 0
        %778 = vmatmul.mubr.bf16.gmra.mrb[0].mxu0 %v677
        %v779 = vpop.f32.mrb[0].mxu0
        %v780 = vadd.f32 0.0, %v779
        %v781 = vpop.f32.mrb[0].mxu0
        %v782 = vadd.f32 0.0, %v781
        %v783 = vpop.f32.mrb[0].mxu0
        %v784 = vadd.f32 0.0, %v783
        %v785 = vpop.f32.mrb[0].mxu0
        %v786 = vadd.f32 0.0, %v785
        %787 = vmatprep.mubr.bf16.mxu0 0
        %788 = vmatmul.mubr.bf16.gmra.mrb[0].mxu0 %v680
        %v789 = vpop.f32.mrb[0].mxu0
        %v790 = vadd.f32 0.0, %v789
        %v791 = vpop.f32.mrb[0].mxu0
        %v792 = vadd.f32 0.0, %v791
        %v793 = vpop.f32.mrb[0].mxu0
        %v794 = vadd.f32 0.0, %v793
        %v795 = vpop.f32.mrb[0].mxu0
        %v796 = vadd.f32 0.0, %v795
        %797 = vmatprep.mubr.bf16.mxu0 0
        %798 = vmatmul.mubr.bf16.gmra.mrb[0].mxu0 %v683
        %v799 = vpop.f32.mrb[0].mxu0
        %v800 = vadd.f32 0.0, %v799
        %v801 = vpop.f32.mrb[0].mxu0
        %v802 = vadd.f32 0.0, %v801
        %v803 = vpop.f32.mrb[0].mxu0
        %v804 = vadd.f32 0.0, %v803
        %v805 = vpop.f32.mrb[0].mxu0
        %v806 = vadd.f32 0.0, %v805
        %807 = vmatprep.mubr.bf16.mxu0 0
        %808 = vmatmul.mubr.bf16.gmra.mrb[0].mxu0 %v686
        %v809 = vpop.f32.mrb[0].mxu0
        %v810 = vadd.f32 0.0, %v809
        %v811 = vpop.f32.mrb[0].mxu0
        %v812 = vadd.f32 0.0, %v811
        %v813 = vpop.f32.mrb[0].mxu0
        %v814 = vadd.f32 0.0, %v813
        %v815 = vpop.f32.mrb[0].mxu0
        %v816 = vadd.f32 0.0, %v815
        %817 = vmatprep.mubr.bf16.mxu0 0
        %818 = vmatmul.mubr.bf16.gmra.mrb[0].mxu0 %v689
        %v819 = vpop.f32.mrb[0].mxu0
        %v820 = vadd.f32 0.0, %v819
        %v821 = vpop.f32.mrb[0].mxu0
        %v822 = vadd.f32 0.0, %v821
        %v823 = vpop.f32.mrb[0].mxu0
        %v824 = vadd.f32 0.0, %v823
        %v825 = vpop.f32.mrb[0].mxu0
        %v826 = vadd.f32 0.0, %v825
        %827 = vmatprep.mubr.bf16.mxu0 0
        %828 = vmatmul.mubr.bf16.gmra.mrb[0].mxu0 %v692
        %v829 = vpop.f32.mrb[0].mxu0
        %v830 = vadd.f32 0.0, %v829
        %v831 = vpop.f32.mrb[0].mxu0
        %v832 = vadd.f32 0.0, %v831
        %v833 = vpop.f32.mrb[0].mxu0
        %v834 = vadd.f32 0.0, %v833
        %v835 = vpop.f32.mrb[0].mxu0
        %v836 = vadd.f32 0.0, %v835
        %837 = vmatprep.mubr.bf16.mxu0 0
        %838 = vmatmul.mubr.bf16.gmra.mrb[0].mxu0 %v695
        %v839 = vpop.f32.mrb[0].mxu0
        %v840 = vadd.f32 0.0, %v839
        %v841 = vpop.f32.mrb[0].mxu0
        %v842 = vadd.f32 0.0, %v841
        %v843 = vpop.f32.mrb[0].mxu0
        %v844 = vadd.f32 0.0, %v843
        %v845 = vpop.f32.mrb[0].mxu0
        %v846 = vadd.f32 0.0, %v845
        %847 = vmatprep.mubr.bf16.mxu0 0
        %848 = vmatmul.mubr.bf16.gmra.mrb[0].mxu0 %v698
        %v849 = vpop.f32.mrb[0].mxu0
        %v850 = vadd.f32 0.0, %v849
        %v851 = vpop.f32.mrb[0].mxu0
        %v852 = vadd.f32 0.0, %v851
        %v853 = vpop.f32.mrb[0].mxu0
        %v854 = vadd.f32 0.0, %v853
        %v855 = vpop.f32.mrb[0].mxu0
        %v856 = vadd.f32 0.0, %v855
        %857 = vmatprep.mubr.bf16.mxu0 0
        %858 = vmatmul.mubr.bf16.gmra.mrb[0].mxu0 %v701
        %v859 = vpop.f32.mrb[0].mxu0
        %v860 = vadd.f32 0.0, %v859
        %v861 = vpop.f32.mrb[0].mxu0
        %v862 = vadd.f32 0.0, %v861
        %v863 = vpop.f32.mrb[0].mxu0
        %v864 = vadd.f32 0.0, %v863
        %v865 = vpop.f32.mrb[0].mxu0
        %v866 = vadd.f32 0.0, %v865
        %867 = vmatprep.mubr.bf16.mxu0 0
        %868 = vmatmul.mubr.bf16.gmra.mrb[0].mxu0 %v704
        %v869 = vpop.f32.mrb[0].mxu0
        %v870 = vadd.f32 0.0, %v869
        %v871 = vpop.f32.mrb[0].mxu0
        %v872 = vadd.f32 0.0, %v871
        %v873 = vpop.f32.mrb[0].mxu0
        %v874 = vadd.f32 0.0, %v873
        %v875 = vpop.f32.mrb[0].mxu0
        %v876 = vadd.f32 0.0, %v875
        %877 = vmatprep.mubr.bf16.mxu0 0
        %878 = vmatmul.mubr.bf16.gmra.mrb[0].mxu0 %v707
        %v879 = vpop.f32.mrb[0].mxu0
        %v880 = vadd.f32 0.0, %v879
        %v881 = vpop.f32.mrb[0].mxu0
        %v882 = vadd.f32 0.0, %v881
        %v883 = vpop.f32.mrb[0].mxu0
        %v884 = vadd.f32 0.0, %v883
        %v885 = vpop.f32.mrb[0].mxu0
        %v886 = vadd.f32 0.0, %v885
        %887 = vmatprep.mubr.bf16.mxu0 0
        %888 = vmatmul.mubr.bf16.gmra.mrb[0].mxu0 %v710
        %v889 = vpop.f32.mrb[0].mxu0
        %v890 = vadd.f32 0.0, %v889
        %v891 = vpop.f32.mrb[0].mxu0
        %v892 = vadd.f32 0.0, %v891
        %v893 = vpop.f32.mrb[0].mxu0
        %v894 = vadd.f32 0.0, %v893
        %v895 = vpop.f32.mrb[0].mxu0
        %v896 = vadd.f32 0.0, %v895
        %897 = vmatprep.mubr.bf16.mxu0 0
        %898 = vmatmul.mubr.bf16.gmra.mrb[0].mxu0 %v713
        %v899 = vpop.f32.mrb[0].mxu0
        %v900 = vadd.f32 0.0, %v899
        %v901 = vpop.f32.mrb[0].mxu0
        %v902 = vadd.f32 0.0, %v901
        %v903 = vpop.f32.mrb[0].mxu0
        %v904 = vadd.f32 0.0, %v903
        %v905 = vpop.f32.mrb[0].mxu0
        %v906 = vadd.f32 0.0, %v905
        %907 = vdwg.mxu0
        %908 = vmatprep.subr.bf16.mxu0 0
        %909 = vmatpush1.bf16.msra.mxu0 %v656
        %910 = vmatprep.subr.bf16.mxu0 0
        %911 = vmatpush1.bf16.msra.mxu0 %v659
        %912 = vmatprep.subr.bf16.mxu0 0
        %913 = vmatpush1.bf16.msra.mxu0 0
        %914 = vmatprep.subr.bf16.mxu0 0
        %915 = vmatpush1.bf16.msra.mxu0 0
        %916 = vmatprep.subr.bf16.mxu0 0
        %917 = vmatpush1.bf16.msra.mxu0 0
        %918 = vmatprep.subr.bf16.mxu0 0
        %919 = vmatpush1.bf16.msra.mxu0 0
        %920 = vmatprep.subr.bf16.mxu0 0
        %921 = vmatpush1.bf16.msra.mxu0 0
        %922 = vmatprep.subr.bf16.mxu0 0
        %923 = vmatpush1.bf16.msra.mxu0 0
        %924 = vmatprep.subr.bf16.mxu0 0
        %925 = vmatpush1.bf16.msra.mxu0 0
        %926 = vmatprep.subr.bf16.mxu0 0
        %927 = vmatpush1.bf16.msra.mxu0 0
        %928 = vmatprep.subr.bf16.mxu0 0
        %929 = vmatpush1.bf16.msra.mxu0 0
        %930 = vmatprep.subr.bf16.mxu0 0
        %931 = vmatpush1.bf16.msra.mxu0 0
        %932 = vmatprep.subr.bf16.mxu0 0
        %933 = vmatpush1.bf16.msra.mxu0 0
        %934 = vmatprep.subr.bf16.mxu0 0
        %935 = vmatpush1.bf16.msra.mxu0 0
        %936 = vmatprep.subr.bf16.mxu0 0
        %937 = vmatpush1.bf16.msra.mxu0 0
        %938 = vmatprep.subr.bf16.mxu0 0
        %939 = vmatpush1.bf16.msra.mxu0 0
        %940 = vmatprep.mubr.bf16.mxu0 0
        %941 = vmatmul.mubr.bf16.gmra.mrb[0].mxu0 %v668
        %v942 = vpop.f32.mrb[0].mxu0
        %v943 = vadd.f32 0.0, %v942
        %v944 = vpop.f32.mrb[0].mxu0
        %v945 = vpop.f32.mrb[0].mxu0
        %v946 = vadd.f32 0.0, %v945
        %v947 = vpop.f32.mrb[0].mxu0
        %948 = vmatprep.mubr.bf16.mxu0 0
        %949 = vmatmul.mubr.bf16.gmra.mrb[0].mxu0 %v671
        %v950 = vpop.f32.mrb[0].mxu0
        %v951 = vadd.f32 0.0, %v950
        %v952 = vpop.f32.mrb[0].mxu0
        %v953 = vpop.f32.mrb[0].mxu0
        %v954 = vadd.f32 0.0, %v953
        %v955 = vpop.f32.mrb[0].mxu0
        %956 = vmatprep.mubr.bf16.mxu0 0
        %957 = vmatmul.mubr.bf16.gmra.mrb[0].mxu0 %v674
        %v958 = vpop.f32.mrb[0].mxu0
        %v959 = vadd.f32 0.0, %v958
        %v960 = vpop.f32.mrb[0].mxu0
        %v961 = vpop.f32.mrb[0].mxu0
        %v962 = vadd.f32 0.0, %v961
        %v963 = vpop.f32.mrb[0].mxu0
        %964 = vmatprep.mubr.bf16.mxu0 0
        %965 = vmatmul.mubr.bf16.gmra.mrb[0].mxu0 %v677
        %v966 = vpop.f32.mrb[0].mxu0
        %v967 = vadd.f32 0.0, %v966
        %v968 = vpop.f32.mrb[0].mxu0
        %v969 = vpop.f32.mrb[0].mxu0
        %v970 = vadd.f32 0.0, %v969
        %v971 = vpop.f32.mrb[0].mxu0
        %972 = vmatprep.mubr.bf16.mxu0 0
        %973 = vmatmul.mubr.bf16.gmra.mrb[0].mxu0 %v680
        %v974 = vpop.f32.mrb[0].mxu0
        %v975 = vadd.f32 0.0, %v974
        %v976 = vpop.f32.mrb[0].mxu0
        %v977 = vpop.f32.mrb[0].mxu0
        %v978 = vadd.f32 0.0, %v977
        %v979 = vpop.f32.mrb[0].mxu0
        %980 = vmatprep.mubr.bf16.mxu0 0
        %981 = vmatmul.mubr.bf16.gmra.mrb[0].mxu0 %v683
        %v982 = vpop.f32.mrb[0].mxu0
        %v983 = vadd.f32 0.0, %v982
        %v984 = vpop.f32.mrb[0].mxu0
        %v985 = vpop.f32.mrb[0].mxu0
        %v986 = vadd.f32 0.0, %v985
        %v987 = vpop.f32.mrb[0].mxu0
        %988 = vmatprep.mubr.bf16.mxu0 0
        %989 = vmatmul.mubr.bf16.gmra.mrb[0].mxu0 %v686
        %v990 = vpop.f32.mrb[0].mxu0
        %v991 = vadd.f32 0.0, %v990
        %v992 = vpop.f32.mrb[0].mxu0
        %v993 = vpop.f32.mrb[0].mxu0
        %v994 = vadd.f32 0.0, %v993
        %v995 = vpop.f32.mrb[0].mxu0
        %996 = vmatprep.mubr.bf16.mxu0 0
        %997 = vmatmul.mubr.bf16.gmra.mrb[0].mxu0 %v689
        %v998 = vpop.f32.mrb[0].mxu0
        %v999 = vadd.f32 0.0, %v998
        %v1000 = vpop.f32.mrb[0].mxu0
        %v1001 = vpop.f32.mrb[0].mxu0
        %v1002 = vadd.f32 0.0, %v1001
        %v1003 = vpop.f32.mrb[0].mxu0
        %1004 = vmatprep.mubr.bf16.mxu0 0
        %1005 = vmatmul.mubr.bf16.gmra.mrb[0].mxu0 %v692
        %v1006 = vpop.f32.mrb[0].mxu0
        %v1007 = vadd.f32 0.0, %v1006
        %v1008 = vpop.f32.mrb[0].mxu0
        %v1009 = vpop.f32.mrb[0].mxu0
        %v1010 = vadd.f32 0.0, %v1009
        %v1011 = vpop.f32.mrb[0].mxu0
        %1012 = vmatprep.mubr.bf16.mxu0 0
        %1013 = vmatmul.mubr.bf16.gmra.mrb[0].mxu0 %v695
        %v1014 = vpop.f32.mrb[0].mxu0
        %v1015 = vadd.f32 0.0, %v1014
        %v1016 = vpop.f32.mrb[0].mxu0
        %v1017 = vpop.f32.mrb[0].mxu0
        %v1018 = vadd.f32 0.0, %v1017
        %v1019 = vpop.f32.mrb[0].mxu0
        %1020 = vmatprep.mubr.bf16.mxu0 0
        %1021 = vmatmul.mubr.bf16.gmra.mrb[0].mxu0 %v698
        %v1022 = vpop.f32.mrb[0].mxu0
        %v1023 = vadd.f32 0.0, %v1022
        %v1024 = vpop.f32.mrb[0].mxu0
        %v1025 = vpop.f32.mrb[0].mxu0
        %v1026 = vadd.f32 0.0, %v1025
        %v1027 = vpop.f32.mrb[0].mxu0
        %1028 = vmatprep.mubr.bf16.mxu0 0
        %1029 = vmatmul.mubr.bf16.gmra.mrb[0].mxu0 %v701
        %v1030 = vpop.f32.mrb[0].mxu0
        %v1031 = vadd.f32 0.0, %v1030
        %v1032 = vpop.f32.mrb[0].mxu0
        %v1033 = vpop.f32.mrb[0].mxu0
        %v1034 = vadd.f32 0.0, %v1033
        %v1035 = vpop.f32.mrb[0].mxu0
        %1036 = vmatprep.mubr.bf16.mxu0 0
        %1037 = vmatmul.mubr.bf16.gmra.mrb[0].mxu0 %v704
        %v1038 = vpop.f32.mrb[0].mxu0
        %v1039 = vadd.f32 0.0, %v1038
        %v1040 = vpop.f32.mrb[0].mxu0
        %v1041 = vpop.f32.mrb[0].mxu0
        %v1042 = vadd.f32 0.0, %v1041
        %v1043 = vpop.f32.mrb[0].mxu0
        %1044 = vmatprep.mubr.bf16.mxu0 0
        %1045 = vmatmul.mubr.bf16.gmra.mrb[0].mxu0 %v707
        %v1046 = vpop.f32.mrb[0].mxu0
        %v1047 = vadd.f32 0.0, %v1046
        %v1048 = vpop.f32.mrb[0].mxu0
        %v1049 = vpop.f32.mrb[0].mxu0
        %v1050 = vadd.f32 0.0, %v1049
        %v1051 = vpop.f32.mrb[0].mxu0
        %1052 = vmatprep.mubr.bf16.mxu0 0
        %1053 = vmatmul.mubr.bf16.gmra.mrb[0].mxu0 %v710
        %v1054 = vpop.f32.mrb[0].mxu0
        %v1055 = vadd.f32 0.0, %v1054
        %v1056 = vpop.f32.mrb[0].mxu0
        %v1057 = vpop.f32.mrb[0].mxu0
        %v1058 = vadd.f32 0.0, %v1057
        %v1059 = vpop.f32.mrb[0].mxu0
        %1060 = vmatprep.mubr.bf16.mxu0 0
        %1061 = vmatmul.mubr.bf16.gmra.mrb[0].mxu0 %v713
        %v1062 = vpop.f32.mrb[0].mxu0
        %v1063 = vadd.f32 0.0, %v1062
        %v1064 = vpop.f32.mrb[0].mxu0
        %v1065 = vpop.f32.mrb[0].mxu0
        %v1066 = vadd.f32 0.0, %v1065
        %v1067 = vpop.f32.mrb[0].mxu0
        %1068 = vdwg.mxu0
        %1069 = vst [vmem:[#allocation2] sm:$0xff] 0.0
        %1070 = vst [vmem:[#allocation2 + $0x8] sm:$0xff] 0.0
        %1071 = vst.msk [vmem:[#allocation2 + $0x10] sm:$0xff] %vm666, 0.0
        %1072 = vst [vmem:[#allocation2 + $0x18] sm:$0xff] 0.0
        %1073 = vst [vmem:[#allocation2 + $0x20] sm:$0xff] 0.0
        %1074 = vst.msk [vmem:[#allocation2 + $0x28] sm:$0xff] %vm666, 0.0
        %1075 = vst [vmem:[#allocation2 + $0x30] sm:$0xff] 0.0
        %1076 = vst [vmem:[#allocation2 + $0x38] sm:$0xff] 0.0
        %1077 = vst.msk [vmem:[#allocation2 + $0x40] sm:$0xff] %vm666, 0.0
        %1078 = vst [vmem:[#allocation2 + $0x348] sm:$0xff] 0.0
        %1079 = vst [vmem:[#allocation2 + $0x350] sm:$0xff] 0.0
        %1080 = vst.msk [vmem:[#allocation2 + $0x358] sm:$0xff] %vm666, 0.0
        %1081 = vst [vmem:[#allocation2 + $0x360] sm:$0xff] 0.0
        %1082 = vst [vmem:[#allocation2 + $0x368] sm:$0xff] 0.0
        %1083 = vst.msk [vmem:[#allocation2 + $0x370] sm:$0xff] %vm666, 0.0
        %1084 = vst [vmem:[#allocation2 + $0x378] sm:$0x1] 0.0
        %1085 = vst [vmem:[#allocation2 + $0x380] sm:$0x1] 0.0
        %vm1086 = vcmask 253952
        %1087 = vst.msk [vmem:[#allocation2 + $0x388] sm:$0x1] %vm1086, 0.0
        %1088 = vst [vmem:[#allocation2 + $0x48] sm:$0xff] %v750
        %1089 = vst [vmem:[#allocation2 + $0x50] sm:$0xff] %v752
        %1090 = vst.msk [vmem:[#allocation2 + $0x58] sm:$0xff] %vm666, %v943
        %1091 = vst [vmem:[#allocation2 + $0x60] sm:$0xff] %v754
        %1092 = vst [vmem:[#allocation2 + $0x68] sm:$0xff] %v756
        %1093 = vst.msk [vmem:[#allocation2 + $0x70] sm:$0xff] %vm666, %v946
        %1094 = vst [vmem:[#allocation2 + $0x78] sm:$0xff] %v760
        %1095 = vst [vmem:[#allocation2 + $0x80] sm:$0xff] %v762
        %1096 = vst.msk [vmem:[#allocation2 + $0x88] sm:$0xff] %vm666, %v951
        %1097 = vst [vmem:[#allocation2 + $0x90] sm:$0xff] %v764
        %1098 = vst [vmem:[#allocation2 + $0x98] sm:$0xff] %v766
        %1099 = vst.msk [vmem:[#allocation2 + $0xa0] sm:$0xff] %vm666, %v954
        %1100 = vst [vmem:[#allocation2 + $0xa8] sm:$0xff] %v770
        %1101 = vst [vmem:[#allocation2 + $0xb0] sm:$0xff] %v772
        %1102 = vst.msk [vmem:[#allocation2 + $0xb8] sm:$0xff] %vm666, %v959
        %1103 = vst [vmem:[#allocation2 + $0xc0] sm:$0xff] %v774
        %1104 = vst [vmem:[#allocation2 + $0xc8] sm:$0xff] %v776
        %1105 = vst.msk [vmem:[#allocation2 + $0xd0] sm:$0xff] %vm666, %v962
        %1106 = vst [vmem:[#allocation2 + $0xd8] sm:$0xff] %v780
        %1107 = vst [vmem:[#allocation2 + $0xe0] sm:$0xff] %v782
        %1108 = vst.msk [vmem:[#allocation2 + $0xe8] sm:$0xff] %vm666, %v967
        %1109 = vst [vmem:[#allocation2 + $0xf0] sm:$0xff] %v784
        %1110 = vst [vmem:[#allocation2 + $0xf8] sm:$0xff] %v786
        %1111 = vst.msk [vmem:[#allocation2 + $0x100] sm:$0xff] %vm666, %v970
        %1112 = vst [vmem:[#allocation2 + $0x108] sm:$0xff] %v790
        %1113 = vst [vmem:[#allocation2 + $0x110] sm:$0xff] %v792
        %1114 = vst.msk [vmem:[#allocation2 + $0x118] sm:$0xff] %vm666, %v975
        %1115 = vst [vmem:[#allocation2 + $0x120] sm:$0xff] %v794
        %1116 = vst [vmem:[#allocation2 + $0x128] sm:$0xff] %v796
        %1117 = vst.msk [vmem:[#allocation2 + $0x130] sm:$0xff] %vm666, %v978
        %1118 = vst [vmem:[#allocation2 + $0x138] sm:$0xff] %v800
        %1119 = vst [vmem:[#allocation2 + $0x140] sm:$0xff] %v802
        %1120 = vst.msk [vmem:[#allocation2 + $0x148] sm:$0xff] %vm666, %v983
        %1121 = vst [vmem:[#allocation2 + $0x150] sm:$0xff] %v804
        %1122 = vst [vmem:[#allocation2 + $0x158] sm:$0xff] %v806
        %1123 = vst.msk [vmem:[#allocation2 + $0x160] sm:$0xff] %vm666, %v986
        %1124 = vst [vmem:[#allocation2 + $0x168] sm:$0xff] %v810
        %1125 = vst [vmem:[#allocation2 + $0x170] sm:$0xff] %v812
        %1126 = vst.msk [vmem:[#allocation2 + $0x178] sm:$0xff] %vm666, %v991
        %1127 = vst [vmem:[#allocation2 + $0x180] sm:$0xff] %v814
        %1128 = vst [vmem:[#allocation2 + $0x188] sm:$0xff] %v816
        %1129 = vst.msk [vmem:[#allocation2 + $0x190] sm:$0xff] %vm666, %v994
        %1130 = vst [vmem:[#allocation2 + $0x198] sm:$0xff] %v820
        %1131 = vst [vmem:[#allocation2 + $0x1a0] sm:$0xff] %v822
        %1132 = vst.msk [vmem:[#allocation2 + $0x1a8] sm:$0xff] %vm666, %v999
        %1133 = vst [vmem:[#allocation2 + $0x1b0] sm:$0xff] %v824
        %1134 = vst [vmem:[#allocation2 + $0x1b8] sm:$0xff] %v826
        %1135 = vst.msk [vmem:[#allocation2 + $0x1c0] sm:$0xff] %vm666, %v1002
        %1136 = vst [vmem:[#allocation2 + $0x1c8] sm:$0xff] %v830
        %1137 = vst [vmem:[#allocation2 + $0x1d0] sm:$0xff] %v832
        %1138 = vst.msk [vmem:[#allocation2 + $0x1d8] sm:$0xff] %vm666, %v1007
        %1139 = vst [vmem:[#allocation2 + $0x1e0] sm:$0xff] %v834
        %1140 = vst [vmem:[#allocation2 + $0x1e8] sm:$0xff] %v836
        %1141 = vst.msk [vmem:[#allocation2 + $0x1f0] sm:$0xff] %vm666, %v1010
        %1142 = vst [vmem:[#allocation2 + $0x1f8] sm:$0xff] %v840
        %1143 = vst [vmem:[#allocation2 + $0x200] sm:$0xff] %v842
        %1144 = vst.msk [vmem:[#allocation2 + $0x208] sm:$0xff] %vm666, %v1015
        %1145 = vst [vmem:[#allocation2 + $0x210] sm:$0xff] %v844
        %1146 = vst [vmem:[#allocation2 + $0x218] sm:$0xff] %v846
        %1147 = vst.msk [vmem:[#allocation2 + $0x220] sm:$0xff] %vm666, %v1018
        %1148 = vst [vmem:[#allocation2 + $0x228] sm:$0xff] %v850
        %1149 = vst [vmem:[#allocation2 + $0x230] sm:$0xff] %v852
        %1150 = vst.msk [vmem:[#allocation2 + $0x238] sm:$0xff] %vm666, %v1023
        %1151 = vst [vmem:[#allocation2 + $0x240] sm:$0xff] %v854
        %1152 = vst [vmem:[#allocation2 + $0x248] sm:$0xff] %v856
        %1153 = vst.msk [vmem:[#allocation2 + $0x250] sm:$0xff] %vm666, %v1026
        %1154 = vst [vmem:[#allocation2 + $0x258] sm:$0xff] %v860
        %1155 = vst [vmem:[#allocation2 + $0x260] sm:$0xff] %v862
        %1156 = vst.msk [vmem:[#allocation2 + $0x268] sm:$0xff] %vm666, %v1031
        %1157 = vst [vmem:[#allocation2 + $0x270] sm:$0xff] %v864
        %1158 = vst [vmem:[#allocation2 + $0x278] sm:$0xff] %v866
        %1159 = vst.msk [vmem:[#allocation2 + $0x280] sm:$0xff] %vm666, %v1034
        %1160 = vst [vmem:[#allocation2 + $0x288] sm:$0xff] %v870
        %1161 = vst [vmem:[#allocation2 + $0x290] sm:$0xff] %v872
        %1162 = vst.msk [vmem:[#allocation2 + $0x298] sm:$0xff] %vm666, %v1039
        %1163 = vst [vmem:[#allocation2 + $0x2a0] sm:$0xff] %v874
        %1164 = vst [vmem:[#allocation2 + $0x2a8] sm:$0xff] %v876
        %1165 = vst.msk [vmem:[#allocation2 + $0x2b0] sm:$0xff] %vm666, %v1042
        %1166 = vst [vmem:[#allocation2 + $0x2b8] sm:$0xff] %v880
        %1167 = vst [vmem:[#allocation2 + $0x2c0] sm:$0xff] %v882
        %1168 = vst.msk [vmem:[#allocation2 + $0x2c8] sm:$0xff] %vm666, %v1047
        %1169 = vst [vmem:[#allocation2 + $0x2d0] sm:$0xff] %v884
        %1170 = vst [vmem:[#allocation2 + $0x2d8] sm:$0xff] %v886
        %1171 = vst.msk [vmem:[#allocation2 + $0x2e0] sm:$0xff] %vm666, %v1050
        %1172 = vst [vmem:[#allocation2 + $0x2e8] sm:$0xff] %v890
        %1173 = vst [vmem:[#allocation2 + $0x2f0] sm:$0xff] %v892
        %1174 = vst.msk [vmem:[#allocation2 + $0x2f8] sm:$0xff] %vm666, %v1055
        %1175 = vst [vmem:[#allocation2 + $0x300] sm:$0xff] %v894
        %1176 = vst [vmem:[#allocation2 + $0x308] sm:$0xff] %v896
        %1177 = vst.msk [vmem:[#allocation2 + $0x310] sm:$0xff] %vm666, %v1058
        %1178 = vst [vmem:[#allocation2 + $0x318] sm:$0xff] %v900
        %1179 = vst [vmem:[#allocation2 + $0x320] sm:$0xff] %v902
        %1180 = vst.msk [vmem:[#allocation2 + $0x328] sm:$0xff] %vm666, %v1063
        %1181 = vst [vmem:[#allocation2 + $0x330] sm:$0xff] %v904
        %1182 = vst [vmem:[#allocation2 + $0x338] sm:$0xff] %v906
        %1183 = vst.msk [vmem:[#allocation2 + $0x340] sm:$0xff] %vm666, %v1066
        %v1184 = vlaneseq
        %v1185 = vshrl.u32 %v1184, 7
        %v1186 = vadd.s32 %v1185, 8
        %v1187 = vadd.s32 %v1185, 16
        %v1188 = vadd.s32 %v1185, 24
        %v1189 = vadd.s32 %v1185, 32
        %v1190 = vadd.s32 %v1185, 40
        %v1191 = vadd.s32 %v1185, 48
        %v1192 = vadd.s32 %v1185, 56
        %v1193 = vadd.s32 %v1185, 64
        %v1194 = vadd.s32 %v1185, 72
        %v1195 = vadd.s32 %v1185, 80
        %v1196 = vadd.s32 %v1185, 88
        %v1197 = vadd.s32 %v1185, 96
        %v1198 = vadd.s32 %v1185, 104
        %v1199 = vadd.s32 %v1185, 112
        %v1200 = vadd.s32 %v1185, 120
        %v1201 = vadd.s32 %v1185, 128
        %v1202 = vadd.s32 %v1185, 136
        %v1203 = vadd.s32 %v1185, 144
        %v1204 = vadd.s32 %v1185, 152
        %v1205 = vadd.s32 %v1185, 160
        %v1206 = vadd.s32 %v1185, 168
        %v1207 = vadd.s32 %v1185, 176
        %v1208 = vadd.s32 %v1185, 184
        %v1209 = vadd.s32 %v1185, 192
        %v1210 = vadd.s32 %v1185, 200
        %v1211 = vadd.s32 %v1185, 208
        %v1212 = vadd.s32 %v1185, 216
        %v1213 = vadd.s32 %v1185, 224
        %v1214 = vadd.s32 %v1185, 232
        %v1215 = vadd.s32 %v1185, 240
        %v1216 = vadd.s32 %v1185, 248
        %vm1217 = vcmp.lt.s32.totalorder %v1185, 0
        %v1218 = vsub.s32 0, %v1185
        %v1219 = vsel %vm1217, %v1218, %v1185
        %v1220 = vshrl.u32 %v1219, 4
        %v1221 = vand.u32 %v1219, 15
        %v1222 = vsub.s32 0, %v1221
        %v1223 = vsel %vm1217, %v1222, %v1221
        %vm1224 = vcmp.lt.s32.totalorder %v1186, 0
        %v1225 = vsub.s32 0, %v1186
        %v1226 = vsel %vm1224, %v1225, %v1186
        %v1227 = vshrl.u32 %v1226, 4
        %v1228 = vand.u32 %v1226, 15
        %v1229 = vsub.s32 0, %v1228
        %v1230 = vsel %vm1224, %v1229, %v1228
        %vm1231 = vcmp.lt.s32.totalorder %v1187, 0
        %v1232 = vsub.s32 0, %v1187
        %v1233 = vsel %vm1231, %v1232, %v1187
        %v1234 = vshrl.u32 %v1233, 4
        %v1235 = vand.u32 %v1233, 15
        %v1236 = vsub.s32 0, %v1235
        %v1237 = vsel %vm1231, %v1236, %v1235
        %vm1238 = vcmp.lt.s32.totalorder %v1188, 0
        %v1239 = vsub.s32 0, %v1188
        %v1240 = vsel %vm1238, %v1239, %v1188
        %v1241 = vshrl.u32 %v1240, 4
        %v1242 = vand.u32 %v1240, 15
        %v1243 = vsub.s32 0, %v1242
        %v1244 = vsel %vm1238, %v1243, %v1242
        %vm1245 = vcmp.lt.s32.totalorder %v1189, 0
        %v1246 = vsub.s32 0, %v1189
        %v1247 = vsel %vm1245, %v1246, %v1189
        %v1248 = vshrl.u32 %v1247, 4
        %v1249 = vand.u32 %v1247, 15
        %v1250 = vsub.s32 0, %v1249
        %v1251 = vsel %vm1245, %v1250, %v1249
        %vm1252 = vcmp.lt.s32.totalorder %v1190, 0
        %v1253 = vsub.s32 0, %v1190
        %v1254 = vsel %vm1252, %v1253, %v1190
        %v1255 = vshrl.u32 %v1254, 4
        %v1256 = vand.u32 %v1254, 15
        %v1257 = vsub.s32 0, %v1256
        %v1258 = vsel %vm1252, %v1257, %v1256
        %vm1259 = vcmp.lt.s32.totalorder %v1191, 0
        %v1260 = vsub.s32 0, %v1191
        %v1261 = vsel %vm1259, %v1260, %v1191
        %v1262 = vshrl.u32 %v1261, 4
        %v1263 = vand.u32 %v1261, 15
        %v1264 = vsub.s32 0, %v1263
        %v1265 = vsel %vm1259, %v1264, %v1263
        %vm1266 = vcmp.lt.s32.totalorder %v1192, 0
        %v1267 = vsub.s32 0, %v1192
        %v1268 = vsel %vm1266, %v1267, %v1192
        %v1269 = vshrl.u32 %v1268, 4
        %v1270 = vand.u32 %v1268, 15
        %v1271 = vsub.s32 0, %v1270
        %v1272 = vsel %vm1266, %v1271, %v1270
        %vm1273 = vcmp.lt.s32.totalorder %v1193, 0
        %v1274 = vsub.s32 0, %v1193
        %v1275 = vsel %vm1273, %v1274, %v1193
        %v1276 = vshrl.u32 %v1275, 4
        %v1277 = vand.u32 %v1275, 15
        %v1278 = vsub.s32 0, %v1277
        %v1279 = vsel %vm1273, %v1278, %v1277
        %vm1280 = vcmp.lt.s32.totalorder %v1194, 0
        %v1281 = vsub.s32 0, %v1194
        %v1282 = vsel %vm1280, %v1281, %v1194
        %v1283 = vshrl.u32 %v1282, 4
        %v1284 = vand.u32 %v1282, 15
        %v1285 = vsub.s32 0, %v1284
        %v1286 = vsel %vm1280, %v1285, %v1284
        %vm1287 = vcmp.lt.s32.totalorder %v1195, 0
        %v1288 = vsub.s32 0, %v1195
        %v1289 = vsel %vm1287, %v1288, %v1195
        %v1290 = vshrl.u32 %v1289, 4
        %v1291 = vand.u32 %v1289, 15
        %v1292 = vsub.s32 0, %v1291
        %v1293 = vsel %vm1287, %v1292, %v1291
        %vm1294 = vcmp.lt.s32.totalorder %v1196, 0
        %v1295 = vsub.s32 0, %v1196
        %v1296 = vsel %vm1294, %v1295, %v1196
        %v1297 = vshrl.u32 %v1296, 4
        %v1298 = vand.u32 %v1296, 15
        %v1299 = vsub.s32 0, %v1298
        %v1300 = vsel %vm1294, %v1299, %v1298
        %vm1301 = vcmp.lt.s32.totalorder %v1197, 0
        %v1302 = vsub.s32 0, %v1197
        %v1303 = vsel %vm1301, %v1302, %v1197
        %v1304 = vshrl.u32 %v1303, 4
        %v1305 = vand.u32 %v1303, 15
        %v1306 = vsub.s32 0, %v1305
        %v1307 = vsel %vm1301, %v1306, %v1305
        %vm1308 = vcmp.lt.s32.totalorder %v1198, 0
        %v1309 = vsub.s32 0, %v1198
        %v1310 = vsel %vm1308, %v1309, %v1198
        %v1311 = vshrl.u32 %v1310, 4
        %v1312 = vand.u32 %v1310, 15
        %v1313 = vsub.s32 0, %v1312
        %v1314 = vsel %vm1308, %v1313, %v1312
        %vm1315 = vcmp.lt.s32.totalorder %v1199, 0
        %v1316 = vsub.s32 0, %v1199
        %v1317 = vsel %vm1315, %v1316, %v1199
        %v1318 = vshrl.u32 %v1317, 4
        %v1319 = vand.u32 %v1317, 15
        %v1320 = vsub.s32 0, %v1319
        %v1321 = vsel %vm1315, %v1320, %v1319
        %vm1322 = vcmp.lt.s32.totalorder %v1200, 0
        %v1323 = vsub.s32 0, %v1200
        %v1324 = vsel %vm1322, %v1323, %v1200
        %v1325 = vshrl.u32 %v1324, 4
        %v1326 = vand.u32 %v1324, 15
        %v1327 = vsub.s32 0, %v1326
        %v1328 = vsel %vm1322, %v1327, %v1326
        %vm1329 = vcmp.lt.s32.totalorder %v1201, 0
        %v1330 = vsub.s32 0, %v1201
        %v1331 = vsel %vm1329, %v1330, %v1201
        %v1332 = vshrl.u32 %v1331, 4
        %v1333 = vand.u32 %v1331, 15
        %v1334 = vsub.s32 0, %v1333
        %v1335 = vsel %vm1329, %v1334, %v1333
        %vm1336 = vcmp.lt.s32.totalorder %v1202, 0
        %v1337 = vsub.s32 0, %v1202
        %v1338 = vsel %vm1336, %v1337, %v1202
        %v1339 = vshrl.u32 %v1338, 4
        %v1340 = vand.u32 %v1338, 15
        %v1341 = vsub.s32 0, %v1340
        %v1342 = vsel %vm1336, %v1341, %v1340
        %vm1343 = vcmp.lt.s32.totalorder %v1203, 0
        %v1344 = vsub.s32 0, %v1203
        %v1345 = vsel %vm1343, %v1344, %v1203
        %v1346 = vshrl.u32 %v1345, 4
        %v1347 = vand.u32 %v1345, 15
        %v1348 = vsub.s32 0, %v1347
        %v1349 = vsel %vm1343, %v1348, %v1347
        %vm1350 = vcmp.lt.s32.totalorder %v1204, 0
        %v1351 = vsub.s32 0, %v1204
        %v1352 = vsel %vm1350, %v1351, %v1204
        %v1353 = vshrl.u32 %v1352, 4
        %v1354 = vand.u32 %v1352, 15
        %v1355 = vsub.s32 0, %v1354
        %v1356 = vsel %vm1350, %v1355, %v1354
        %vm1357 = vcmp.lt.s32.totalorder %v1205, 0
        %v1358 = vsub.s32 0, %v1205
        %v1359 = vsel %vm1357, %v1358, %v1205
        %v1360 = vshrl.u32 %v1359, 4
        %v1361 = vand.u32 %v1359, 15
        %v1362 = vsub.s32 0, %v1361
        %v1363 = vsel %vm1357, %v1362, %v1361
        %vm1364 = vcmp.lt.s32.totalorder %v1206, 0
        %v1365 = vsub.s32 0, %v1206
        %v1366 = vsel %vm1364, %v1365, %v1206
        %v1367 = vshrl.u32 %v1366, 4
        %v1368 = vand.u32 %v1366, 15
        %v1369 = vsub.s32 0, %v1368
        %v1370 = vsel %vm1364, %v1369, %v1368
        %vm1371 = vcmp.lt.s32.totalorder %v1207, 0
        %v1372 = vsub.s32 0, %v1207
        %v1373 = vsel %vm1371, %v1372, %v1207
        %v1374 = vshrl.u32 %v1373, 4
        %v1375 = vand.u32 %v1373, 15
        %v1376 = vsub.s32 0, %v1375
        %v1377 = vsel %vm1371, %v1376, %v1375
        %vm1378 = vcmp.lt.s32.totalorder %v1208, 0
        %v1379 = vsub.s32 0, %v1208
        %v1380 = vsel %vm1378, %v1379, %v1208
        %v1381 = vshrl.u32 %v1380, 4
        %v1382 = vand.u32 %v1380, 15
        %v1383 = vsub.s32 0, %v1382
        %v1384 = vsel %vm1378, %v1383, %v1382
        %vm1385 = vcmp.lt.s32.totalorder %v1209, 0
        %v1386 = vsub.s32 0, %v1209
        %v1387 = vsel %vm1385, %v1386, %v1209
        %v1388 = vshrl.u32 %v1387, 4
        %v1389 = vand.u32 %v1387, 15
        %v1390 = vsub.s32 0, %v1389
        %v1391 = vsel %vm1385, %v1390, %v1389
        %vm1392 = vcmp.lt.s32.totalorder %v1210, 0
        %v1393 = vsub.s32 0, %v1210
        %v1394 = vsel %vm1392, %v1393, %v1210
        %v1395 = vshrl.u32 %v1394, 4
        %v1396 = vand.u32 %v1394, 15
        %v1397 = vsub.s32 0, %v1396
        %v1398 = vsel %vm1392, %v1397, %v1396
        %vm1399 = vcmp.lt.s32.totalorder %v1211, 0
        %v1400 = vsub.s32 0, %v1211
        %v1401 = vsel %vm1399, %v1400, %v1211
        %v1402 = vshrl.u32 %v1401, 4
        %v1403 = vand.u32 %v1401, 15
        %v1404 = vsub.s32 0, %v1403
        %v1405 = vsel %vm1399, %v1404, %v1403
        %vm1406 = vcmp.lt.s32.totalorder %v1212, 0
        %v1407 = vsub.s32 0, %v1212
        %v1408 = vsel %vm1406, %v1407, %v1212
        %v1409 = vshrl.u32 %v1408, 4
        %v1410 = vand.u32 %v1408, 15
        %v1411 = vsub.s32 0, %v1410
        %v1412 = vsel %vm1406, %v1411, %v1410
        %vm1413 = vcmp.lt.s32.totalorder %v1213, 0
        %v1414 = vsub.s32 0, %v1213
        %v1415 = vsel %vm1413, %v1414, %v1213
        %v1416 = vshrl.u32 %v1415, 4
        %v1417 = vand.u32 %v1415, 15
        %v1418 = vsub.s32 0, %v1417
        %v1419 = vsel %vm1413, %v1418, %v1417
        %vm1420 = vcmp.lt.s32.totalorder %v1214, 0
        %v1421 = vsub.s32 0, %v1214
        %v1422 = vsel %vm1420, %v1421, %v1214
        %v1423 = vshrl.u32 %v1422, 4
        %v1424 = vand.u32 %v1422, 15
        %v1425 = vsub.s32 0, %v1424
        %v1426 = vsel %vm1420, %v1425, %v1424
        %vm1427 = vcmp.lt.s32.totalorder %v1215, 0
        %v1428 = vsub.s32 0, %v1215
        %v1429 = vsel %vm1427, %v1428, %v1215
        %v1430 = vshrl.u32 %v1429, 4
        %v1431 = vand.u32 %v1429, 15
        %v1432 = vsub.s32 0, %v1431
        %v1433 = vsel %vm1427, %v1432, %v1431
        %vm1434 = vcmp.lt.s32.totalorder %v1216, 0
        %v1435 = vsub.s32 0, %v1216
        %v1436 = vsel %vm1434, %v1435, %v1216
        %v1437 = vshrl.u32 %v1436, 4
        %v1438 = vand.u32 %v1436, 15
        %v1439 = vsub.s32 0, %v1438
        %v1440 = vsel %vm1434, %v1439, %v1438
        %vm1441 = vcmp.ne.s32.totalorder %v1223, 0
        %vm1442 = vcmp.ne.s32.totalorder %v1230, 0
        %vm1443 = vcmp.ne.s32.totalorder %v1237, 0
        %vm1444 = vcmp.ne.s32.totalorder %v1244, 0
        %vm1445 = vcmp.ne.s32.totalorder %v1251, 0
        %vm1446 = vcmp.ne.s32.totalorder %v1258, 0
        %vm1447 = vcmp.ne.s32.totalorder %v1265, 0
        %vm1448 = vcmp.ne.s32.totalorder %v1272, 0
        %vm1449 = vcmp.ne.s32.totalorder %v1279, 0
        %vm1450 = vcmp.ne.s32.totalorder %v1286, 0
        %vm1451 = vcmp.ne.s32.totalorder %v1293, 0
        %vm1452 = vcmp.ne.s32.totalorder %v1300, 0
        %vm1453 = vcmp.ne.s32.totalorder %v1307, 0
        %vm1454 = vcmp.ne.s32.totalorder %v1314, 0
        %vm1455 = vcmp.ne.s32.totalorder %v1321, 0
        %vm1456 = vcmp.ne.s32.totalorder %v1328, 0
        %vm1457 = vcmp.ne.s32.totalorder %v1335, 0
        %vm1458 = vcmp.ne.s32.totalorder %v1342, 0
        %vm1459 = vcmp.ne.s32.totalorder %v1349, 0
        %vm1460 = vcmp.ne.s32.totalorder %v1356, 0
        %vm1461 = vcmp.ne.s32.totalorder %v1363, 0
        %vm1462 = vcmp.ne.s32.totalorder %v1370, 0
        %vm1463 = vcmp.ne.s32.totalorder %v1377, 0
        %vm1464 = vcmp.ne.s32.totalorder %v1384, 0
        %vm1465 = vcmp.ne.s32.totalorder %v1391, 0
        %vm1466 = vcmp.ne.s32.totalorder %v1398, 0
        %vm1467 = vcmp.ne.s32.totalorder %v1405, 0
        %vm1468 = vcmp.ne.s32.totalorder %v1412, 0
        %vm1469 = vcmp.ne.s32.totalorder %v1419, 0
        %vm1470 = vcmp.ne.s32.totalorder %v1426, 0
        %vm1471 = vcmp.ne.s32.totalorder %v1433, 0
        %vm1472 = vcmp.ne.s32.totalorder %v1440, 0
        %vm1473 = vcmp.lt.s32.totalorder %v1223, 0
        %vm1474 = vcmp.lt.s32.totalorder %v1230, 0
        %vm1475 = vcmp.lt.s32.totalorder %v1237, 0
        %vm1476 = vcmp.lt.s32.totalorder %v1244, 0
        %vm1477 = vcmp.lt.s32.totalorder %v1251, 0
        %vm1478 = vcmp.lt.s32.totalorder %v1258, 0
        %vm1479 = vcmp.lt.s32.totalorder %v1265, 0
        %vm1480 = vcmp.lt.s32.totalorder %v1272, 0
        %vm1481 = vcmp.lt.s32.totalorder %v1279, 0
        %vm1482 = vcmp.lt.s32.totalorder %v1286, 0
        %vm1483 = vcmp.lt.s32.totalorder %v1293, 0
        %vm1484 = vcmp.lt.s32.totalorder %v1300, 0
        %vm1485 = vcmp.lt.s32.totalorder %v1307, 0
        %vm1486 = vcmp.lt.s32.totalorder %v1314, 0
        %vm1487 = vcmp.lt.s32.totalorder %v1321, 0
        %vm1488 = vcmp.lt.s32.totalorder %v1328, 0
        %vm1489 = vcmp.lt.s32.totalorder %v1335, 0
        %vm1490 = vcmp.lt.s32.totalorder %v1342, 0
        %vm1491 = vcmp.lt.s32.totalorder %v1349, 0
        %vm1492 = vcmp.lt.s32.totalorder %v1356, 0
        %vm1493 = vcmp.lt.s32.totalorder %v1363, 0
        %vm1494 = vcmp.lt.s32.totalorder %v1370, 0
        %vm1495 = vcmp.lt.s32.totalorder %v1377, 0
        %vm1496 = vcmp.lt.s32.totalorder %v1384, 0
        %vm1497 = vcmp.lt.s32.totalorder %v1391, 0
        %vm1498 = vcmp.lt.s32.totalorder %v1398, 0
        %vm1499 = vcmp.lt.s32.totalorder %v1405, 0
        %vm1500 = vcmp.lt.s32.totalorder %v1412, 0
        %vm1501 = vcmp.lt.s32.totalorder %v1419, 0
        %vm1502 = vcmp.lt.s32.totalorder %v1426, 0
        %vm1503 = vcmp.lt.s32.totalorder %v1433, 0
        %vm1504 = vcmp.lt.s32.totalorder %v1440, 0
        %vm1505 = vmand %vm1473, %vm1441
        %vm1506 = vmand %vm1474, %vm1442
        %vm1507 = vmand %vm1475, %vm1443
        %vm1508 = vmand %vm1476, %vm1444
        %vm1509 = vmand %vm1477, %vm1445
        %vm1510 = vmand %vm1478, %vm1446
        %vm1511 = vmand %vm1479, %vm1447
        %vm1512 = vmand %vm1480, %vm1448
        %vm1513 = vmand %vm1481, %vm1449
        %vm1514 = vmand %vm1482, %vm1450
        %vm1515 = vmand %vm1483, %vm1451
        %vm1516 = vmand %vm1484, %vm1452
        %vm1517 = vmand %vm1485, %vm1453
        %vm1518 = vmand %vm1486, %vm1454
        %vm1519 = vmand %vm1487, %vm1455
        %vm1520 = vmand %vm1488, %vm1456
        %vm1521 = vmand %vm1489, %vm1457
        %vm1522 = vmand %vm1490, %vm1458
        %vm1523 = vmand %vm1491, %vm1459
        %vm1524 = vmand %vm1492, %vm1460
        %vm1525 = vmand %vm1493, %vm1461
        %vm1526 = vmand %vm1494, %vm1462
        %vm1527 = vmand %vm1495, %vm1463
        %vm1528 = vmand %vm1496, %vm1464
        %vm1529 = vmand %vm1497, %vm1465
        %vm1530 = vmand %vm1498, %vm1466
        %vm1531 = vmand %vm1499, %vm1467
        %vm1532 = vmand %vm1500, %vm1468
        %vm1533 = vmand %vm1501, %vm1469
        %vm1534 = vmand %vm1502, %vm1470
        %vm1535 = vmand %vm1503, %vm1471
        %vm1536 = vmand %vm1504, %vm1472
        %v1537 = vadd.s32 %v1223, 16
        %v1538 = vadd.s32 %v1230, 16
        %v1539 = vadd.s32 %v1237, 16
        %v1540 = vadd.s32 %v1244, 16
        %v1541 = vadd.s32 %v1251, 16
        %v1542 = vadd.s32 %v1258, 16
        %v1543 = vadd.s32 %v1265, 16
        %v1544 = vadd.s32 %v1272, 16
        %v1545 = vadd.s32 %v1279, 16
        %v1546 = vadd.s32 %v1286, 16
        %v1547 = vadd.s32 %v1293, 16
        %v1548 = vadd.s32 %v1300, 16
        %v1549 = vadd.s32 %v1307, 16
        %v1550 = vadd.s32 %v1314, 16
        %v1551 = vadd.s32 %v1321, 16
        %v1552 = vadd.s32 %v1328, 16
        %v1553 = vadd.s32 %v1335, 16
        %v1554 = vadd.s32 %v1342, 16
        %v1555 = vadd.s32 %v1349, 16
        %v1556 = vadd.s32 %v1356, 16
        %v1557 = vadd.s32 %v1363, 16
        %v1558 = vadd.s32 %v1370, 16
        %v1559 = vadd.s32 %v1377, 16
        %v1560 = vadd.s32 %v1384, 16
        %v1561 = vadd.s32 %v1391, 16
        %v1562 = vadd.s32 %v1398, 16
        %v1563 = vadd.s32 %v1405, 16
        %v1564 = vadd.s32 %v1412, 16
        %v1565 = vadd.s32 %v1419, 16
        %v1566 = vadd.s32 %v1426, 16
        %v1567 = vadd.s32 %v1433, 16
        %v1568 = vadd.s32 %v1440, 16
        %v1569 = vsel %vm1505, %v1537, %v1223
        %v1570 = vsel %vm1506, %v1538, %v1230
        %v1571 = vsel %vm1507, %v1539, %v1237
        %v1572 = vsel %vm1508, %v1540, %v1244
        %v1573 = vsel %vm1509, %v1541, %v1251
        %v1574 = vsel %vm1510, %v1542, %v1258
        %v1575 = vsel %vm1511, %v1543, %v1265
        %v1576 = vsel %vm1512, %v1544, %v1272
        %v1577 = vsel %vm1513, %v1545, %v1279
        %v1578 = vsel %vm1514, %v1546, %v1286
        %v1579 = vsel %vm1515, %v1547, %v1293
        %v1580 = vsel %vm1516, %v1548, %v1300
        %v1581 = vsel %vm1517, %v1549, %v1307
        %v1582 = vsel %vm1518, %v1550, %v1314
        %v1583 = vsel %vm1519, %v1551, %v1321
        %v1584 = vsel %vm1520, %v1552, %v1328
        %v1585 = vsel %vm1521, %v1553, %v1335
        %v1586 = vsel %vm1522, %v1554, %v1342
        %v1587 = vsel %vm1523, %v1555, %v1349
        %v1588 = vsel %vm1524, %v1556, %v1356
        %v1589 = vsel %vm1525, %v1557, %v1363
        %v1590 = vsel %vm1526, %v1558, %v1370
        %v1591 = vsel %vm1527, %v1559, %v1377
        %v1592 = vsel %vm1528, %v1560, %v1384
        %v1593 = vsel %vm1529, %v1561, %v1391
        %v1594 = vsel %vm1530, %v1562, %v1398
        %v1595 = vsel %vm1531, %v1563, %v1405
        %v1596 = vsel %vm1532, %v1564, %v1412
        %v1597 = vsel %vm1533, %v1565, %v1419
        %v1598 = vsel %vm1534, %v1566, %v1426
        %v1599 = vsel %vm1535, %v1567, %v1433
        %v1600 = vsel %vm1536, %v1568, %v1440
        %vm1601 = vcmp.ne.s32.totalorder %v1569, 0
        %vm1602 = vcmp.ne.s32.totalorder %v1570, 0
        %vm1603 = vcmp.ne.s32.totalorder %v1571, 0
        %vm1604 = vcmp.ne.s32.totalorder %v1572, 0
        %vm1605 = vcmp.ne.s32.totalorder %v1573, 0
        %vm1606 = vcmp.ne.s32.totalorder %v1574, 0
        %vm1607 = vcmp.ne.s32.totalorder %v1575, 0
        %vm1608 = vcmp.ne.s32.totalorder %v1576, 0
        %vm1609 = vcmp.ne.s32.totalorder %v1577, 0
        %vm1610 = vcmp.ne.s32.totalorder %v1578, 0
        %vm1611 = vcmp.ne.s32.totalorder %v1579, 0
        %vm1612 = vcmp.ne.s32.totalorder %v1580, 0
        %vm1613 = vcmp.ne.s32.totalorder %v1581, 0
        %vm1614 = vcmp.ne.s32.totalorder %v1582, 0
        %vm1615 = vcmp.ne.s32.totalorder %v1583, 0
        %vm1616 = vcmp.ne.s32.totalorder %v1584, 0
        %vm1617 = vcmp.ne.s32.totalorder %v1585, 0
        %vm1618 = vcmp.ne.s32.totalorder %v1586, 0
        %vm1619 = vcmp.ne.s32.totalorder %v1587, 0
        %vm1620 = vcmp.ne.s32.totalorder %v1588, 0
        %vm1621 = vcmp.ne.s32.totalorder %v1589, 0
        %vm1622 = vcmp.ne.s32.totalorder %v1590, 0
        %vm1623 = vcmp.ne.s32.totalorder %v1591, 0
        %vm1624 = vcmp.ne.s32.totalorder %v1592, 0
        %vm1625 = vcmp.ne.s32.totalorder %v1593, 0
        %vm1626 = vcmp.ne.s32.totalorder %v1594, 0
        %vm1627 = vcmp.ne.s32.totalorder %v1595, 0
        %vm1628 = vcmp.ne.s32.totalorder %v1596, 0
        %vm1629 = vcmp.ne.s32.totalorder %v1597, 0
        %vm1630 = vcmp.ne.s32.totalorder %v1598, 0
        %vm1631 = vcmp.ne.s32.totalorder %v1599, 0
        %vm1632 = vcmp.ne.s32.totalorder %v1600, 0
        %vm1633 = vcmp.ne.s32.totalorder %v1569, 15
        %vm1634 = vcmp.ne.s32.totalorder %v1570, 15
        %vm1635 = vcmp.ne.s32.totalorder %v1571, 15
        %vm1636 = vcmp.ne.s32.totalorder %v1572, 15
        %vm1637 = vcmp.ne.s32.totalorder %v1573, 15
        %vm1638 = vcmp.ne.s32.totalorder %v1574, 15
        %vm1639 = vcmp.ne.s32.totalorder %v1575, 15
        %vm1640 = vcmp.ne.s32.totalorder %v1576, 15
        %vm1641 = vcmp.ne.s32.totalorder %v1577, 15
        %vm1642 = vcmp.ne.s32.totalorder %v1578, 15
        %vm1643 = vcmp.ne.s32.totalorder %v1579, 15
        %vm1644 = vcmp.ne.s32.totalorder %v1580, 15
        %vm1645 = vcmp.ne.s32.totalorder %v1581, 15
        %vm1646 = vcmp.ne.s32.totalorder %v1582, 15
        %vm1647 = vcmp.ne.s32.totalorder %v1583, 15
        %vm1648 = vcmp.ne.s32.totalorder %v1584, 15
        %vm1649 = vcmp.ne.s32.totalorder %v1585, 15
        %vm1650 = vcmp.ne.s32.totalorder %v1586, 15
        %vm1651 = vcmp.ne.s32.totalorder %v1587, 15
        %vm1652 = vcmp.ne.s32.totalorder %v1588, 15
        %vm1653 = vcmp.ne.s32.totalorder %v1589, 15
        %vm1654 = vcmp.ne.s32.totalorder %v1590, 15
        %vm1655 = vcmp.ne.s32.totalorder %v1591, 15
        %vm1656 = vcmp.ne.s32.totalorder %v1592, 15
        %vm1657 = vcmp.ne.s32.totalorder %v1593, 15
        %vm1658 = vcmp.ne.s32.totalorder %v1594, 15
        %vm1659 = vcmp.ne.s32.totalorder %v1595, 15
        %vm1660 = vcmp.ne.s32.totalorder %v1596, 15
        %vm1661 = vcmp.ne.s32.totalorder %v1597, 15
        %vm1662 = vcmp.ne.s32.totalorder %v1598, 15
        %vm1663 = vcmp.ne.s32.totalorder %v1599, 15
        %vm1664 = vcmp.ne.s32.totalorder %v1600, 15
        %v1665 = vld [vmem:[#allocation2 + $0x18] sm:$0xff]
        %v1666 = vld [vmem:[#allocation2 + $0x30] sm:$0xff]
        %v1667 = vld [vmem:[#allocation2 + $0x48] sm:$0xff]
        %v1668 = vld [vmem:[#allocation2 + $0x60] sm:$0xff]
        %v1669 = vld [vmem:[#allocation2 + $0x78] sm:$0xff]
        %v1670 = vld [vmem:[#allocation2 + $0x90] sm:$0xff]
        %v1671 = vld [vmem:[#allocation2 + $0xa8] sm:$0xff]
        %v1672 = vld [vmem:[#allocation2 + $0xc0] sm:$0xff]
        %v1673 = vld [vmem:[#allocation2 + $0xd8] sm:$0xff]
        %v1674 = vld [vmem:[#allocation2 + $0xf0] sm:$0xff]
        %v1675 = vld [vmem:[#allocation2 + $0x108] sm:$0xff]
        %v1676 = vld [vmem:[#allocation2 + $0x120] sm:$0xff]
        %v1677 = vld [vmem:[#allocation2 + $0x138] sm:$0xff]
        %v1678 = vld [vmem:[#allocation2 + $0x150] sm:$0xff]
        %v1679 = vld [vmem:[#allocation2 + $0x168] sm:$0xff]
        %v1680 = vld [vmem:[#allocation2 + $0x180] sm:$0xff]
        %v1681 = vld [vmem:[#allocation2 + $0x198] sm:$0xff]
        %v1682 = vld [vmem:[#allocation2 + $0x1b0] sm:$0xff]
        %v1683 = vld [vmem:[#allocation2 + $0x1c8] sm:$0xff]
        %v1684 = vld [vmem:[#allocation2 + $0x1e0] sm:$0xff]
        %v1685 = vld [vmem:[#allocation2 + $0x1f8] sm:$0xff]
        %v1686 = vld [vmem:[#allocation2 + $0x210] sm:$0xff]
        %v1687 = vld [vmem:[#allocation2 + $0x228] sm:$0xff]
        %v1688 = vld [vmem:[#allocation2 + $0x240] sm:$0xff]
        %v1689 = vld [vmem:[#allocation2 + $0x258] sm:$0xff]
        %v1690 = vld [vmem:[#allocation2 + $0x270] sm:$0xff]
        %v1691 = vld [vmem:[#allocation2 + $0x288] sm:$0xff]
        %v1692 = vld [vmem:[#allocation2 + $0x2a0] sm:$0xff]
        %v1693 = vld [vmem:[#allocation2 + $0x2b8] sm:$0xff]
        %v1694 = vld [vmem:[#allocation2 + $0x2d0] sm:$0xff]
        %v1695 = vld [vmem:[#allocation2 + $0x2e8] sm:$0xff]
        %v1696 = vld [vmem:[#allocation2 + $0x300] sm:$0xff]
        %v1697 = vld [vmem:[#allocation2 + $0x50] sm:$0xff]
        %v1698 = vld [vmem:[#allocation2 + $0x68] sm:$0xff]
        %v1699 = vld [vmem:[#allocation2 + $0x80] sm:$0xff]
        %v1700 = vld [vmem:[#allocation2 + $0x98] sm:$0xff]
        %v1701 = vld [vmem:[#allocation2 + $0xb0] sm:$0xff]
        %v1702 = vld [vmem:[#allocation2 + $0xc8] sm:$0xff]
        %v1703 = vld [vmem:[#allocation2 + $0xe0] sm:$0xff]
        %v1704 = vld [vmem:[#allocation2 + $0xf8] sm:$0xff]
        %v1705 = vld [vmem:[#allocation2 + $0x110] sm:$0xff]
        %v1706 = vld [vmem:[#allocation2 + $0x128] sm:$0xff]
        %v1707 = vld [vmem:[#allocation2 + $0x140] sm:$0xff]
        %v1708 = vld [vmem:[#allocation2 + $0x158] sm:$0xff]
        %v1709 = vld [vmem:[#allocation2 + $0x170] sm:$0xff]
        %v1710 = vld [vmem:[#allocation2 + $0x188] sm:$0xff]
        %v1711 = vld [vmem:[#allocation2 + $0x1a0] sm:$0xff]
        %v1712 = vld [vmem:[#allocation2 + $0x1b8] sm:$0xff]
        %v1713 = vld [vmem:[#allocation2 + $0x1d0] sm:$0xff]
        %v1714 = vld [vmem:[#allocation2 + $0x1e8] sm:$0xff]
        %v1715 = vld [vmem:[#allocation2 + $0x200] sm:$0xff]
        %v1716 = vld [vmem:[#allocation2 + $0x218] sm:$0xff]
        %v1717 = vld [vmem:[#allocation2 + $0x230] sm:$0xff]
        %v1718 = vld [vmem:[#allocation2 + $0x248] sm:$0xff]
        %v1719 = vld [vmem:[#allocation2 + $0x260] sm:$0xff]
        %v1720 = vld [vmem:[#allocation2 + $0x278] sm:$0xff]
        %v1721 = vld [vmem:[#allocation2 + $0x290] sm:$0xff]
        %v1722 = vld [vmem:[#allocation2 + $0x2a8] sm:$0xff]
        %v1723 = vld [vmem:[#allocation2 + $0x2c0] sm:$0xff]
        %v1724 = vld [vmem:[#allocation2 + $0x2d8] sm:$0xff]
        %v1725 = vld [vmem:[#allocation2 + $0x2f0] sm:$0xff]
        %v1726 = vld [vmem:[#allocation2 + $0x308] sm:$0xff]
        %v1727 = vld [vmem:[#allocation2 + $0x320] sm:$0xff]
        %v1728 = vld [vmem:[#allocation2 + $0x338] sm:$0xff]
        %1761 = vrot.lane.b32.xlu0 %v1697, 32
        %v1762 = vpop.permute.xlu0 %1761
        %1763 = vrot.lane.b32.xlu0 %v1698, 32
        %v1764 = vpop.permute.xlu0 %1763
        %1765 = vrot.lane.b32.xlu0 %v1699, 32
        %v1766 = vpop.permute.xlu0 %1765
        %1767 = vrot.lane.b32.xlu0 %v1700, 32
        %v1768 = vpop.permute.xlu0 %1767
        %1769 = vrot.lane.b32.xlu0 %v1701, 32
        %v1770 = vpop.permute.xlu0 %1769
        %1771 = vrot.lane.b32.xlu0 %v1702, 32
        %v1772 = vpop.permute.xlu0 %1771
        %1773 = vrot.lane.b32.xlu0 %v1703, 32
        %v1774 = vpop.permute.xlu0 %1773
        %1775 = vrot.lane.b32.xlu0 %v1704, 32
        %v1776 = vpop.permute.xlu0 %1775
        %1777 = vrot.lane.b32.xlu0 %v1705, 32
        %v1778 = vpop.permute.xlu0 %1777
        %1779 = vrot.lane.b32.xlu0 %v1706, 32
        %v1780 = vpop.permute.xlu0 %1779
        %1781 = vrot.lane.b32.xlu0 %v1707, 32
        %v1782 = vpop.permute.xlu0 %1781
        %1783 = vrot.lane.b32.xlu0 %v1708, 32
        %v1784 = vpop.permute.xlu0 %1783
        %1785 = vrot.lane.b32.xlu0 %v1709, 32
        %v1786 = vpop.permute.xlu0 %1785
        %1787 = vrot.lane.b32.xlu0 %v1710, 32
        %v1788 = vpop.permute.xlu0 %1787
        %1789 = vrot.lane.b32.xlu0 %v1711, 32
        %v1790 = vpop.permute.xlu0 %1789
        %1791 = vrot.lane.b32.xlu0 %v1712, 32
        %v1792 = vpop.permute.xlu0 %1791
        %1793 = vrot.lane.b32.xlu0 %v1713, 32
        %v1794 = vpop.permute.xlu0 %1793
        %1795 = vrot.lane.b32.xlu0 %v1714, 32
        %v1796 = vpop.permute.xlu0 %1795
        %1797 = vrot.lane.b32.xlu0 %v1715, 32
        %v1798 = vpop.permute.xlu0 %1797
        %1799 = vrot.lane.b32.xlu0 %v1716, 32
        %v1800 = vpop.permute.xlu0 %1799
        %1801 = vrot.lane.b32.xlu0 %v1717, 32
        %v1802 = vpop.permute.xlu0 %1801
        %1803 = vrot.lane.b32.xlu0 %v1718, 32
        %v1804 = vpop.permute.xlu0 %1803
        %1805 = vrot.lane.b32.xlu0 %v1719, 32
        %v1806 = vpop.permute.xlu0 %1805
        %1807 = vrot.lane.b32.xlu0 %v1720, 32
        %v1808 = vpop.permute.xlu0 %1807
        %1809 = vrot.lane.b32.xlu0 %v1721, 32
        %v1810 = vpop.permute.xlu0 %1809
        %1811 = vrot.lane.b32.xlu0 %v1722, 32
        %v1812 = vpop.permute.xlu0 %1811
        %1813 = vrot.lane.b32.xlu0 %v1723, 32
        %v1814 = vpop.permute.xlu0 %1813
        %1815 = vrot.lane.b32.xlu0 %v1724, 32
        %v1816 = vpop.permute.xlu0 %1815
        %1817 = vrot.lane.b32.xlu0 %v1725, 32
        %v1818 = vpop.permute.xlu0 %1817
        %1819 = vrot.lane.b32.xlu0 %v1726, 32
        %v1820 = vpop.permute.xlu0 %1819
        %1821 = vrot.lane.b32.xlu0 %v1727, 32
        %v1822 = vpop.permute.xlu0 %1821
        %1823 = vrot.lane.b32.xlu0 %v1728, 32
        %v1824 = vpop.permute.xlu0 %1823
        %v1857 = vadd.f32 %v1665, %v1762
        %v1858 = vadd.f32 %v1666, %v1764
        %v1859 = vadd.f32 %v1667, %v1766
        %v1860 = vadd.f32 %v1668, %v1768
        %v1861 = vadd.f32 %v1669, %v1770
        %v1862 = vadd.f32 %v1670, %v1772
        %v1863 = vadd.f32 %v1671, %v1774
        %v1864 = vadd.f32 %v1672, %v1776
        %v1865 = vadd.f32 %v1673, %v1778
        %v1866 = vadd.f32 %v1674, %v1780
        %v1867 = vadd.f32 %v1675, %v1782
        %v1868 = vadd.f32 %v1676, %v1784
        %v1869 = vadd.f32 %v1677, %v1786
        %v1870 = vadd.f32 %v1678, %v1788
        %v1871 = vadd.f32 %v1679, %v1790
        %v1872 = vadd.f32 %v1680, %v1792
        %v1873 = vadd.f32 %v1681, %v1794
        %v1874 = vadd.f32 %v1682, %v1796
        %v1875 = vadd.f32 %v1683, %v1798
        %v1876 = vadd.f32 %v1684, %v1800
        %v1877 = vadd.f32 %v1685, %v1802
        %v1878 = vadd.f32 %v1686, %v1804
        %v1879 = vadd.f32 %v1687, %v1806
        %v1880 = vadd.f32 %v1688, %v1808
        %v1881 = vadd.f32 %v1689, %v1810
        %v1882 = vadd.f32 %v1690, %v1812
        %v1883 = vadd.f32 %v1691, %v1814
        %v1884 = vadd.f32 %v1692, %v1816
        %v1885 = vadd.f32 %v1693, %v1818
        %v1886 = vadd.f32 %v1694, %v1820
        %v1887 = vadd.f32 %v1695, %v1822
        %v1888 = vadd.f32 %v1696, %v1824
        %v1889 = vld [vmem:[#allocation2 + $0x350] sm:$0xff]
        %v1890 = vld [vmem:[#allocation2 + $0x368] sm:$0xff]
        %1893 = vrot.lane.b32.xlu0 %v1699, 64
        %v1894 = vpop.permute.xlu0 %1893
        %1895 = vrot.lane.b32.xlu0 %v1700, 64
        %v1896 = vpop.permute.xlu0 %1895
        %1897 = vrot.lane.b32.xlu0 %v1701, 64
        %v1898 = vpop.permute.xlu0 %1897
        %1899 = vrot.lane.b32.xlu0 %v1702, 64
        %v1900 = vpop.permute.xlu0 %1899
        %1901 = vrot.lane.b32.xlu0 %v1703, 64
        %v1902 = vpop.permute.xlu0 %1901
        %1903 = vrot.lane.b32.xlu0 %v1704, 64
        %v1904 = vpop.permute.xlu0 %1903
        %1905 = vrot.lane.b32.xlu0 %v1705, 64
        %v1906 = vpop.permute.xlu0 %1905
        %1907 = vrot.lane.b32.xlu0 %v1706, 64
        %v1908 = vpop.permute.xlu0 %1907
        %1909 = vrot.lane.b32.xlu0 %v1707, 64
        %v1910 = vpop.permute.xlu0 %1909
        %1911 = vrot.lane.b32.xlu0 %v1708, 64
        %v1912 = vpop.permute.xlu0 %1911
        %1913 = vrot.lane.b32.xlu0 %v1709, 64
        %v1914 = vpop.permute.xlu0 %1913
        %1915 = vrot.lane.b32.xlu0 %v1710, 64
        %v1916 = vpop.permute.xlu0 %1915
        %1917 = vrot.lane.b32.xlu0 %v1711, 64
        %v1918 = vpop.permute.xlu0 %1917
        %1919 = vrot.lane.b32.xlu0 %v1712, 64
        %v1920 = vpop.permute.xlu0 %1919
        %1921 = vrot.lane.b32.xlu0 %v1713, 64
        %v1922 = vpop.permute.xlu0 %1921
        %1923 = vrot.lane.b32.xlu0 %v1714, 64
        %v1924 = vpop.permute.xlu0 %1923
        %1925 = vrot.lane.b32.xlu0 %v1715, 64
        %v1926 = vpop.permute.xlu0 %1925
        %1927 = vrot.lane.b32.xlu0 %v1716, 64
        %v1928 = vpop.permute.xlu0 %1927
        %1929 = vrot.lane.b32.xlu0 %v1717, 64
        %v1930 = vpop.permute.xlu0 %1929
        %1931 = vrot.lane.b32.xlu0 %v1718, 64
        %v1932 = vpop.permute.xlu0 %1931
        %1933 = vrot.lane.b32.xlu0 %v1719, 64
        %v1934 = vpop.permute.xlu0 %1933
        %1935 = vrot.lane.b32.xlu0 %v1720, 64
        %v1936 = vpop.permute.xlu0 %1935
        %1937 = vrot.lane.b32.xlu0 %v1721, 64
        %v1938 = vpop.permute.xlu0 %1937
        %1939 = vrot.lane.b32.xlu0 %v1722, 64
        %v1940 = vpop.permute.xlu0 %1939
        %1941 = vrot.lane.b32.xlu0 %v1723, 64
        %v1942 = vpop.permute.xlu0 %1941
        %1943 = vrot.lane.b32.xlu0 %v1724, 64
        %v1944 = vpop.permute.xlu0 %1943
        %1945 = vrot.lane.b32.xlu0 %v1725, 64
        %v1946 = vpop.permute.xlu0 %1945
        %1947 = vrot.lane.b32.xlu0 %v1726, 64
        %v1948 = vpop.permute.xlu0 %1947
        %1949 = vrot.lane.b32.xlu0 %v1727, 64
        %v1950 = vpop.permute.xlu0 %1949
        %1951 = vrot.lane.b32.xlu0 %v1728, 64
        %v1952 = vpop.permute.xlu0 %1951
        %1953 = vrot.lane.b32.xlu0 %v1889, 64
        %v1954 = vpop.permute.xlu0 %1953
        %1955 = vrot.lane.b32.xlu0 %v1890, 64
        %v1956 = vpop.permute.xlu0 %1955
        %v1989 = vadd.f32 %v1857, %v1894
        %v1990 = vadd.f32 %v1858, %v1896
        %v1991 = vadd.f32 %v1859, %v1898
        %v1992 = vadd.f32 %v1860, %v1900
        %v1993 = vadd.f32 %v1861, %v1902
        %v1994 = vadd.f32 %v1862, %v1904
        %v1995 = vadd.f32 %v1863, %v1906
        %v1996 = vadd.f32 %v1864, %v1908
        %v1997 = vadd.f32 %v1865, %v1910
        %v1998 = vadd.f32 %v1866, %v1912
        %v1999 = vadd.f32 %v1867, %v1914
        %v2000 = vadd.f32 %v1868, %v1916
        %v2001 = vadd.f32 %v1869, %v1918
        %v2002 = vadd.f32 %v1870, %v1920
        %v2003 = vadd.f32 %v1871, %v1922
        %v2004 = vadd.f32 %v1872, %v1924
        %v2005 = vadd.f32 %v1873, %v1926
        %v2006 = vadd.f32 %v1874, %v1928
        %v2007 = vadd.f32 %v1875, %v1930
        %v2008 = vadd.f32 %v1876, %v1932
        %v2009 = vadd.f32 %v1877, %v1934
        %v2010 = vadd.f32 %v1878, %v1936
        %v2011 = vadd.f32 %v1879, %v1938
        %v2012 = vadd.f32 %v1880, %v1940
        %v2013 = vadd.f32 %v1881, %v1942
        %v2014 = vadd.f32 %v1882, %v1944
        %v2015 = vadd.f32 %v1883, %v1946
        %v2016 = vadd.f32 %v1884, %v1948
        %v2017 = vadd.f32 %v1885, %v1950
        %v2018 = vadd.f32 %v1886, %v1952
        %v2019 = vadd.f32 %v1887, %v1954
        %v2020 = vadd.f32 %v1888, %v1956
        %v2021 = vld [vmem:[#allocation2] sm:$0x80]
        %v2022 = vld [vmem:[#allocation2 + $0x300] sm:$0x7f]
        %v2023 = vld [vmem:[#allocation2 + $0x30] sm:$0x80]
        %v2024 = vld [vmem:[#allocation2 + $0x318] sm:$0xff]
        %v2025 = vld [vmem:[#allocation2 + $0x330] sm:$0x7f]
        %2059 = vrot.lane.b32.xlu0 %v2023, 32
        %v2060 = vpop.permute.xlu0 %2059
        %2061 = vrot.lane.b32.xlu0 %v1667, 32
        %v2062 = vpop.permute.xlu0 %2061
        %2063 = vrot.lane.b32.xlu0 %v1668, 32
        %v2064 = vpop.permute.xlu0 %2063
        %2065 = vrot.lane.b32.xlu0 %v1669, 32
        %v2066 = vpop.permute.xlu0 %2065
        %2067 = vrot.lane.b32.xlu0 %v1670, 32
        %v2068 = vpop.permute.xlu0 %2067
        %2069 = vrot.lane.b32.xlu0 %v1671, 32
        %v2070 = vpop.permute.xlu0 %2069
        %2071 = vrot.lane.b32.xlu0 %v1672, 32
        %v2072 = vpop.permute.xlu0 %2071
        %2073 = vrot.lane.b32.xlu0 %v1673, 32
        %v2074 = vpop.permute.xlu0 %2073
        %2075 = vrot.lane.b32.xlu0 %v1674, 32
        %v2076 = vpop.permute.xlu0 %2075
        %2077 = vrot.lane.b32.xlu0 %v1675, 32
        %v2078 = vpop.permute.xlu0 %2077
        %2079 = vrot.lane.b32.xlu0 %v1676, 32
        %v2080 = vpop.permute.xlu0 %2079
        %2081 = vrot.lane.b32.xlu0 %v1677, 32
        %v2082 = vpop.permute.xlu0 %2081
        %2083 = vrot.lane.b32.xlu0 %v1678, 32
        %v2084 = vpop.permute.xlu0 %2083
        %2085 = vrot.lane.b32.xlu0 %v1679, 32
        %v2086 = vpop.permute.xlu0 %2085
        %2087 = vrot.lane.b32.xlu0 %v1680, 32
        %v2088 = vpop.permute.xlu0 %2087
        %2089 = vrot.lane.b32.xlu0 %v1681, 32
        %v2090 = vpop.permute.xlu0 %2089
        %2091 = vrot.lane.b32.xlu0 %v1682, 32
        %v2092 = vpop.permute.xlu0 %2091
        %2093 = vrot.lane.b32.xlu0 %v1683, 32
        %v2094 = vpop.permute.xlu0 %2093
        %2095 = vrot.lane.b32.xlu0 %v1684, 32
        %v2096 = vpop.permute.xlu0 %2095
        %2097 = vrot.lane.b32.xlu0 %v1685, 32
        %v2098 = vpop.permute.xlu0 %2097
        %2099 = vrot.lane.b32.xlu0 %v1686, 32
        %v2100 = vpop.permute.xlu0 %2099
        %2101 = vrot.lane.b32.xlu0 %v1687, 32
        %v2102 = vpop.permute.xlu0 %2101
        %2103 = vrot.lane.b32.xlu0 %v1688, 32
        %v2104 = vpop.permute.xlu0 %2103
        %2105 = vrot.lane.b32.xlu0 %v1689, 32
        %v2106 = vpop.permute.xlu0 %2105
        %2107 = vrot.lane.b32.xlu0 %v1690, 32
        %v2108 = vpop.permute.xlu0 %2107
        %2109 = vrot.lane.b32.xlu0 %v1691, 32
        %v2110 = vpop.permute.xlu0 %2109
        %2111 = vrot.lane.b32.xlu0 %v1692, 32
        %v2112 = vpop.permute.xlu0 %2111
        %2113 = vrot.lane.b32.xlu0 %v1693, 32
        %v2114 = vpop.permute.xlu0 %2113
        %2115 = vrot.lane.b32.xlu0 %v1694, 32
        %v2116 = vpop.permute.xlu0 %2115
        %2117 = vrot.lane.b32.xlu0 %v1695, 32
        %v2118 = vpop.permute.xlu0 %2117
        %2119 = vrot.lane.b32.xlu0 %v1696, 32
        %v2120 = vpop.permute.xlu0 %2119
        %2121 = vrot.lane.b32.xlu0 %v2024, 32
        %v2122 = vpop.permute.xlu0 %2121
        %2123 = vrot.lane.b32.xlu0 %v2025, 32
        %v2124 = vpop.permute.xlu0 %2123
        %v2158 = vadd.f32 %v2021, %v2060
        %v2159 = vadd.f32 %v1665, %v2062
        %v2160 = vadd.f32 %v1666, %v2064
        %v2161 = vadd.f32 %v1667, %v2066
        %v2162 = vadd.f32 %v1668, %v2068
        %v2163 = vadd.f32 %v1669, %v2070
        %v2164 = vadd.f32 %v1670, %v2072
        %v2165 = vadd.f32 %v1671, %v2074
        %v2166 = vadd.f32 %v1672, %v2076
        %v2167 = vadd.f32 %v1673, %v2078
        %v2168 = vadd.f32 %v1674, %v2080
        %v2169 = vadd.f32 %v1675, %v2082
        %v2170 = vadd.f32 %v1676, %v2084
        %v2171 = vadd.f32 %v1677, %v2086
        %v2172 = vadd.f32 %v1678, %v2088
        %v2173 = vadd.f32 %v1679, %v2090
        %v2174 = vadd.f32 %v1680, %v2092
        %v2175 = vadd.f32 %v1681, %v2094
        %v2176 = vadd.f32 %v1682, %v2096
        %v2177 = vadd.f32 %v1683, %v2098
        %v2178 = vadd.f32 %v1684, %v2100
        %v2179 = vadd.f32 %v1685, %v2102
        %v2180 = vadd.f32 %v1686, %v2104
        %v2181 = vadd.f32 %v1687, %v2106
        %v2182 = vadd.f32 %v1688, %v2108
        %v2183 = vadd.f32 %v1689, %v2110
        %v2184 = vadd.f32 %v1690, %v2112
        %v2185 = vadd.f32 %v1691, %v2114
        %v2186 = vadd.f32 %v1692, %v2116
        %v2187 = vadd.f32 %v1693, %v2118
        %v2188 = vadd.f32 %v1694, %v2120
        %v2189 = vadd.f32 %v1695, %v2122
        %v2190 = vadd.f32 %v2022, %v2124
        %v2191 = vld [vmem:[#allocation2 + $0x68] sm:$0x80]
        %v2192 = vld [vmem:[#allocation2 + $0x368] sm:$0x7f]
        %2195 = vrot.lane.b32.xlu0 %v2191, 64
        %v2196 = vpop.permute.xlu0 %2195
        %2197 = vrot.lane.b32.xlu0 %v2192, 64
        %v2198 = vpop.permute.xlu0 %2197
        %v2201 = vadd.f32 %v2158, %v2196
        %v2202 = vadd.f32 %v2159, %v1894
        %v2203 = vadd.f32 %v2160, %v1896
        %v2204 = vadd.f32 %v2161, %v1898
        %v2205 = vadd.f32 %v2162, %v1900
        %v2206 = vadd.f32 %v2163, %v1902
        %v2207 = vadd.f32 %v2164, %v1904
        %v2208 = vadd.f32 %v2165, %v1906
        %v2209 = vadd.f32 %v2166, %v1908
        %v2210 = vadd.f32 %v2167, %v1910
        %v2211 = vadd.f32 %v2168, %v1912
        %v2212 = vadd.f32 %v2169, %v1914
        %v2213 = vadd.f32 %v2170, %v1916
        %v2214 = vadd.f32 %v2171, %v1918
        %v2215 = vadd.f32 %v2172, %v1920
        %v2216 = vadd.f32 %v2173, %v1922
        %v2217 = vadd.f32 %v2174, %v1924
        %v2218 = vadd.f32 %v2175, %v1926
        %v2219 = vadd.f32 %v2176, %v1928
        %v2220 = vadd.f32 %v2177, %v1930
        %v2221 = vadd.f32 %v2178, %v1932
        %v2222 = vadd.f32 %v2179, %v1934
        %v2223 = vadd.f32 %v2180, %v1936
        %v2224 = vadd.f32 %v2181, %v1938
        %v2225 = vadd.f32 %v2182, %v1940
        %v2226 = vadd.f32 %v2183, %v1942
        %v2227 = vadd.f32 %v2184, %v1944
        %v2228 = vadd.f32 %v2185, %v1946
        %v2229 = vadd.f32 %v2186, %v1948
        %v2230 = vadd.f32 %v2187, %v1950
        %v2231 = vadd.f32 %v2188, %v1952
        %v2232 = vadd.f32 %v2189, %v1954
        %v2233 = vadd.f32 %v2190, %v2198
        %v2234 = vld [vmem:[#allocation2 + $0x18] sm:$0xfe]
        %v2235 = vld [vmem:[#allocation2 + $0x318] sm:$0x1]
        %v2236 = vld [vmem:[#allocation2 + $0x50] sm:$0xfe]
        %v2237 = vld [vmem:[#allocation2 + $0x350] sm:$0x1]
        %2240 = vrot.lane.b32.xlu0 %v2236, 32
        %v2241 = vpop.permute.xlu0 %2240
        %2242 = vrot.lane.b32.xlu0 %v2237, 32
        %v2243 = vpop.permute.xlu0 %2242
        %v2246 = vadd.f32 %v2234, %v2241
        %v2247 = vadd.f32 %v2235, %v2243
        %v2248 = vld [vmem:[#allocation2 + $0x88] sm:$0xfe]
        %v2249 = vld [vmem:[#allocation2 + $0xa0] sm:$0xff]
        %v2250 = vld [vmem:[#allocation2 + $0xb8] sm:$0xff]
        %v2251 = vld [vmem:[#allocation2 + $0xd0] sm:$0xff]
        %v2252 = vld [vmem:[#allocation2 + $0xe8] sm:$0xff]
        %v2253 = vld [vmem:[#allocation2 + $0x100] sm:$0xff]
        %v2254 = vld [vmem:[#allocation2 + $0x118] sm:$0xff]
        %v2255 = vld [vmem:[#allocation2 + $0x130] sm:$0xff]
        %v2256 = vld [vmem:[#allocation2 + $0x148] sm:$0xff]
        %v2257 = vld [vmem:[#allocation2 + $0x160] sm:$0xff]
        %v2258 = vld [vmem:[#allocation2 + $0x178] sm:$0xff]
        %v2259 = vld [vmem:[#allocation2 + $0x190] sm:$0xff]
        %v2260 = vld [vmem:[#allocation2 + $0x1a8] sm:$0xff]
        %v2261 = vld [vmem:[#allocation2 + $0x1c0] sm:$0xff]
        %v2262 = vld [vmem:[#allocation2 + $0x1d8] sm:$0xff]
        %v2263 = vld [vmem:[#allocation2 + $0x1f0] sm:$0xff]
        %v2264 = vld [vmem:[#allocation2 + $0x208] sm:$0xff]
        %v2265 = vld [vmem:[#allocation2 + $0x220] sm:$0xff]
        %v2266 = vld [vmem:[#allocation2 + $0x238] sm:$0xff]
        %v2267 = vld [vmem:[#allocation2 + $0x250] sm:$0xff]
        %v2268 = vld [vmem:[#allocation2 + $0x268] sm:$0xff]
        %v2269 = vld [vmem:[#allocation2 + $0x280] sm:$0xff]
        %v2270 = vld [vmem:[#allocation2 + $0x298] sm:$0xff]
        %v2271 = vld [vmem:[#allocation2 + $0x2b0] sm:$0xff]
        %v2272 = vld [vmem:[#allocation2 + $0x2c8] sm:$0xff]
        %v2273 = vld [vmem:[#allocation2 + $0x2e0] sm:$0xff]
        %v2274 = vld [vmem:[#allocation2 + $0x2f8] sm:$0xff]
        %v2275 = vld [vmem:[#allocation2 + $0x310] sm:$0xff]
        %v2276 = vld [vmem:[#allocation2 + $0x328] sm:$0xff]
        %v2277 = vld [vmem:[#allocation2 + $0x340] sm:$0xff]
        %v2278 = vld [vmem:[#allocation2 + $0x358] sm:$0xff]
        %v2279 = vld [vmem:[#allocation2 + $0x370] sm:$0xff]
        %v2280 = vld [vmem:[#allocation2 + $0x388] sm:$0x1]
        %2314 = vrot.lane.b32.xlu0 %v2248, 64
        %v2315 = vpop.permute.xlu0 %2314
        %2316 = vrot.lane.b32.xlu0 %v2249, 64
        %v2317 = vpop.permute.xlu0 %2316
        %2318 = vrot.lane.b32.xlu0 %v2250, 64
        %v2319 = vpop.permute.xlu0 %2318
        %2320 = vrot.lane.b32.xlu0 %v2251, 64
        %v2321 = vpop.permute.xlu0 %2320
        %2322 = vrot.lane.b32.xlu0 %v2252, 64
        %v2323 = vpop.permute.xlu0 %2322
        %2324 = vrot.lane.b32.xlu0 %v2253, 64
        %v2325 = vpop.permute.xlu0 %2324
        %2326 = vrot.lane.b32.xlu0 %v2254, 64
        %v2327 = vpop.permute.xlu0 %2326
        %2328 = vrot.lane.b32.xlu0 %v2255, 64
        %v2329 = vpop.permute.xlu0 %2328
        %2330 = vrot.lane.b32.xlu0 %v2256, 64
        %v2331 = vpop.permute.xlu0 %2330
        %2332 = vrot.lane.b32.xlu0 %v2257, 64
        %v2333 = vpop.permute.xlu0 %2332
        %2334 = vrot.lane.b32.xlu0 %v2258, 64
        %v2335 = vpop.permute.xlu0 %2334
        %2336 = vrot.lane.b32.xlu0 %v2259, 64
        %v2337 = vpop.permute.xlu0 %2336
        %2338 = vrot.lane.b32.xlu0 %v2260, 64
        %v2339 = vpop.permute.xlu0 %2338
        %2340 = vrot.lane.b32.xlu0 %v2261, 64
        %v2341 = vpop.permute.xlu0 %2340
        %2342 = vrot.lane.b32.xlu0 %v2262, 64
        %v2343 = vpop.permute.xlu0 %2342
        %2344 = vrot.lane.b32.xlu0 %v2263, 64
        %v2345 = vpop.permute.xlu0 %2344
        %2346 = vrot.lane.b32.xlu0 %v2264, 64
        %v2347 = vpop.permute.xlu0 %2346
        %2348 = vrot.lane.b32.xlu0 %v2265, 64
        %v2349 = vpop.permute.xlu0 %2348
        %2350 = vrot.lane.b32.xlu0 %v2266, 64
        %v2351 = vpop.permute.xlu0 %2350
        %2352 = vrot.lane.b32.xlu0 %v2267, 64
        %v2353 = vpop.permute.xlu0 %2352
        %2354 = vrot.lane.b32.xlu0 %v2268, 64
        %v2355 = vpop.permute.xlu0 %2354
        %2356 = vrot.lane.b32.xlu0 %v2269, 64
        %v2357 = vpop.permute.xlu0 %2356
        %2358 = vrot.lane.b32.xlu0 %v2270, 64
        %v2359 = vpop.permute.xlu0 %2358
        %2360 = vrot.lane.b32.xlu0 %v2271, 64
        %v2361 = vpop.permute.xlu0 %2360
        %2362 = vrot.lane.b32.xlu0 %v2272, 64
        %v2363 = vpop.permute.xlu0 %2362
        %2364 = vrot.lane.b32.xlu0 %v2273, 64
        %v2365 = vpop.permute.xlu0 %2364
        %2366 = vrot.lane.b32.xlu0 %v2274, 64
        %v2367 = vpop.permute.xlu0 %2366
        %2368 = vrot.lane.b32.xlu0 %v2275, 64
        %v2369 = vpop.permute.xlu0 %2368
        %2370 = vrot.lane.b32.xlu0 %v2276, 64
        %v2371 = vpop.permute.xlu0 %2370
        %2372 = vrot.lane.b32.xlu0 %v2277, 64
        %v2373 = vpop.permute.xlu0 %2372
        %2374 = vrot.lane.b32.xlu0 %v2278, 64
        %v2375 = vpop.permute.xlu0 %2374
        %2376 = vrot.lane.b32.xlu0 %v2279, 64
        %v2377 = vpop.permute.xlu0 %2376
        %2378 = vrot.lane.b32.xlu0 %v2280, 64
        %v2379 = vpop.permute.xlu0 %2378
        %v2413 = vadd.f32 %v2246, %v2315
        %v2414 = vadd.f32 %v1858, %v2317
        %v2415 = vadd.f32 %v1859, %v2319
        %v2416 = vadd.f32 %v1860, %v2321
        %v2417 = vadd.f32 %v1861, %v2323
        %v2418 = vadd.f32 %v1862, %v2325
        %v2419 = vadd.f32 %v1863, %v2327
        %v2420 = vadd.f32 %v1864, %v2329
        %v2421 = vadd.f32 %v1865, %v2331
        %v2422 = vadd.f32 %v1866, %v2333
        %v2423 = vadd.f32 %v1867, %v2335
        %v2424 = vadd.f32 %v1868, %v2337
        %v2425 = vadd.f32 %v1869, %v2339
        %v2426 = vadd.f32 %v1870, %v2341
        %v2427 = vadd.f32 %v1871, %v2343
        %v2428 = vadd.f32 %v1872, %v2345
        %v2429 = vadd.f32 %v1873, %v2347
        %v2430 = vadd.f32 %v1874, %v2349
        %v2431 = vadd.f32 %v1875, %v2351
        %v2432 = vadd.f32 %v1876, %v2353
        %v2433 = vadd.f32 %v1877, %v2355
        %v2434 = vadd.f32 %v1878, %v2357
        %v2435 = vadd.f32 %v1879, %v2359
        %v2436 = vadd.f32 %v1880, %v2361
        %v2437 = vadd.f32 %v1881, %v2363
        %v2438 = vadd.f32 %v1882, %v2365
        %v2439 = vadd.f32 %v1883, %v2367
        %v2440 = vadd.f32 %v1884, %v2369
        %v2441 = vadd.f32 %v1885, %v2371
        %v2442 = vadd.f32 %v1886, %v2373
        %v2443 = vadd.f32 %v1887, %v2375
        %v2444 = vadd.f32 %v1888, %v2377
        %v2445 = vadd.f32 %v2247, %v2379
        %vm2479 = vcmask 1040384
        %v2480 = vrot.slane %v2201, 7
        %v2481 = vrot.slane %v2202, 7
        %v2482 = vsel %vm2479, %v2480, %v2481
        %v2483 = vrot.slane %v2203, 7
        %v2484 = vsel %vm2479, %v2481, %v2483
        %v2485 = vrot.slane %v2204, 7
        %v2486 = vsel %vm2479, %v2483, %v2485
        %v2487 = vrot.slane %v2205, 7
        %v2488 = vsel %vm2479, %v2485, %v2487
        %v2489 = vrot.slane %v2206, 7
        %v2490 = vsel %vm2479, %v2487, %v2489
        %v2491 = vrot.slane %v2207, 7
        %v2492 = vsel %vm2479, %v2489, %v2491
        %v2493 = vrot.slane %v2208, 7
        %v2494 = vsel %vm2479, %v2491, %v2493
        %v2495 = vrot.slane %v2209, 7
        %v2496 = vsel %vm2479, %v2493, %v2495
        %v2497 = vrot.slane %v2210, 7
        %v2498 = vsel %vm2479, %v2495, %v2497
        %v2499 = vrot.slane %v2211, 7
        %v2500 = vsel %vm2479, %v2497, %v2499
        %v2501 = vrot.slane %v2212, 7
        %v2502 = vsel %vm2479, %v2499, %v2501
        %v2503 = vrot.slane %v2213, 7
        %v2504 = vsel %vm2479, %v2501, %v2503
        %v2505 = vrot.slane %v2214, 7
        %v2506 = vsel %vm2479, %v2503, %v2505
        %v2507 = vrot.slane %v2215, 7
        %v2508 = vsel %vm2479, %v2505, %v2507
        %v2509 = vrot.slane %v2216, 7
        %v2510 = vsel %vm2479, %v2507, %v2509
        %v2511 = vrot.slane %v2217, 7
        %v2512 = vsel %vm2479, %v2509, %v2511
        %v2513 = vrot.slane %v2218, 7
        %v2514 = vsel %vm2479, %v2511, %v2513
        %v2515 = vrot.slane %v2219, 7
        %v2516 = vsel %vm2479, %v2513, %v2515
        %v2517 = vrot.slane %v2220, 7
        %v2518 = vsel %vm2479, %v2515, %v2517
        %v2519 = vrot.slane %v2221, 7
        %v2520 = vsel %vm2479, %v2517, %v2519
        %v2521 = vrot.slane %v2222, 7
        %v2522 = vsel %vm2479, %v2519, %v2521
        %v2523 = vrot.slane %v2223, 7
        %v2524 = vsel %vm2479, %v2521, %v2523
        %v2525 = vrot.slane %v2224, 7
        %v2526 = vsel %vm2479, %v2523, %v2525
        %v2527 = vrot.slane %v2225, 7
        %v2528 = vsel %vm2479, %v2525, %v2527
        %v2529 = vrot.slane %v2226, 7
        %v2530 = vsel %vm2479, %v2527, %v2529
        %v2531 = vrot.slane %v2227, 7
        %v2532 = vsel %vm2479, %v2529, %v2531
        %v2533 = vrot.slane %v2228, 7
        %v2534 = vsel %vm2479, %v2531, %v2533
        %v2535 = vrot.slane %v2229, 7
        %v2536 = vsel %vm2479, %v2533, %v2535
        %v2537 = vrot.slane %v2230, 7
        %v2538 = vsel %vm2479, %v2535, %v2537
        %v2539 = vrot.slane %v2231, 7
        %v2540 = vsel %vm2479, %v2537, %v2539
        %v2541 = vrot.slane %v2232, 7
        %v2542 = vsel %vm2479, %v2539, %v2541
        %v2543 = vrot.slane %v2233, 7
        %v2544 = vsel %vm2479, %v2541, %v2543
        %v2577 = vsel %vm1601, %v2482, 0.0
        %v2578 = vsel %vm1602, %v2484, 0.0
        %v2579 = vsel %vm1603, %v2486, 0.0
        %v2580 = vsel %vm1604, %v2488, 0.0
        %v2581 = vsel %vm1605, %v2490, 0.0
        %v2582 = vsel %vm1606, %v2492, 0.0
        %v2583 = vsel %vm1607, %v2494, 0.0
        %v2584 = vsel %vm1608, %v2496, 0.0
        %v2585 = vsel %vm1609, %v2498, 0.0
        %v2586 = vsel %vm1610, %v2500, 0.0
        %v2587 = vsel %vm1611, %v2502, 0.0
        %v2588 = vsel %vm1612, %v2504, 0.0
        %v2589 = vsel %vm1613, %v2506, 0.0
        %v2590 = vsel %vm1614, %v2508, 0.0
        %v2591 = vsel %vm1615, %v2510, 0.0
        %v2592 = vsel %vm1616, %v2512, 0.0
        %v2593 = vsel %vm1617, %v2514, 0.0
        %v2594 = vsel %vm1618, %v2516, 0.0
        %v2595 = vsel %vm1619, %v2518, 0.0
        %v2596 = vsel %vm1620, %v2520, 0.0
        %v2597 = vsel %vm1621, %v2522, 0.0
        %v2598 = vsel %vm1622, %v2524, 0.0
        %v2599 = vsel %vm1623, %v2526, 0.0
        %v2600 = vsel %vm1624, %v2528, 0.0
        %v2601 = vsel %vm1625, %v2530, 0.0
        %v2602 = vsel %vm1626, %v2532, 0.0
        %v2603 = vsel %vm1627, %v2534, 0.0
        %v2604 = vsel %vm1628, %v2536, 0.0
        %v2605 = vsel %vm1629, %v2538, 0.0
        %v2606 = vsel %vm1630, %v2540, 0.0
        %v2607 = vsel %vm1631, %v2542, 0.0
        %v2608 = vsel %vm1632, %v2544, 0.0
        %2641 = vrot.lane.b32.xlu0 %v2577, 32
        %v2642 = vpop.permute.xlu0 %2641
        %2643 = vrot.lane.b32.xlu0 %v2578, 32
        %v2644 = vpop.permute.xlu0 %2643
        %2645 = vrot.lane.b32.xlu0 %v2579, 32
        %v2646 = vpop.permute.xlu0 %2645
        %2647 = vrot.lane.b32.xlu0 %v2580, 32
        %v2648 = vpop.permute.xlu0 %2647
        %2649 = vrot.lane.b32.xlu0 %v2581, 32
        %v2650 = vpop.permute.xlu0 %2649
        %2651 = vrot.lane.b32.xlu0 %v2582, 32
        %v2652 = vpop.permute.xlu0 %2651
        %2653 = vrot.lane.b32.xlu0 %v2583, 32
        %v2654 = vpop.permute.xlu0 %2653
        %2655 = vrot.lane.b32.xlu0 %v2584, 32
        %v2656 = vpop.permute.xlu0 %2655
        %2657 = vrot.lane.b32.xlu0 %v2585, 32
        %v2658 = vpop.permute.xlu0 %2657
        %2659 = vrot.lane.b32.xlu0 %v2586, 32
        %v2660 = vpop.permute.xlu0 %2659
        %2661 = vrot.lane.b32.xlu0 %v2587, 32
        %v2662 = vpop.permute.xlu0 %2661
        %2663 = vrot.lane.b32.xlu0 %v2588, 32
        %v2664 = vpop.permute.xlu0 %2663
        %2665 = vrot.lane.b32.xlu0 %v2589, 32
        %v2666 = vpop.permute.xlu0 %2665
        %2667 = vrot.lane.b32.xlu0 %v2590, 32
        %v2668 = vpop.permute.xlu0 %2667
        %2669 = vrot.lane.b32.xlu0 %v2591, 32
        %v2670 = vpop.permute.xlu0 %2669
        %2671 = vrot.lane.b32.xlu0 %v2592, 32
        %v2672 = vpop.permute.xlu0 %2671
        %2673 = vrot.lane.b32.xlu0 %v2593, 32
        %v2674 = vpop.permute.xlu0 %2673
        %2675 = vrot.lane.b32.xlu0 %v2594, 32
        %v2676 = vpop.permute.xlu0 %2675
        %2677 = vrot.lane.b32.xlu0 %v2595, 32
        %v2678 = vpop.permute.xlu0 %2677
        %2679 = vrot.lane.b32.xlu0 %v2596, 32
        %v2680 = vpop.permute.xlu0 %2679
        %2681 = vrot.lane.b32.xlu0 %v2597, 32
        %v2682 = vpop.permute.xlu0 %2681
        %2683 = vrot.lane.b32.xlu0 %v2598, 32
        %v2684 = vpop.permute.xlu0 %2683
        %2685 = vrot.lane.b32.xlu0 %v2599, 32
        %v2686 = vpop.permute.xlu0 %2685
        %2687 = vrot.lane.b32.xlu0 %v2600, 32
        %v2688 = vpop.permute.xlu0 %2687
        %2689 = vrot.lane.b32.xlu0 %v2601, 32
        %v2690 = vpop.permute.xlu0 %2689
        %2691 = vrot.lane.b32.xlu0 %v2602, 32
        %v2692 = vpop.permute.xlu0 %2691
        %2693 = vrot.lane.b32.xlu0 %v2603, 32
        %v2694 = vpop.permute.xlu0 %2693
        %2695 = vrot.lane.b32.xlu0 %v2604, 32
        %v2696 = vpop.permute.xlu0 %2695
        %2697 = vrot.lane.b32.xlu0 %v2605, 32
        %v2698 = vpop.permute.xlu0 %2697
        %2699 = vrot.lane.b32.xlu0 %v2606, 32
        %v2700 = vpop.permute.xlu0 %2699
        %2701 = vrot.lane.b32.xlu0 %v2607, 32
        %v2702 = vpop.permute.xlu0 %2701
        %2703 = vrot.lane.b32.xlu0 %v2608, 32
        %v2704 = vpop.permute.xlu0 %2703
        %v2737 = vadd.f32 %v1989, %v2642
        %v2738 = vadd.f32 %v1990, %v2644
        %v2739 = vadd.f32 %v1991, %v2646
        %v2740 = vadd.f32 %v1992, %v2648
        %v2741 = vadd.f32 %v1993, %v2650
        %v2742 = vadd.f32 %v1994, %v2652
        %v2743 = vadd.f32 %v1995, %v2654
        %v2744 = vadd.f32 %v1996, %v2656
        %v2745 = vadd.f32 %v1997, %v2658
        %v2746 = vadd.f32 %v1998, %v2660
        %v2747 = vadd.f32 %v1999, %v2662
        %v2748 = vadd.f32 %v2000, %v2664
        %v2749 = vadd.f32 %v2001, %v2666
        %v2750 = vadd.f32 %v2002, %v2668
        %v2751 = vadd.f32 %v2003, %v2670
        %v2752 = vadd.f32 %v2004, %v2672
        %v2753 = vadd.f32 %v2005, %v2674
        %v2754 = vadd.f32 %v2006, %v2676
        %v2755 = vadd.f32 %v2007, %v2678
        %v2756 = vadd.f32 %v2008, %v2680
        %v2757 = vadd.f32 %v2009, %v2682
        %v2758 = vadd.f32 %v2010, %v2684
        %v2759 = vadd.f32 %v2011, %v2686
        %v2760 = vadd.f32 %v2012, %v2688
        %v2761 = vadd.f32 %v2013, %v2690
        %v2762 = vadd.f32 %v2014, %v2692
        %v2763 = vadd.f32 %v2015, %v2694
        %v2764 = vadd.f32 %v2016, %v2696
        %v2765 = vadd.f32 %v2017, %v2698
        %v2766 = vadd.f32 %v2018, %v2700
        %v2767 = vadd.f32 %v2019, %v2702
        %v2768 = vadd.f32 %v2020, %v2704
        %vm2802 = vcmask 1046528
        %v2803 = vrot.slane %v2413, 1
        %v2804 = vrot.slane %v2414, 1
        %v2805 = vsel %vm2802, %v2803, %v2804
        %v2806 = vrot.slane %v2415, 1
        %v2807 = vsel %vm2802, %v2804, %v2806
        %v2808 = vrot.slane %v2416, 1
        %v2809 = vsel %vm2802, %v2806, %v2808
        %v2810 = vrot.slane %v2417, 1
        %v2811 = vsel %vm2802, %v2808, %v2810
        %v2812 = vrot.slane %v2418, 1
        %v2813 = vsel %vm2802, %v2810, %v2812
        %v2814 = vrot.slane %v2419, 1
        %v2815 = vsel %vm2802, %v2812, %v2814
        %v2816 = vrot.slane %v2420, 1
        %v2817 = vsel %vm2802, %v2814, %v2816
        %v2818 = vrot.slane %v2421, 1
        %v2819 = vsel %vm2802, %v2816, %v2818
        %v2820 = vrot.slane %v2422, 1
        %v2821 = vsel %vm2802, %v2818, %v2820
        %v2822 = vrot.slane %v2423, 1
        %v2823 = vsel %vm2802, %v2820, %v2822
        %v2824 = vrot.slane %v2424, 1
        %v2825 = vsel %vm2802, %v2822, %v2824
        %v2826 = vrot.slane %v2425, 1
        %v2827 = vsel %vm2802, %v2824, %v2826
        %v2828 = vrot.slane %v2426, 1
        %v2829 = vsel %vm2802, %v2826, %v2828
        %v2830 = vrot.slane %v2427, 1
        %v2831 = vsel %vm2802, %v2828, %v2830
        %v2832 = vrot.slane %v2428, 1
        %v2833 = vsel %vm2802, %v2830, %v2832
        %v2834 = vrot.slane %v2429, 1
        %v2835 = vsel %vm2802, %v2832, %v2834
        %v2836 = vrot.slane %v2430, 1
        %v2837 = vsel %vm2802, %v2834, %v2836
        %v2838 = vrot.slane %v2431, 1
        %v2839 = vsel %vm2802, %v2836, %v2838
        %v2840 = vrot.slane %v2432, 1
        %v2841 = vsel %vm2802, %v2838, %v2840
        %v2842 = vrot.slane %v2433, 1
        %v2843 = vsel %vm2802, %v2840, %v2842
        %v2844 = vrot.slane %v2434, 1
        %v2845 = vsel %vm2802, %v2842, %v2844
        %v2846 = vrot.slane %v2435, 1
        %v2847 = vsel %vm2802, %v2844, %v2846
        %v2848 = vrot.slane %v2436, 1
        %v2849 = vsel %vm2802, %v2846, %v2848
        %v2850 = vrot.slane %v2437, 1
        %v2851 = vsel %vm2802, %v2848, %v2850
        %v2852 = vrot.slane %v2438, 1
        %v2853 = vsel %vm2802, %v2850, %v2852
        %v2854 = vrot.slane %v2439, 1
        %v2855 = vsel %vm2802, %v2852, %v2854
        %v2856 = vrot.slane %v2440, 1
        %v2857 = vsel %vm2802, %v2854, %v2856
        %v2858 = vrot.slane %v2441, 1
        %v2859 = vsel %vm2802, %v2856, %v2858
        %v2860 = vrot.slane %v2442, 1
        %v2861 = vsel %vm2802, %v2858, %v2860
        %v2862 = vrot.slane %v2443, 1
        %v2863 = vsel %vm2802, %v2860, %v2862
        %v2864 = vrot.slane %v2444, 1
        %v2865 = vsel %vm2802, %v2862, %v2864
        %v2866 = vrot.slane %v2445, 1
        %v2867 = vsel %vm2802, %v2864, %v2866
        %2868 = vrot.lane.b32.xlu0 %v2805, 64
        %v2869 = vpop.permute.xlu0 %2868
        %2870 = vrot.lane.b32.xlu0 %v2807, 64
        %v2871 = vpop.permute.xlu0 %2870
        %2872 = vrot.lane.b32.xlu0 %v2809, 64
        %v2873 = vpop.permute.xlu0 %2872
        %2874 = vrot.lane.b32.xlu0 %v2811, 64
        %v2875 = vpop.permute.xlu0 %2874
        %2876 = vrot.lane.b32.xlu0 %v2813, 64
        %v2877 = vpop.permute.xlu0 %2876
        %2878 = vrot.lane.b32.xlu0 %v2815, 64
        %v2879 = vpop.permute.xlu0 %2878
        %2880 = vrot.lane.b32.xlu0 %v2817, 64
        %v2881 = vpop.permute.xlu0 %2880
        %2882 = vrot.lane.b32.xlu0 %v2819, 64
        %v2883 = vpop.permute.xlu0 %2882
        %2884 = vrot.lane.b32.xlu0 %v2821, 64
        %v2885 = vpop.permute.xlu0 %2884
        %2886 = vrot.lane.b32.xlu0 %v2823, 64
        %v2887 = vpop.permute.xlu0 %2886
        %2888 = vrot.lane.b32.xlu0 %v2825, 64
        %v2889 = vpop.permute.xlu0 %2888
        %2890 = vrot.lane.b32.xlu0 %v2827, 64
        %v2891 = vpop.permute.xlu0 %2890
        %2892 = vrot.lane.b32.xlu0 %v2829, 64
        %v2893 = vpop.permute.xlu0 %2892
        %2894 = vrot.lane.b32.xlu0 %v2831, 64
        %v2895 = vpop.permute.xlu0 %2894
        %2896 = vrot.lane.b32.xlu0 %v2833, 64
        %v2897 = vpop.permute.xlu0 %2896
        %2898 = vrot.lane.b32.xlu0 %v2835, 64
        %v2899 = vpop.permute.xlu0 %2898
        %2900 = vrot.lane.b32.xlu0 %v2837, 64
        %v2901 = vpop.permute.xlu0 %2900
        %2902 = vrot.lane.b32.xlu0 %v2839, 64
        %v2903 = vpop.permute.xlu0 %2902
        %2904 = vrot.lane.b32.xlu0 %v2841, 64
        %v2905 = vpop.permute.xlu0 %2904
        %2906 = vrot.lane.b32.xlu0 %v2843, 64
        %v2907 = vpop.permute.xlu0 %2906
        %2908 = vrot.lane.b32.xlu0 %v2845, 64
        %v2909 = vpop.permute.xlu0 %2908
        %2910 = vrot.lane.b32.xlu0 %v2847, 64
        %v2911 = vpop.permute.xlu0 %2910
        %2912 = vrot.lane.b32.xlu0 %v2849, 64
        %v2913 = vpop.permute.xlu0 %2912
        %2914 = vrot.lane.b32.xlu0 %v2851, 64
        %v2915 = vpop.permute.xlu0 %2914
        %2916 = vrot.lane.b32.xlu0 %v2853, 64
        %v2917 = vpop.permute.xlu0 %2916
        %2918 = vrot.lane.b32.xlu0 %v2855, 64
        %v2919 = vpop.permute.xlu0 %2918
        %2920 = vrot.lane.b32.xlu0 %v2857, 64
        %v2921 = vpop.permute.xlu0 %2920
        %2922 = vrot.lane.b32.xlu0 %v2859, 64
        %v2923 = vpop.permute.xlu0 %2922
        %2924 = vrot.lane.b32.xlu0 %v2861, 64
        %v2925 = vpop.permute.xlu0 %2924
        %2926 = vrot.lane.b32.xlu0 %v2863, 64
        %v2927 = vpop.permute.xlu0 %2926
        %2928 = vrot.lane.b32.xlu0 %v2865, 64
        %v2929 = vpop.permute.xlu0 %2928
        %2930 = vrot.lane.b32.xlu0 %v2867, 64
        %v2931 = vpop.permute.xlu0 %2930
        %v2964 = vsel %vm1633, %v2869, 0.0
        %v2965 = vsel %vm1634, %v2871, 0.0
        %v2966 = vsel %vm1635, %v2873, 0.0
        %v2967 = vsel %vm1636, %v2875, 0.0
        %v2968 = vsel %vm1637, %v2877, 0.0
        %v2969 = vsel %vm1638, %v2879, 0.0
        %v2970 = vsel %vm1639, %v2881, 0.0
        %v2971 = vsel %vm1640, %v2883, 0.0
        %v2972 = vsel %vm1641, %v2885, 0.0
        %v2973 = vsel %vm1642, %v2887, 0.0
        %v2974 = vsel %vm1643, %v2889, 0.0
        %v2975 = vsel %vm1644, %v2891, 0.0
        %v2976 = vsel %vm1645, %v2893, 0.0
        %v2977 = vsel %vm1646, %v2895, 0.0
        %v2978 = vsel %vm1647, %v2897, 0.0
        %v2979 = vsel %vm1648, %v2899, 0.0
        %v2980 = vsel %vm1649, %v2901, 0.0
        %v2981 = vsel %vm1650, %v2903, 0.0
        %v2982 = vsel %vm1651, %v2905, 0.0
        %v2983 = vsel %vm1652, %v2907, 0.0
        %v2984 = vsel %vm1653, %v2909, 0.0
        %v2985 = vsel %vm1654, %v2911, 0.0
        %v2986 = vsel %vm1655, %v2913, 0.0
        %v2987 = vsel %vm1656, %v2915, 0.0
        %v2988 = vsel %vm1657, %v2917, 0.0
        %v2989 = vsel %vm1658, %v2919, 0.0
        %v2990 = vsel %vm1659, %v2921, 0.0
        %v2991 = vsel %vm1660, %v2923, 0.0
        %v2992 = vsel %vm1661, %v2925, 0.0
        %v2993 = vsel %vm1662, %v2927, 0.0
        %v2994 = vsel %vm1663, %v2929, 0.0
        %v2995 = vsel %vm1664, %v2931, 0.0
        %3028 = vrot.lane.b32.xlu0 %v2964, 32
        %v3029 = vpop.permute.xlu0 %3028
        %3030 = vrot.lane.b32.xlu0 %v2965, 32
        %v3031 = vpop.permute.xlu0 %3030
        %3032 = vrot.lane.b32.xlu0 %v2966, 32
        %v3033 = vpop.permute.xlu0 %3032
        %3034 = vrot.lane.b32.xlu0 %v2967, 32
        %v3035 = vpop.permute.xlu0 %3034
        %3036 = vrot.lane.b32.xlu0 %v2968, 32
        %v3037 = vpop.permute.xlu0 %3036
        %3038 = vrot.lane.b32.xlu0 %v2969, 32
        %v3039 = vpop.permute.xlu0 %3038
        %3040 = vrot.lane.b32.xlu0 %v2970, 32
        %v3041 = vpop.permute.xlu0 %3040
        %3042 = vrot.lane.b32.xlu0 %v2971, 32
        %v3043 = vpop.permute.xlu0 %3042
        %3044 = vrot.lane.b32.xlu0 %v2972, 32
        %v3045 = vpop.permute.xlu0 %3044
        %3046 = vrot.lane.b32.xlu0 %v2973, 32
        %v3047 = vpop.permute.xlu0 %3046
        %3048 = vrot.lane.b32.xlu0 %v2974, 32
        %v3049 = vpop.permute.xlu0 %3048
        %3050 = vrot.lane.b32.xlu0 %v2975, 32
        %v3051 = vpop.permute.xlu0 %3050
        %3052 = vrot.lane.b32.xlu0 %v2976, 32
        %v3053 = vpop.permute.xlu0 %3052
        %3054 = vrot.lane.b32.xlu0 %v2977, 32
        %v3055 = vpop.permute.xlu0 %3054
        %3056 = vrot.lane.b32.xlu0 %v2978, 32
        %v3057 = vpop.permute.xlu0 %3056
        %3058 = vrot.lane.b32.xlu0 %v2979, 32
        %v3059 = vpop.permute.xlu0 %3058
        %3060 = vrot.lane.b32.xlu0 %v2980, 32
        %v3061 = vpop.permute.xlu0 %3060
        %3062 = vrot.lane.b32.xlu0 %v2981, 32
        %v3063 = vpop.permute.xlu0 %3062
        %3064 = vrot.lane.b32.xlu0 %v2982, 32
        %v3065 = vpop.permute.xlu0 %3064
        %3066 = vrot.lane.b32.xlu0 %v2983, 32
        %v3067 = vpop.permute.xlu0 %3066
        %3068 = vrot.lane.b32.xlu0 %v2984, 32
        %v3069 = vpop.permute.xlu0 %3068
        %3070 = vrot.lane.b32.xlu0 %v2985, 32
        %v3071 = vpop.permute.xlu0 %3070
        %3072 = vrot.lane.b32.xlu0 %v2986, 32
        %v3073 = vpop.permute.xlu0 %3072
        %3074 = vrot.lane.b32.xlu0 %v2987, 32
        %v3075 = vpop.permute.xlu0 %3074
        %3076 = vrot.lane.b32.xlu0 %v2988, 32
        %v3077 = vpop.permute.xlu0 %3076
        %3078 = vrot.lane.b32.xlu0 %v2989, 32
        %v3079 = vpop.permute.xlu0 %3078
        %3080 = vrot.lane.b32.xlu0 %v2990, 32
        %v3081 = vpop.permute.xlu0 %3080
        %3082 = vrot.lane.b32.xlu0 %v2991, 32
        %v3083 = vpop.permute.xlu0 %3082
        %3084 = vrot.lane.b32.xlu0 %v2992, 32
        %v3085 = vpop.permute.xlu0 %3084
        %3086 = vrot.lane.b32.xlu0 %v2993, 32
        %v3087 = vpop.permute.xlu0 %3086
        %3088 = vrot.lane.b32.xlu0 %v2994, 32
        %v3089 = vpop.permute.xlu0 %3088
        %3090 = vrot.lane.b32.xlu0 %v2995, 32
        %v3091 = vpop.permute.xlu0 %3090
        %v3124 = vadd.f32 %v2737, %v3029
        %v3125 = vadd.f32 %v2738, %v3031
        %v3126 = vadd.f32 %v2739, %v3033
        %v3127 = vadd.f32 %v2740, %v3035
        %v3128 = vadd.f32 %v2741, %v3037
        %v3129 = vadd.f32 %v2742, %v3039
        %v3130 = vadd.f32 %v2743, %v3041
        %v3131 = vadd.f32 %v2744, %v3043
        %v3132 = vadd.f32 %v2745, %v3045
        %v3133 = vadd.f32 %v2746, %v3047
        %v3134 = vadd.f32 %v2747, %v3049
        %v3135 = vadd.f32 %v2748, %v3051
        %v3136 = vadd.f32 %v2749, %v3053
        %v3137 = vadd.f32 %v2750, %v3055
        %v3138 = vadd.f32 %v2751, %v3057
        %v3139 = vadd.f32 %v2752, %v3059
        %v3140 = vadd.f32 %v2753, %v3061
        %v3141 = vadd.f32 %v2754, %v3063
        %v3142 = vadd.f32 %v2755, %v3065
        %v3143 = vadd.f32 %v2756, %v3067
        %v3144 = vadd.f32 %v2757, %v3069
        %v3145 = vadd.f32 %v2758, %v3071
        %v3146 = vadd.f32 %v2759, %v3073
        %v3147 = vadd.f32 %v2760, %v3075
        %v3148 = vadd.f32 %v2761, %v3077
        %v3149 = vadd.f32 %v2762, %v3079
        %v3150 = vadd.f32 %v2763, %v3081
        %v3151 = vadd.f32 %v2764, %v3083
        %v3152 = vadd.f32 %v2765, %v3085
        %v3153 = vadd.f32 %v2766, %v3087
        %v3154 = vadd.f32 %v2767, %v3089
        %v3155 = vadd.f32 %v2768, %v3091
        %v3156 = vld [vmem:[%s5] sm:$0x1]
        %v3158 = vlaneseq
        %v3159 = vshrl.u32 %v3158, 7
        %v3160 = vsub.s32 0, %v3159
        %v3161 = vrot.slane %v3156, %v3160
        %3162 = vrot.lane.b32.xlu0 %v3161, 32
        %v3163 = vpop.permute.xlu0 %3162
        %v3165 = vadd.f32 %v3124, %v3163
        %v3166 = vadd.f32 %v3125, %v3163
        %v3167 = vadd.f32 %v3126, %v3163
        %v3168 = vadd.f32 %v3127, %v3163
        %v3169 = vadd.f32 %v3128, %v3163
        %v3170 = vadd.f32 %v3129, %v3163
        %v3171 = vadd.f32 %v3130, %v3163
        %v3172 = vadd.f32 %v3131, %v3163
        %v3173 = vadd.f32 %v3132, %v3163
        %v3174 = vadd.f32 %v3133, %v3163
        %v3175 = vadd.f32 %v3134, %v3163
        %v3176 = vadd.f32 %v3135, %v3163
        %v3177 = vadd.f32 %v3136, %v3163
        %v3178 = vadd.f32 %v3137, %v3163
        %v3179 = vadd.f32 %v3138, %v3163
        %v3180 = vadd.f32 %v3139, %v3163
        %v3181 = vadd.f32 %v3140, %v3163
        %v3182 = vadd.f32 %v3141, %v3163
        %v3183 = vadd.f32 %v3142, %v3163
        %v3184 = vadd.f32 %v3143, %v3163
        %v3185 = vadd.f32 %v3144, %v3163
        %v3186 = vadd.f32 %v3145, %v3163
        %v3187 = vadd.f32 %v3146, %v3163
        %v3188 = vadd.f32 %v3147, %v3163
        %v3189 = vadd.f32 %v3148, %v3163
        %v3190 = vadd.f32 %v3149, %v3163
        %v3191 = vadd.f32 %v3150, %v3163
        %v3192 = vadd.f32 %v3151, %v3163
        %v3193 = vadd.f32 %v3152, %v3163
        %v3194 = vadd.f32 %v3153, %v3163
        %v3195 = vadd.f32 %v3154, %v3163
        %v3196 = vadd.f32 %v3155, %v3163
        %v3197 = vmax.f32 %v3165, 0.0
        %v3198 = vmax.f32 %v3166, 0.0
        %v3199 = vmax.f32 %v3167, 0.0
        %v3200 = vmax.f32 %v3168, 0.0
        %v3201 = vmax.f32 %v3169, 0.0
        %v3202 = vmax.f32 %v3170, 0.0
        %v3203 = vmax.f32 %v3171, 0.0
        %v3204 = vmax.f32 %v3172, 0.0
        %v3205 = vmax.f32 %v3173, 0.0
        %v3206 = vmax.f32 %v3174, 0.0
        %v3207 = vmax.f32 %v3175, 0.0
        %v3208 = vmax.f32 %v3176, 0.0
        %v3209 = vmax.f32 %v3177, 0.0
        %v3210 = vmax.f32 %v3178, 0.0
        %v3211 = vmax.f32 %v3179, 0.0
        %v3212 = vmax.f32 %v3180, 0.0
        %v3213 = vmax.f32 %v3181, 0.0
        %v3214 = vmax.f32 %v3182, 0.0
        %v3215 = vmax.f32 %v3183, 0.0
        %v3216 = vmax.f32 %v3184, 0.0
        %v3217 = vmax.f32 %v3185, 0.0
        %v3218 = vmax.f32 %v3186, 0.0
        %v3219 = vmax.f32 %v3187, 0.0
        %v3220 = vmax.f32 %v3188, 0.0
        %v3221 = vmax.f32 %v3189, 0.0
        %v3222 = vmax.f32 %v3190, 0.0
        %v3223 = vmax.f32 %v3191, 0.0
        %v3224 = vmax.f32 %v3192, 0.0
        %v3225 = vmax.f32 %v3193, 0.0
        %v3226 = vmax.f32 %v3194, 0.0
        %v3227 = vmax.f32 %v3195, 0.0
        %v3228 = vmax.f32 %v3196, 0.0
        %v3229 = vpack.c.bf16 %v3198, %v3197
        %v3230 = vpack.c.bf16 %v3200, %v3199
        %v3231 = vpack.c.bf16 %v3202, %v3201
        %v3232 = vpack.c.bf16 %v3204, %v3203
        %v3233 = vpack.c.bf16 %v3206, %v3205
        %v3234 = vpack.c.bf16 %v3208, %v3207
        %v3235 = vpack.c.bf16 %v3210, %v3209
        %v3236 = vpack.c.bf16 %v3212, %v3211
        %v3237 = vpack.c.bf16 %v3214, %v3213
        %v3238 = vpack.c.bf16 %v3216, %v3215
        %v3239 = vpack.c.bf16 %v3218, %v3217
        %v3240 = vpack.c.bf16 %v3220, %v3219
        %v3241 = vpack.c.bf16 %v3222, %v3221
        %v3242 = vpack.c.bf16 %v3224, %v3223
        %v3243 = vpack.c.bf16 %v3226, %v3225
        %v3244 = vpack.c.bf16 %v3228, %v3227
        %v3245 = vld [vmem:[%s3] sm:$0xf]
        %v3246 = vld [vmem:[%s3 + $0x4] sm:$0xf]
        %v3247 = vld [vmem:[%s3 + $0x8] sm:$0xf]
        %v3248 = vld [vmem:[%s3 + $0xc] sm:$0xf]
        %v3249 = vld [vmem:[%s6] sm:$0x1]
        %v3251 = vlaneseq
        %v3252 = vshrl.u32 %v3251, 7
        %v3253 = vsub.s32 0, %v3252
        %v3254 = vrot.slane %v3249, %v3253
        %3272 = vrot.lane.b32.xlu0 %v3229, 96
        %v3273 = vpop.permute.xlu0 %3272
        %3274 = vrot.lane.b32.xlu0 %v3230, 96
        %v3275 = vpop.permute.xlu0 %3274
        %3276 = vrot.lane.b32.xlu0 %v3231, 96
        %v3277 = vpop.permute.xlu0 %3276
        %3278 = vrot.lane.b32.xlu0 %v3232, 96
        %v3279 = vpop.permute.xlu0 %3278
        %3280 = vrot.lane.b32.xlu0 %v3233, 96
        %v3281 = vpop.permute.xlu0 %3280
        %3282 = vrot.lane.b32.xlu0 %v3234, 96
        %v3283 = vpop.permute.xlu0 %3282
        %3284 = vrot.lane.b32.xlu0 %v3235, 96
        %v3285 = vpop.permute.xlu0 %3284
        %3286 = vrot.lane.b32.xlu0 %v3236, 96
        %v3287 = vpop.permute.xlu0 %3286
        %3288 = vrot.lane.b32.xlu0 %v3237, 96
        %v3289 = vpop.permute.xlu0 %3288
        %3290 = vrot.lane.b32.xlu0 %v3238, 96
        %v3291 = vpop.permute.xlu0 %3290
        %3292 = vrot.lane.b32.xlu0 %v3239, 96
        %v3293 = vpop.permute.xlu0 %3292
        %3294 = vrot.lane.b32.xlu0 %v3240, 96
        %v3295 = vpop.permute.xlu0 %3294
        %3296 = vrot.lane.b32.xlu0 %v3241, 96
        %v3297 = vpop.permute.xlu0 %3296
        %3298 = vrot.lane.b32.xlu0 %v3242, 96
        %v3299 = vpop.permute.xlu0 %3298
        %3300 = vrot.lane.b32.xlu0 %v3243, 96
        %v3301 = vpop.permute.xlu0 %3300
        %3302 = vrot.lane.b32.xlu0 %v3244, 96
        %v3303 = vpop.permute.xlu0 %3302
        %v3308 = vunpack.c.l.b16 %v3245
        %v3309 = vunpack.c.l.b16 %v3246
        %v3310 = vunpack.c.l.b16 %v3247
        %v3311 = vunpack.c.l.b16 %v3248
        %v3312 = vpack.c.b16 %v3309, %v3308
        %v3313 = vpack.c.b16 %v3311, %v3310
        %v3317 = vsel %vm666, %v3273, 0
        %v3320 = vsel %vm666, %v3275, 0
        %v3323 = vsel %vm666, %v3277, 0
        %v3326 = vsel %vm666, %v3279, 0
        %v3329 = vsel %vm666, %v3281, 0
        %v3332 = vsel %vm666, %v3283, 0
        %v3335 = vsel %vm666, %v3285, 0
        %v3338 = vsel %vm666, %v3287, 0
        %v3341 = vsel %vm666, %v3289, 0
        %v3344 = vsel %vm666, %v3291, 0
        %v3347 = vsel %vm666, %v3293, 0
        %v3350 = vsel %vm666, %v3295, 0
        %v3353 = vsel %vm666, %v3297, 0
        %v3356 = vsel %vm666, %v3299, 0
        %v3359 = vsel %vm666, %v3301, 0
        %v3362 = vsel %vm666, %v3303, 0
        %3364 = vmatprep.subr.bf16.mxu0 0
        %3365 = vmatpush1.bf16.msra.mxu0 %v3312
        %3366 = vmatprep.subr.bf16.mxu0 0
        %3367 = vmatpush1.bf16.msra.mxu0 %v3313
        %3368 = vmatprep.subr.bf16.mxu0 0
        %3369 = vmatpush1.bf16.msra.mxu0 0
        %3370 = vmatprep.subr.bf16.mxu0 0
        %3371 = vmatpush1.bf16.msra.mxu0 0
        %3372 = vmatprep.subr.bf16.mxu0 0
        %3373 = vmatpush1.bf16.msra.mxu0 0
        %3374 = vmatprep.subr.bf16.mxu0 0
        %3375 = vmatpush1.bf16.msra.mxu0 0
        %3376 = vmatprep.subr.bf16.mxu0 0
        %3377 = vmatpush1.bf16.msra.mxu0 0
        %3378 = vmatprep.subr.bf16.mxu0 0
        %3379 = vmatpush1.bf16.msra.mxu0 0
        %3380 = vmatprep.subr.bf16.mxu0 0
        %3381 = vmatpush1.bf16.msra.mxu0 0
        %3382 = vmatprep.subr.bf16.mxu0 0
        %3383 = vmatpush1.bf16.msra.mxu0 0
        %3384 = vmatprep.subr.bf16.mxu0 0
        %3385 = vmatpush1.bf16.msra.mxu0 0
        %3386 = vmatprep.subr.bf16.mxu0 0
        %3387 = vmatpush1.bf16.msra.mxu0 0
        %3388 = vmatprep.subr.bf16.mxu0 0
        %3389 = vmatpush1.bf16.msra.mxu0 0
        %3390 = vmatprep.subr.bf16.mxu0 0
        %3391 = vmatpush1.bf16.msra.mxu0 0
        %3392 = vmatprep.subr.bf16.mxu0 0
        %3393 = vmatpush1.bf16.msra.mxu0 0
        %3394 = vmatprep.subr.bf16.mxu0 0
        %3395 = vmatpush1.bf16.msra.mxu0 0
        %3396 = vmatprep.mubr.bf16.mxu0 0
        %3397 = vmatmul.mubr.bf16.gmra.mrb[0].mxu0 %v3317
        %v3398 = vpop.f32.mrb[0].mxu0
        %v3399 = vadd.f32 %v3254, %v3398
        %v3400 = vpop.f32.mrb[0].mxu0
        %v3401 = vpop.f32.mrb[0].mxu0
        %v3402 = vadd.f32 %v3254, %v3401
        %v3403 = vpop.f32.mrb[0].mxu0
        %3404 = vmatprep.mubr.bf16.mxu0 0
        %3405 = vmatmul.mubr.bf16.gmra.mrb[0].mxu0 %v3320
        %v3406 = vpop.f32.mrb[0].mxu0
        %v3407 = vadd.f32 %v3254, %v3406
        %v3408 = vpop.f32.mrb[0].mxu0
        %v3409 = vpop.f32.mrb[0].mxu0
        %v3410 = vadd.f32 %v3254, %v3409
        %v3411 = vpop.f32.mrb[0].mxu0
        %3412 = vmatprep.mubr.bf16.mxu0 0
        %3413 = vmatmul.mubr.bf16.gmra.mrb[0].mxu0 %v3323
        %v3414 = vpop.f32.mrb[0].mxu0
        %v3415 = vadd.f32 %v3254, %v3414
        %v3416 = vpop.f32.mrb[0].mxu0
        %v3417 = vpop.f32.mrb[0].mxu0
        %v3418 = vadd.f32 %v3254, %v3417
        %v3419 = vpop.f32.mrb[0].mxu0
        %3420 = vmatprep.mubr.bf16.mxu0 0
        %3421 = vmatmul.mubr.bf16.gmra.mrb[0].mxu0 %v3326
        %v3422 = vpop.f32.mrb[0].mxu0
        %v3423 = vadd.f32 %v3254, %v3422
        %v3424 = vpop.f32.mrb[0].mxu0
        %v3425 = vpop.f32.mrb[0].mxu0
        %v3426 = vadd.f32 %v3254, %v3425
        %v3427 = vpop.f32.mrb[0].mxu0
        %3428 = vmatprep.mubr.bf16.mxu0 0
        %3429 = vmatmul.mubr.bf16.gmra.mrb[0].mxu0 %v3329
        %v3430 = vpop.f32.mrb[0].mxu0
        %v3431 = vadd.f32 %v3254, %v3430
        %v3432 = vpop.f32.mrb[0].mxu0
        %v3433 = vpop.f32.mrb[0].mxu0
        %v3434 = vadd.f32 %v3254, %v3433
        %v3435 = vpop.f32.mrb[0].mxu0
        %3436 = vmatprep.mubr.bf16.mxu0 0
        %3437 = vmatmul.mubr.bf16.gmra.mrb[0].mxu0 %v3332
        %v3438 = vpop.f32.mrb[0].mxu0
        %v3439 = vadd.f32 %v3254, %v3438
        %v3440 = vpop.f32.mrb[0].mxu0
        %v3441 = vpop.f32.mrb[0].mxu0
        %v3442 = vadd.f32 %v3254, %v3441
        %v3443 = vpop.f32.mrb[0].mxu0
        %3444 = vmatprep.mubr.bf16.mxu0 0
        %3445 = vmatmul.mubr.bf16.gmra.mrb[0].mxu0 %v3335
        %v3446 = vpop.f32.mrb[0].mxu0
        %v3447 = vadd.f32 %v3254, %v3446
        %v3448 = vpop.f32.mrb[0].mxu0
        %v3449 = vpop.f32.mrb[0].mxu0
        %v3450 = vadd.f32 %v3254, %v3449
        %v3451 = vpop.f32.mrb[0].mxu0
        %3452 = vmatprep.mubr.bf16.mxu0 0
        %3453 = vmatmul.mubr.bf16.gmra.mrb[0].mxu0 %v3338
        %v3454 = vpop.f32.mrb[0].mxu0
        %v3455 = vadd.f32 %v3254, %v3454
        %v3456 = vpop.f32.mrb[0].mxu0
        %v3457 = vpop.f32.mrb[0].mxu0
        %v3458 = vadd.f32 %v3254, %v3457
        %v3459 = vpop.f32.mrb[0].mxu0
        %3460 = vmatprep.mubr.bf16.mxu0 0
        %3461 = vmatmul.mubr.bf16.gmra.mrb[0].mxu0 %v3341
        %v3462 = vpop.f32.mrb[0].mxu0
        %v3463 = vadd.f32 %v3254, %v3462
        %v3464 = vpop.f32.mrb[0].mxu0
        %v3465 = vpop.f32.mrb[0].mxu0
        %v3466 = vadd.f32 %v3254, %v3465
        %v3467 = vpop.f32.mrb[0].mxu0
        %3468 = vmatprep.mubr.bf16.mxu0 0
        %3469 = vmatmul.mubr.bf16.gmra.mrb[0].mxu0 %v3344
        %v3470 = vpop.f32.mrb[0].mxu0
        %v3471 = vadd.f32 %v3254, %v3470
        %v3472 = vpop.f32.mrb[0].mxu0
        %v3473 = vpop.f32.mrb[0].mxu0
        %v3474 = vadd.f32 %v3254, %v3473
        %v3475 = vpop.f32.mrb[0].mxu0
        %3476 = vmatprep.mubr.bf16.mxu0 0
        %3477 = vmatmul.mubr.bf16.gmra.mrb[0].mxu0 %v3347
        %v3478 = vpop.f32.mrb[0].mxu0
        %v3479 = vadd.f32 %v3254, %v3478
        %v3480 = vpop.f32.mrb[0].mxu0
        %v3481 = vpop.f32.mrb[0].mxu0
        %v3482 = vadd.f32 %v3254, %v3481
        %v3483 = vpop.f32.mrb[0].mxu0
        %3484 = vmatprep.mubr.bf16.mxu0 0
        %3485 = vmatmul.mubr.bf16.gmra.mrb[0].mxu0 %v3350
        %v3486 = vpop.f32.mrb[0].mxu0
        %v3487 = vadd.f32 %v3254, %v3486
        %v3488 = vpop.f32.mrb[0].mxu0
        %v3489 = vpop.f32.mrb[0].mxu0
        %v3490 = vadd.f32 %v3254, %v3489
        %v3491 = vpop.f32.mrb[0].mxu0
        %3492 = vmatprep.mubr.bf16.mxu0 0
        %3493 = vmatmul.mubr.bf16.gmra.mrb[0].mxu0 %v3353
        %v3494 = vpop.f32.mrb[0].mxu0
        %v3495 = vadd.f32 %v3254, %v3494
        %v3496 = vpop.f32.mrb[0].mxu0
        %v3497 = vpop.f32.mrb[0].mxu0
        %v3498 = vadd.f32 %v3254, %v3497
        %v3499 = vpop.f32.mrb[0].mxu0
        %3500 = vmatprep.mubr.bf16.mxu0 0
        %3501 = vmatmul.mubr.bf16.gmra.mrb[0].mxu0 %v3356
        %v3502 = vpop.f32.mrb[0].mxu0
        %v3503 = vadd.f32 %v3254, %v3502
        %v3504 = vpop.f32.mrb[0].mxu0
        %v3505 = vpop.f32.mrb[0].mxu0
        %v3506 = vadd.f32 %v3254, %v3505
        %v3507 = vpop.f32.mrb[0].mxu0
        %3508 = vmatprep.mubr.bf16.mxu0 0
        %3509 = vmatmul.mubr.bf16.gmra.mrb[0].mxu0 %v3359
        %v3510 = vpop.f32.mrb[0].mxu0
        %v3511 = vadd.f32 %v3254, %v3510
        %v3512 = vpop.f32.mrb[0].mxu0
        %v3513 = vpop.f32.mrb[0].mxu0
        %v3514 = vadd.f32 %v3254, %v3513
        %v3515 = vpop.f32.mrb[0].mxu0
        %3516 = vmatprep.mubr.bf16.mxu0 0
        %3517 = vmatmul.mubr.bf16.gmra.mrb[0].mxu0 %v3362
        %v3518 = vpop.f32.mrb[0].mxu0
        %v3519 = vadd.f32 %v3254, %v3518
        %v3520 = vpop.f32.mrb[0].mxu0
        %v3521 = vpop.f32.mrb[0].mxu0
        %v3522 = vadd.f32 %v3254, %v3521
        %v3523 = vpop.f32.mrb[0].mxu0
        %3524 = vdwg.mxu0
        %v3525 = vadd.f32 %v3399, %v298
        %v3526 = vadd.f32 %v3402, %v299
        %v3527 = vadd.f32 %v3407, %v300
        %v3528 = vadd.f32 %v3410, %v301
        %v3529 = vadd.f32 %v3415, %v302
        %v3530 = vadd.f32 %v3418, %v303
        %v3531 = vadd.f32 %v3423, %v304
        %v3532 = vadd.f32 %v3426, %v305
        %v3533 = vadd.f32 %v3431, %v306
        %v3534 = vadd.f32 %v3434, %v307
        %v3535 = vadd.f32 %v3439, %v308
        %v3536 = vadd.f32 %v3442, %v309
        %v3537 = vadd.f32 %v3447, %v310
        %v3538 = vadd.f32 %v3450, %v311
        %v3539 = vadd.f32 %v3455, %v312
        %v3540 = vadd.f32 %v3458, %v313
        %v3541 = vadd.f32 %v3463, %v314
        %v3542 = vadd.f32 %v3466, %v315
        %v3543 = vadd.f32 %v3471, %v316
        %v3544 = vadd.f32 %v3474, %v317
        %v3545 = vadd.f32 %v3479, %v318
        %v3546 = vadd.f32 %v3482, %v319
        %v3547 = vadd.f32 %v3487, %v320
        %v3548 = vadd.f32 %v3490, %v321
        %v3549 = vadd.f32 %v3495, %v322
        %v3550 = vadd.f32 %v3498, %v323
        %v3551 = vadd.f32 %v3503, %v324
        %v3552 = vadd.f32 %v3506, %v325
        %v3553 = vadd.f32 %v3511, %v326
        %v3554 = vadd.f32 %v3514, %v327
        %v3555 = vadd.f32 %v3519, %v328
        %v3556 = vadd.f32 %v3522, %v329
        %v3557 = vmax.f32 %v3525, 0.0
        %v3558 = vmax.f32 %v3526, 0.0
        %v3559 = vmax.f32 %v3527, 0.0
        %v3560 = vmax.f32 %v3528, 0.0
        %v3561 = vmax.f32 %v3529, 0.0
        %v3562 = vmax.f32 %v3530, 0.0
        %v3563 = vmax.f32 %v3531, 0.0
        %v3564 = vmax.f32 %v3532, 0.0
        %v3565 = vmax.f32 %v3533, 0.0
        %v3566 = vmax.f32 %v3534, 0.0
        %v3567 = vmax.f32 %v3535, 0.0
        %v3568 = vmax.f32 %v3536, 0.0
        %v3569 = vmax.f32 %v3537, 0.0
        %v3570 = vmax.f32 %v3538, 0.0
        %v3571 = vmax.f32 %v3539, 0.0
        %v3572 = vmax.f32 %v3540, 0.0
        %v3573 = vmax.f32 %v3541, 0.0
        %v3574 = vmax.f32 %v3542, 0.0
        %v3575 = vmax.f32 %v3543, 0.0
        %v3576 = vmax.f32 %v3544, 0.0
        %v3577 = vmax.f32 %v3545, 0.0
        %v3578 = vmax.f32 %v3546, 0.0
        %v3579 = vmax.f32 %v3547, 0.0
        %v3580 = vmax.f32 %v3548, 0.0
        %v3581 = vmax.f32 %v3549, 0.0
        %v3582 = vmax.f32 %v3550, 0.0
        %v3583 = vmax.f32 %v3551, 0.0
        %v3584 = vmax.f32 %v3552, 0.0
        %v3585 = vmax.f32 %v3553, 0.0
        %v3586 = vmax.f32 %v3554, 0.0
        %v3587 = vmax.f32 %v3555, 0.0
        %v3588 = vmax.f32 %v3556, 0.0
        %3589 = vst [vmem:[%s296] sm:$0xff] %v3557
        %3590 = vst [vmem:[%s296 + $0x8] sm:$0xff] %v3558
        %3591 = vst [vmem:[%s296 + $0x10] sm:$0xff] %v3559
        %3592 = vst [vmem:[%s296 + $0x18] sm:$0xff] %v3560
        %3593 = vst [vmem:[%s296 + $0x20] sm:$0xff] %v3561
        %3594 = vst [vmem:[%s296 + $0x28] sm:$0xff] %v3562
        %3595 = vst [vmem:[%s296 + $0x30] sm:$0xff] %v3563
        %3596 = vst [vmem:[%s296 + $0x38] sm:$0xff] %v3564
        %3597 = vst [vmem:[%s296 + $0x40] sm:$0xff] %v3565
        %3598 = vst [vmem:[%s296 + $0x48] sm:$0xff] %v3566
        %3599 = vst [vmem:[%s296 + $0x50] sm:$0xff] %v3567
        %3600 = vst [vmem:[%s296 + $0x58] sm:$0xff] %v3568
        %3601 = vst [vmem:[%s296 + $0x60] sm:$0xff] %v3569
        %3602 = vst [vmem:[%s296 + $0x68] sm:$0xff] %v3570
        %3603 = vst [vmem:[%s296 + $0x70] sm:$0xff] %v3571
        %3604 = vst [vmem:[%s296 + $0x78] sm:$0xff] %v3572
        %3605 = vst [vmem:[%s296 + $0x80] sm:$0xff] %v3573
        %3606 = vst [vmem:[%s296 + $0x88] sm:$0xff] %v3574
        %3607 = vst [vmem:[%s296 + $0x90] sm:$0xff] %v3575
        %3608 = vst [vmem:[%s296 + $0x98] sm:$0xff] %v3576
        %3609 = vst [vmem:[%s296 + $0xa0] sm:$0xff] %v3577
        %3610 = vst [vmem:[%s296 + $0xa8] sm:$0xff] %v3578
        %3611 = vst [vmem:[%s296 + $0xb0] sm:$0xff] %v3579
        %3612 = vst [vmem:[%s296 + $0xb8] sm:$0xff] %v3580
        %3613 = vst [vmem:[%s296 + $0xc0] sm:$0xff] %v3581
        %3614 = vst [vmem:[%s296 + $0xc8] sm:$0xff] %v3582
        %3615 = vst [vmem:[%s296 + $0xd0] sm:$0xff] %v3583
        %3616 = vst [vmem:[%s296 + $0xd8] sm:$0xff] %v3584
        %3617 = vst [vmem:[%s296 + $0xe0] sm:$0xff] %v3585
        %3618 = vst [vmem:[%s296 + $0xe8] sm:$0xff] %v3586
        %3619 = vst [vmem:[%s296 + $0xf0] sm:$0xff] %v3587
        %3620 = vst [vmem:[%s296 + $0xf8] sm:$0xff] %v3588
        %s3621 = sand.u32 %s184, 1
        %s3622 = scalar_lea.sflag [#allocation5], %s3621
        %s3623 = sand.u32 %s184, 1
        %s3624 = smul.addr %s3623, 256
        %s3625 = scalar_lea.vmem [#allocation6], %s3624
        // Predicated region
        $region53: #{tpu_custom_call.1} parent=47 // pred_check
          %p3626 = pneg %p194
        $region54: #{tpu_custom_call.1} parent=47 // pred_check_branch
          %3628 = sbr.rel (%p3626) target = $region56
        $region55: #{tpu_custom_call.1} parent=47 // pred_region
          %s3630 = ssub.s32 4096, 4096
          %3631 = vsyncadd %s3622, %s3630
          %s3632 = smul.addr %s24, 32
          %s3633 = smul.addr %s3632, 128
          %s3634 = scalar_lea.hbm %s7, %s3633
          %s3635 = sshll.u32 %s3625, 4
          %s3636 = int_to_ptr.vmem [resolvable:$true] %s3635
          %3641 = dma.vmem_to_hbm [thread:$0]  %s3636, 4096, %s3634, %s3622, 128, 128, 8
        $region56: #{tpu_custom_call.1} parent=47 // pred_fallthru
          _
      $region48: #{tpu_custom_call.1} parent=5 // pred_fallthru
        _
      %p3642 = scmp.le.s32.totalorder 2, %s19
      // Predicated region
      $region57: #{tpu_custom_call.1} parent=5 // pred_check
        %p3643 = pneg %p3642
      $region58: #{tpu_custom_call.1} parent=5 // pred_check_branch
        %3645 = sbr.rel (%p3643) target = $region60
      $region59: #{tpu_custom_call.1} parent=5 // pred_region
        %s3646 = ssub.s32 %s19, 2
        // Predicated region
        $region61: #{tpu_custom_call.1} parent=59 // pred_check
          %p3647 = pneg %p200
        $region62: #{tpu_custom_call.1} parent=59 // pred_check_branch
          %3649 = sbr.rel (%p3647) target = $region64
        $region63: #{tpu_custom_call.1} parent=59 // pred_region
          %s3650 = sand.u32 %s185, 1
          %s3651 = scalar_lea.sflag [#allocation5], %s3650
          %s3652 = sand.u32 %s185, 1
          %s3653 = smul.addr %s3652, 256
          %s3654 = scalar_lea.vmem [#allocation6], %s3653
          %3655 = dma.done %s3651, 4096
        $region64: #{tpu_custom_call.1} parent=59 // pred_fallthru
          _
      $region60: #{tpu_custom_call.1} parent=5 // pred_fallthru
        _
    $region6: #{tpu_custom_call.1} parent=1 // loop_footer
      %s23 = sadd.s32 1, %s19
    $region7: #{tpu_custom_call.1} parent=1 // loop_footer_branch
      %18 = sbr.rel target = $region3
    $region8: #{tpu_custom_call.1} parent=1 // loop_exit
      _
    %3656 = vsyncpa [#allocation4], 1
    %s3657 = scalar_lea.sflag [#allocation4], 1
    %3658 = vsyncpa %s3657, 1
    %3659 = vsyncpa [#allocation5], 1
    %s3660 = scalar_lea.sflag [#allocation5], 1
    %3661 = vsyncpa %s3660, 1

</llo_original>
